<compile_context>
chip_gen: v6e
topology: v6e:2x2x1
jax: 0.10.0
libtpu: 0.0.40
codegen_flags: <defaults>
</compile_context>

<pallas_src>
import jax
import jax.numpy as jnp
from jax import lax
from jax.experimental import pallas as pl
from jax.experimental.pallas import tpu as pltpu

LEAKY_SLOPE = 0.01
BN_EPS = 1e-5


def _leaky(x, slope):
    return jnp.where(x >= 0, x, slope * x)


def make_resblock_kernel(Nb, H, W, Cin, Cout, slope, downsample):
    Wp = W // 4          # MaxPool2d((1,4)) output width (floor, as in PyTorch)
    M = Nb * H * Wp      # rows of the im2col matmuls

    def kernel(x_ref, s1_ref, b1_ref, w1_ref, s2_ref, b2_ref, w2_ref,
               w1x1_ref, out_ref, patch1_ref, patch2_ref):
        # ---- BatchNorm2d(Cin) (folded scale/shift) + LeakyReLU (f32 math) ----
        x = x_ref[...].astype(jnp.float32).reshape(Nb * H, W, Cin)
        y = _leaky(x * s1_ref[...] + b1_ref[...], slope)

        # ---- MaxPool2d(kernel=(1,4)) along width ----
        yr = y[:, : Wp * 4, :].reshape(Nb * H, Wp, 4, Cin)
        p3 = jnp.maximum(jnp.maximum(yr[:, :, 0, :], yr[:, :, 1, :]),
                         jnp.maximum(yr[:, :, 2, :], yr[:, :, 3, :]))
        p4 = p3.reshape(Nb, H, Wp, Cin)       # (Nb, H, Wp, Cin), f32
        p_flat = p3.reshape(M, Cin)           # (M, Cin), f32

        # ---- im2col patch builder: scatter 9 shifted taps into a scratch ----
        # Only the 1-pixel border strips are zeroed (they are exactly the
        # positions the interior tap writes never cover); everything else is
        # overwritten every step, so no cross-step state is needed.
        def build_patch(patch_ref, val4, C):
            zr = jnp.zeros((Nb, 1, Wp, 9 * C), jnp.float32)
            zc = jnp.zeros((Nb, H, 1, 9 * C), jnp.float32)
            patch_ref[:, 0:1, :, :] = zr
            patch_ref[:, H - 1:H, :, :] = zr
            patch_ref[:, :, 0:1, :] = zc
            patch_ref[:, :, Wp - 1:Wp, :] = zc
            for dh in (-1, 0, 1):
                for dw in (-1, 0, 1):
                    tap = (dh + 1) * 3 + (dw + 1)
                    dst_h = slice(max(0, -dh), H - max(0, dh))
                    dst_w = slice(max(0, -dw), Wp - max(0, dw))
                    src_h = slice(max(0, dh), H - max(0, -dh))
                    src_w = slice(max(0, dw), Wp - max(0, -dw))
                    if dst_h.start >= dst_h.stop or dst_w.start >= dst_w.stop:
                        continue
                    patch_ref[:, dst_h, dst_w, tap * C:(tap + 1) * C] = (
                        val4[:, src_h, src_w, :])

        # ---- Conv2d(Cin->Cout, 3x3, pad=1): single matmul, K = 9*Cin ----
        build_patch(patch1_ref, p4, Cin)
        pat1 = patch1_ref[...].reshape(M, 9 * Cin).astype(jnp.bfloat16)
        acc = jnp.dot(pat1, w1_ref[...], preferred_element_type=jnp.float32)

        # ---- BatchNorm2d(Cout) + LeakyReLU ----
        z = _leaky(acc * s2_ref[...] + b2_ref[...], slope)   # (M, Cout), f32

        # ---- Conv2d(Cout->Cout, 3x3, pad=1): single matmul, K = 9*Cout ----
        build_patch(patch2_ref, z.reshape(Nb, H, Wp, Cout), Cout)
        pat2 = patch2_ref[...].reshape(M, 9 * Cout).astype(jnp.bfloat16)
        acc2 = jnp.dot(pat2, w2_ref[...], preferred_element_type=jnp.float32)

        # ---- residual branch ----
        if downsample:
            skip = jnp.dot(p_flat.astype(jnp.bfloat16), w1x1_ref[...],
                           preferred_element_type=jnp.float32)
        else:
            skip = p_flat                                     # Cin == Cout

        out_ref[...] = (acc2 + skip).reshape(Nb, H * Wp, Cout).astype(out_ref.dtype)

    return kernel


def _pick_nb(N, H, Wp, Cin, Cout):
    """Largest divisor of N whose largest im2col patch scratch stays small."""
    budget = 8 * 1024 * 1024                      # bytes (safe on v7x's 64 MiB VMEM)
    row_bytes = 9 * max(Cin, Cout) * 4            # f32 patch rows
    best = 1
    for nb in range(1, N + 1):
        if N % nb == 0 and nb * H * Wp * row_bytes <= budget:
            best = nb
    return best


def resblock_pallas(x_nchw, params, *, slope=LEAKY_SLOPE):
    (g1, be1, m1, v1, w1, g2, be2, m2, v2, w2, w1x1) = params
    N, Cin, H, W = x_nchw.shape
    Cout = w1.shape[0]
    downsample = Cin != Cout
    Wp = W // 4
    assert Wp >= 1, "width must be >= 4 for MaxPool2d((1,4))"

    # Fold BatchNorm (inference running stats) into per-channel scale/shift (f32).
    inv1 = g1 / jnp.sqrt(v1 + BN_EPS)
    s1 = inv1.reshape(1, Cin).astype(jnp.float32)
    b1 = (be1 - m1 * inv1).reshape(1, Cin).astype(jnp.float32)
    inv2 = g2 / jnp.sqrt(v2 + BN_EPS)
    s2 = inv2.reshape(1, Cout).astype(jnp.float32)
    b2 = (be2 - m2 * inv2).reshape(1, Cout).astype(jnp.float32)

    # Conv weights (Cout, Cin, kh, kw) -> im2col layout (9*Cin, Cout), bf16.
    # Row index = (kh*3 + kw)*Cin + ci, matching the patch channel ordering.
    w1_k = jnp.transpose(w1, (2, 3, 1, 0)).reshape(9 * Cin, Cout).astype(jnp.bfloat16)
    w2_k = jnp.transpose(w2, (2, 3, 1, 0)).reshape(9 * Cout, Cout).astype(jnp.bfloat16)
    if downsample:
        w1x1_k = w1x1[:, :, 0, 0].T.astype(jnp.bfloat16)       # (Cin, Cout)
    else:
        w1x1_k = jnp.eye(Cin, dtype=jnp.bfloat16)               # unused placeholder

    # bf16 input halves HBM DMA + VMEM; kernel upcasts to f32 for BN/pool math.
    x_nhwc = jnp.transpose(x_nchw, (0, 2, 3, 1)).astype(jnp.bfloat16)

    Nb = _pick_nb(N, H, Wp, Cin, Cout)
    M = Nb * H * Wp
    grid = (N // Nb,)

    kernel = make_resblock_kernel(Nb, H, W, Cin, Cout, slope, downsample)

    out3 = pl.pallas_call(
        kernel,
        out_shape=jax.ShapeDtypeStruct((N, H * Wp, Cout), x_nchw.dtype),
        grid=grid,
        in_specs=[
            pl.BlockSpec((Nb, H, W, Cin), lambda n: (n, 0, 0, 0)),
            pl.BlockSpec((1, Cin), lambda n: (0, 0)),
            pl.BlockSpec((1, Cin), lambda n: (0, 0)),
            pl.BlockSpec((9 * Cin, Cout), lambda n: (0, 0)),
            pl.BlockSpec((1, Cout), lambda n: (0, 0)),
            pl.BlockSpec((1, Cout), lambda n: (0, 0)),
            pl.BlockSpec((9 * Cout, Cout), lambda n: (0, 0)),
            pl.BlockSpec(w1x1_k.shape, lambda n: (0, 0)),
        ],
        out_specs=pl.BlockSpec((Nb, H * Wp, Cout), lambda n: (n, 0, 0)),
        scratch_shapes=[
            pltpu.VMEM((Nb, H, Wp, 9 * Cin), jnp.float32),   # im2col patch, conv1
            pltpu.VMEM((Nb, H, Wp, 9 * Cout), jnp.float32),  # im2col patch, conv2
        ],
        compiler_params=pltpu.CompilerParams(
            dimension_semantics=("parallel",)),
    )(x_nhwc, s1, b1, w1_k, s2, b2, w2_k, w1x1_k)

    out = out3.reshape(N, H, Wp, Cout)
    return jnp.transpose(out, (0, 3, 1, 2))                  # back to NCHW


def resblock_ref(x, params, *, slope=LEAKY_SLOPE):
    """Pure-JAX f32 reference (NCHW, same semantics as the PyTorch module)."""
    g1, be1, m1, v1, w1, g2, be2, m2, v2, w2, w1x1 = params
    Cin, Cout = x.shape[1], w1.shape[0]
    downsample = Cin != Cout

    def bn(t, g, b, m, v):
        inv = g / jnp.sqrt(v + BN_EPS)
        return t * inv[None, :, None, None] + (b - m * inv)[None, :, None, None]

    y = bn(x, g1, be1, m1, v1)
    y = jnp.where(y >= 0, y, slope * y)
    N, C, H, W = y.shape
    Wp = W // 4
    y = y[:, :, :, : Wp * 4].reshape(N, C, H, Wp, 4).max(axis=-1)

    dn = ("NCHW", "OIHW", "NCHW")
    z = lax.conv_general_dilated(y, w1, (1, 1), "SAME", dimension_numbers=dn)
    z = bn(z, g2, be2, m2, v2)
    z = jnp.where(z >= 0, z, slope * z)
    z = lax.conv_general_dilated(z, w2, (1, 1), "SAME", dimension_numbers=dn)
    if downsample:
        skip = lax.conv_general_dilated(y, w1x1, (1, 1), "SAME",
                                        dimension_numbers=dn)
    else:
        skip = y
    return z + skip


if __name__ == "__main__":
    key = jax.random.PRNGKey(0)
    N, Cin, Cout, H, W = 2, 4, 8, 16, 16   # Cin != Cout -> downsample (1x1 skip) path
    ks = jax.random.split(key, 12)

    x = jax.random.normal(ks[0], (N, Cin, H, W), jnp.float32)
    g1 = 1.0 + 0.1 * jax.random.normal(ks[1], (Cin,), jnp.float32)
    be1 = 0.1 * jax.random.normal(ks[2], (Cin,), jnp.float32)
    m1 = 0.1 * jax.random.normal(ks[3], (Cin,), jnp.float32)
    v1 = 0.5 + jax.random.uniform(ks[4], (Cin,), jnp.float32)
    w1 = 0.1 * jax.random.normal(ks[5], (Cout, Cin, 3, 3), jnp.float32)
    g2 = 1.0 + 0.1 * jax.random.normal(ks[6], (Cout,), jnp.float32)
    be2 = 0.1 * jax.random.normal(ks[7], (Cout,), jnp.float32)
    m2 = 0.1 * jax.random.normal(ks[8], (Cout,), jnp.float32)
    v2 = 0.5 + jax.random.uniform(ks[9], (Cout,), jnp.float32)
    w2 = 0.1 * jax.random.normal(ks[10], (Cout, Cout, 3, 3), jnp.float32)
    w1x1 = 0.1 * jax.random.normal(ks[11], (Cout, Cin, 1, 1), jnp.float32)
    params = (g1, be1, m1, v1, w1, g2, be2, m2, v2, w2, w1x1)

    out = jax.block_until_ready(resblock_pallas(x, params))
    ref = resblock_ref(x, params)

    assert out.shape == (N, Cout, H, W // 4), out.shape
    # Tolerance loosened vs. the pure-f32 version because conv inputs/weights
    # are fed to the MXU in bf16 (accumulation stays f32).
    err = float(jnp.max(jnp.abs(out - ref)))
    assert jnp.allclose(out, ref, atol=5e-2, rtol=5e-2), f"max abs err {err}"
    print("KERNEL_OK")
</pallas_src>

<mosaic_0001>
module attributes {stable_mosaic.version = 11 : i64} {
  func.func @kernel(%arg0: i32, %arg1: memref<2x16x16x4xbf16, #tpu.memory_space<vmem>>, %arg2: memref<1x4xf32, #tpu.memory_space<vmem>>, %arg3: memref<1x4xf32, #tpu.memory_space<vmem>>, %arg4: memref<36x8xbf16, #tpu.memory_space<vmem>>, %arg5: memref<1x8xf32, #tpu.memory_space<vmem>>, %arg6: memref<1x8xf32, #tpu.memory_space<vmem>>, %arg7: memref<72x8xbf16, #tpu.memory_space<vmem>>, %arg8: memref<4x8xbf16, #tpu.memory_space<vmem>>, %arg9: memref<2x64x8xf32, #tpu.memory_space<vmem>>, %arg10: memref<2x16x4x36xf32, #tpu.memory_space<vmem>>, %arg11: memref<2x16x4x72xf32, #tpu.memory_space<vmem>>) attributes {dimension_semantics = [#tpu.dimension_semantics<parallel>], iteration_bounds = array<i64: 1>, scalar_prefetch = 0 : i64, scratch_operands = 2 : i64, tpu.core_type = #tpu.core_type<tc>, window_params = [{transform_indices = @transform_0, window_bounds = array<i64: 2, 16, 16, 4>}, {pipeline_mode = #tpu.pipeline_mode<synchronous>, transform_indices = @transform_1, window_bounds = array<i64: 1, 4>}, {pipeline_mode = #tpu.pipeline_mode<synchronous>, transform_indices = @transform_2, window_bounds = array<i64: 1, 4>}, {pipeline_mode = #tpu.pipeline_mode<synchronous>, transform_indices = @transform_3, window_bounds = array<i64: 36, 8>}, {pipeline_mode = #tpu.pipeline_mode<synchronous>, transform_indices = @transform_4, window_bounds = array<i64: 1, 8>}, {pipeline_mode = #tpu.pipeline_mode<synchronous>, transform_indices = @transform_5, window_bounds = array<i64: 1, 8>}, {pipeline_mode = #tpu.pipeline_mode<synchronous>, transform_indices = @transform_6, window_bounds = array<i64: 72, 8>}, {pipeline_mode = #tpu.pipeline_mode<synchronous>, transform_indices = @transform_7, window_bounds = array<i64: 4, 8>}, {transform_indices = @transform_8, window_bounds = array<i64: 2, 64, 8>}]} {
    %c0 = arith.constant 0 : index
    %c0_0 = arith.constant 0 : index
    %c0_1 = arith.constant 0 : index
    %c0_2 = arith.constant 0 : index
    %0 = vector.load %arg1[%c0, %c0_0, %c0_1, %c0_2] : memref<2x16x16x4xbf16, #tpu.memory_space<vmem>>, vector<2x16x16x4xbf16>
    %1 = arith.extf %0 : vector<2x16x16x4xbf16> to vector<2x16x16x4xf32>
    %2 = vector.shape_cast %1 : vector<2x16x16x4xf32> to vector<32x16x4xf32>
    %c0_3 = arith.constant 0 : index
    %c0_4 = arith.constant 0 : index
    %3 = vector.load %arg2[%c0_3, %c0_4] : memref<1x4xf32, #tpu.memory_space<vmem>>, vector<1x4xf32>
    %4 = vector.shape_cast %3 : vector<1x4xf32> to vector<1x1x4xf32>
    %5 = vector.broadcast %4 : vector<1x1x4xf32> to vector<32x16x4xf32>
    %6 = arith.mulf %2, %5 : vector<32x16x4xf32>
    %c0_5 = arith.constant 0 : index
    %c0_6 = arith.constant 0 : index
    %7 = vector.load %arg3[%c0_5, %c0_6] : memref<1x4xf32, #tpu.memory_space<vmem>>, vector<1x4xf32>
    %8 = vector.shape_cast %7 : vector<1x4xf32> to vector<1x1x4xf32>
    %9 = vector.broadcast %8 : vector<1x1x4xf32> to vector<32x16x4xf32>
    %10 = arith.addf %6, %9 : vector<32x16x4xf32>
    %cst = arith.constant 0.000000e+00 : f32
    %11 = vector.broadcast %cst : f32 to vector<32x16x4xf32>
    %12 = arith.cmpf oge, %10, %11 : vector<32x16x4xf32>
    %cst_7 = arith.constant 0.00999999977 : f32
    %13 = vector.broadcast %cst_7 : f32 to vector<32x16x4xf32>
    %14 = arith.mulf %13, %10 : vector<32x16x4xf32>
    %15 = arith.select %12, %10, %14 : vector<32x16x4xi1>, vector<32x16x4xf32>
    %16 = vector.shape_cast %15 : vector<32x16x4xf32> to vector<32x4x4x4xf32>
    %17 = vector.extract_strided_slice %16 {offsets = [0, 0, 0, 0], sizes = [32, 4, 1, 4], strides = [1, 1, 1, 1]} : vector<32x4x4x4xf32> to vector<32x4x1x4xf32>
    %18 = vector.shape_cast %17 : vector<32x4x1x4xf32> to vector<32x4x4xf32>
    %19 = vector.extract_strided_slice %16 {offsets = [0, 0, 1, 0], sizes = [32, 4, 1, 4], strides = [1, 1, 1, 1]} : vector<32x4x4x4xf32> to vector<32x4x1x4xf32>
    %20 = vector.shape_cast %19 : vector<32x4x1x4xf32> to vector<32x4x4xf32>
    %21 = arith.maximumf %18, %20 : vector<32x4x4xf32>
    %22 = vector.extract_strided_slice %16 {offsets = [0, 0, 2, 0], sizes = [32, 4, 1, 4], strides = [1, 1, 1, 1]} : vector<32x4x4x4xf32> to vector<32x4x1x4xf32>
    %23 = vector.shape_cast %22 : vector<32x4x1x4xf32> to vector<32x4x4xf32>
    %24 = vector.extract_strided_slice %16 {offsets = [0, 0, 3, 0], sizes = [32, 4, 1, 4], strides = [1, 1, 1, 1]} : vector<32x4x4x4xf32> to vector<32x4x1x4xf32>
    %25 = vector.shape_cast %24 : vector<32x4x1x4xf32> to vector<32x4x4xf32>
    %26 = arith.maximumf %23, %25 : vector<32x4x4xf32>
    %27 = arith.maximumf %21, %26 : vector<32x4x4xf32>
    %28 = vector.shape_cast %27 : vector<32x4x4xf32> to vector<2x16x4x4xf32>
    %29 = vector.shape_cast %27 : vector<32x4x4xf32> to vector<128x4xf32>
    %cst_8 = arith.constant 0.000000e+00 : f32
    %30 = vector.broadcast %cst_8 : f32 to vector<2x1x4x36xf32>
    %cst_9 = arith.constant 0.000000e+00 : f32
    %31 = vector.broadcast %cst_9 : f32 to vector<2x16x1x36xf32>
    %c0_10 = arith.constant 0 : index
    %c0_11 = arith.constant 0 : index
    %c0_12 = arith.constant 0 : index
    %c0_13 = arith.constant 0 : index
    %32 = vector.load %arg10[%c0_10, %c0_11, %c0_12, %c0_13] : memref<2x16x4x36xf32, #tpu.memory_space<vmem>>, vector<2x1x4x36xf32>
    tpu.vector_store %arg10[%c0_10, %c0_11, %c0_12, %c0_13], %30 {strides = array<i32>} : memref<2x16x4x36xf32, #tpu.memory_space<vmem>>, vector<2x1x4x36xf32>,
    %c0_14 = arith.constant 0 : index
    %c15 = arith.constant 15 : index
    %c0_15 = arith.constant 0 : index
    %c0_16 = arith.constant 0 : index
    %33 = vector.load %arg10[%c0_14, %c15, %c0_15, %c0_16] : memref<2x16x4x36xf32, #tpu.memory_space<vmem>>, vector<2x1x4x36xf32>
    tpu.vector_store %arg10[%c0_14, %c15, %c0_15, %c0_16], %30 {strides = array<i32>} : memref<2x16x4x36xf32, #tpu.memory_space<vmem>>, vector<2x1x4x36xf32>,
    %c0_17 = arith.constant 0 : index
    %c0_18 = arith.constant 0 : index
    %c0_19 = arith.constant 0 : index
    %c0_20 = arith.constant 0 : index
    %34 = vector.load %arg10[%c0_17, %c0_18, %c0_19, %c0_20] : memref<2x16x4x36xf32, #tpu.memory_space<vmem>>, vector<2x16x1x36xf32>
    tpu.vector_store %arg10[%c0_17, %c0_18, %c0_19, %c0_20], %31 {strides = array<i32>} : memref<2x16x4x36xf32, #tpu.memory_space<vmem>>, vector<2x16x1x36xf32>,
    %c0_21 = arith.constant 0 : index
    %c0_22 = arith.constant 0 : index
    %c3 = arith.constant 3 : index
    %c0_23 = arith.constant 0 : index
    %35 = vector.load %arg10[%c0_21, %c0_22, %c3, %c0_23] : memref<2x16x4x36xf32, #tpu.memory_space<vmem>>, vector<2x16x1x36xf32>
    tpu.vector_store %arg10[%c0_21, %c0_22, %c3, %c0_23], %31 {strides = array<i32>} : memref<2x16x4x36xf32, #tpu.memory_space<vmem>>, vector<2x16x1x36xf32>,
    %36 = vector.extract_strided_slice %28 {offsets = [0, 0, 0, 0], sizes = [2, 15, 3, 4], strides = [1, 1, 1, 1]} : vector<2x16x4x4xf32> to vector<2x15x3x4xf32>
    %c0_24 = arith.constant 0 : index
    %c1 = arith.constant 1 : index
    %c1_25 = arith.constant 1 : index
    %c0_26 = arith.constant 0 : index
    %37 = vector.load %arg10[%c0_24, %c1, %c1_25, %c0_26] : memref<2x16x4x36xf32, #tpu.memory_space<vmem>>, vector<2x15x3x4xf32>
    tpu.vector_store %arg10[%c0_24, %c1, %c1_25, %c0_26], %36 {strides = array<i32>} : memref<2x16x4x36xf32, #tpu.memory_space<vmem>>, vector<2x15x3x4xf32>,
    %38 = vector.extract_strided_slice %28 {offsets = [0, 0, 0, 0], sizes = [2, 15, 4, 4], strides = [1, 1, 1, 1]} : vector<2x16x4x4xf32> to vector<2x15x4x4xf32>
    %c0_27 = arith.constant 0 : index
    %c1_28 = arith.constant 1 : index
    %c0_29 = arith.constant 0 : index
    %c4 = arith.constant 4 : index
    %39 = vector.load %arg10[%c0_27, %c1_28, %c0_29, %c4] : memref<2x16x4x36xf32, #tpu.memory_space<vmem>>, vector<2x15x4x4xf32>
    tpu.vector_store %arg10[%c0_27, %c1_28, %c0_29, %c4], %38 {strides = array<i32>} : memref<2x16x4x36xf32, #tpu.memory_space<vmem>>, vector<2x15x4x4xf32>,
    %40 = vector.extract_strided_slice %28 {offsets = [0, 0, 1, 0], sizes = [2, 15, 3, 4], strides = [1, 1, 1, 1]} : vector<2x16x4x4xf32> to vector<2x15x3x4xf32>
    %c0_30 = arith.constant 0 : index
    %c1_31 = arith.constant 1 : index
    %c0_32 = arith.constant 0 : index
    %c8 = arith.constant 8 : index
    %41 = vector.load %arg10[%c0_30, %c1_31, %c0_32, %c8] : memref<2x16x4x36xf32, #tpu.memory_space<vmem>>, vector<2x15x3x4xf32>
    tpu.vector_store %arg10[%c0_30, %c1_31, %c0_32, %c8], %40 {strides = array<i32>} : memref<2x16x4x36xf32, #tpu.memory_space<vmem>>, vector<2x15x3x4xf32>,
    %42 = vector.extract_strided_slice %28 {offsets = [0, 0, 0, 0], sizes = [2, 16, 3, 4], strides = [1, 1, 1, 1]} : vector<2x16x4x4xf32> to vector<2x16x3x4xf32>
    %c0_33 = arith.constant 0 : index
    %c0_34 = arith.constant 0 : index
    %c1_35 = arith.constant 1 : index
    %c12 = arith.constant 12 : index
    %43 = vector.load %arg10[%c0_33, %c0_34, %c1_35, %c12] : memref<2x16x4x36xf32, #tpu.memory_space<vmem>>, vector<2x16x3x4xf32>
    tpu.vector_store %arg10[%c0_33, %c0_34, %c1_35, %c12], %42 {strides = array<i32>} : memref<2x16x4x36xf32, #tpu.memory_space<vmem>>, vector<2x16x3x4xf32>,
    %c0_36 = arith.constant 0 : index
    %c0_37 = arith.constant 0 : index
    %c0_38 = arith.constant 0 : index
    %c16 = arith.constant 16 : index
    %44 = vector.load %arg10[%c0_36, %c0_37, %c0_38, %c16] : memref<2x16x4x36xf32, #tpu.memory_space<vmem>>, vector<2x16x4x4xf32>
    tpu.vector_store %arg10[%c0_36, %c0_37, %c0_38, %c16], %28 {strides = array<i32>} : memref<2x16x4x36xf32, #tpu.memory_space<vmem>>, vector<2x16x4x4xf32>,
    %45 = vector.extract_strided_slice %28 {offsets = [0, 0, 1, 0], sizes = [2, 16, 3, 4], strides = [1, 1, 1, 1]} : vector<2x16x4x4xf32> to vector<2x16x3x4xf32>
    %c0_39 = arith.constant 0 : index
    %c0_40 = arith.constant 0 : index
    %c0_41 = arith.constant 0 : index
    %c20 = arith.constant 20 : index
    %46 = vector.load %arg10[%c0_39, %c0_40, %c0_41, %c20] : memref<2x16x4x36xf32, #tpu.memory_space<vmem>>, vector<2x16x3x4xf32>
    tpu.vector_store %arg10[%c0_39, %c0_40, %c0_41, %c20], %45 {strides = array<i32>} : memref<2x16x4x36xf32, #tpu.memory_space<vmem>>, vector<2x16x3x4xf32>,
    %47 = vector.extract_strided_slice %28 {offsets = [0, 1, 0, 0], sizes = [2, 15, 3, 4], strides = [1, 1, 1, 1]} : vector<2x16x4x4xf32> to vector<2x15x3x4xf32>
    %c0_42 = arith.constant 0 : index
    %c0_43 = arith.constant 0 : index
    %c1_44 = arith.constant 1 : index
    %c24 = arith.constant 24 : index
    %48 = vector.load %arg10[%c0_42, %c0_43, %c1_44, %c24] : memref<2x16x4x36xf32, #tpu.memory_space<vmem>>, vector<2x15x3x4xf32>
    tpu.vector_store %arg10[%c0_42, %c0_43, %c1_44, %c24], %47 {strides = array<i32>} : memref<2x16x4x36xf32, #tpu.memory_space<vmem>>, vector<2x15x3x4xf32>,
    %49 = vector.extract_strided_slice %28 {offsets = [0, 1, 0, 0], sizes = [2, 15, 4, 4], strides = [1, 1, 1, 1]} : vector<2x16x4x4xf32> to vector<2x15x4x4xf32>
    %c0_45 = arith.constant 0 : index
    %c0_46 = arith.constant 0 : index
    %c0_47 = arith.constant 0 : index
    %c28 = arith.constant 28 : index
    %50 = vector.load %arg10[%c0_45, %c0_46, %c0_47, %c28] : memref<2x16x4x36xf32, #tpu.memory_space<vmem>>, vector<2x15x4x4xf32>
    tpu.vector_store %arg10[%c0_45, %c0_46, %c0_47, %c28], %49 {strides = array<i32>} : memref<2x16x4x36xf32, #tpu.memory_space<vmem>>, vector<2x15x4x4xf32>,
    %51 = vector.extract_strided_slice %28 {offsets = [0, 1, 1, 0], sizes = [2, 15, 3, 4], strides = [1, 1, 1, 1]} : vector<2x16x4x4xf32> to vector<2x15x3x4xf32>
    %c0_48 = arith.constant 0 : index
    %c0_49 = arith.constant 0 : index
    %c0_50 = arith.constant 0 : index
    %c32 = arith.constant 32 : index
    %52 = vector.load %arg10[%c0_48, %c0_49, %c0_50, %c32] : memref<2x16x4x36xf32, #tpu.memory_space<vmem>>, vector<2x15x3x4xf32>
    tpu.vector_store %arg10[%c0_48, %c0_49, %c0_50, %c32], %51 {strides = array<i32>} : memref<2x16x4x36xf32, #tpu.memory_space<vmem>>, vector<2x15x3x4xf32>,
    %c0_51 = arith.constant 0 : index
    %c0_52 = arith.constant 0 : index
    %c0_53 = arith.constant 0 : index
    %c0_54 = arith.constant 0 : index
    %53 = vector.load %arg10[%c0_51, %c0_52, %c0_53, %c0_54] : memref<2x16x4x36xf32, #tpu.memory_space<vmem>>, vector<2x16x4x36xf32>
    %54 = vector.shape_cast %53 : vector<2x16x4x36xf32> to vector<128x36xf32>
    %55 = arith.truncf %54 : vector<128x36xf32> to vector<128x36xbf16>
    %c0_55 = arith.constant 0 : index
    %c0_56 = arith.constant 0 : index
    %56 = vector.load %arg4[%c0_55, %c0_56] : memref<36x8xbf16, #tpu.memory_space<vmem>>, vector<36x8xbf16>
    %cst_57 = arith.constant dense<0.000000e+00> : vector<128x8xf32>
    %57 = tpu.matmul %55, %56, %cst_57 {dimension_numbers = #tpu.dot_dimension_numbers<[1], [0], [0], [1], [0, 0, 1, 1], [], []>} : vector<128x36xbf16>, vector<36x8xbf16>, vector<128x8xf32> -> vector<128x8xf32>
    %c0_58 = arith.constant 0 : index
    %c0_59 = arith.constant 0 : index
    %58 = vector.load %arg5[%c0_58, %c0_59] : memref<1x8xf32, #tpu.memory_space<vmem>>, vector<1x8xf32>
    %59 = vector.broadcast %58 : vector<1x8xf32> to vector<128x8xf32>
    %60 = arith.mulf %57, %59 : vector<128x8xf32>
    %c0_60 = arith.constant 0 : index
    %c0_61 = arith.constant 0 : index
    %61 = vector.load %arg6[%c0_60, %c0_61] : memref<1x8xf32, #tpu.memory_space<vmem>>, vector<1x8xf32>
    %62 = vector.broadcast %61 : vector<1x8xf32> to vector<128x8xf32>
    %63 = arith.addf %60, %62 : vector<128x8xf32>
    %cst_62 = arith.constant 0.000000e+00 : f32
    %64 = vector.broadcast %cst_62 : f32 to vector<128x8xf32>
    %65 = arith.cmpf oge, %63, %64 : vector<128x8xf32>
    %cst_63 = arith.constant 0.00999999977 : f32
    %66 = vector.broadcast %cst_63 : f32 to vector<128x8xf32>
    %67 = arith.mulf %66, %63 : vector<128x8xf32>
    %68 = arith.select %65, %63, %67 : vector<128x8xi1>, vector<128x8xf32>
    %69 = vector.shape_cast %68 : vector<128x8xf32> to vector<2x16x4x8xf32>
    %cst_64 = arith.constant 0.000000e+00 : f32
    %70 = vector.broadcast %cst_64 : f32 to vector<2x1x4x72xf32>
    %cst_65 = arith.constant 0.000000e+00 : f32
    %71 = vector.broadcast %cst_65 : f32 to vector<2x16x1x72xf32>
    %c0_66 = arith.constant 0 : index
    %c0_67 = arith.constant 0 : index
    %c0_68 = arith.constant 0 : index
    %c0_69 = arith.constant 0 : index
    %72 = vector.load %arg11[%c0_66, %c0_67, %c0_68, %c0_69] : memref<2x16x4x72xf32, #tpu.memory_space<vmem>>, vector<2x1x4x72xf32>
    tpu.vector_store %arg11[%c0_66, %c0_67, %c0_68, %c0_69], %70 {strides = array<i32>} : memref<2x16x4x72xf32, #tpu.memory_space<vmem>>, vector<2x1x4x72xf32>,
    %c0_70 = arith.constant 0 : index
    %c15_71 = arith.constant 15 : index
    %c0_72 = arith.constant 0 : index
    %c0_73 = arith.constant 0 : index
    %73 = vector.load %arg11[%c0_70, %c15_71, %c0_72, %c0_73] : memref<2x16x4x72xf32, #tpu.memory_space<vmem>>, vector<2x1x4x72xf32>
    tpu.vector_store %arg11[%c0_70, %c15_71, %c0_72, %c0_73], %70 {strides = array<i32>} : memref<2x16x4x72xf32, #tpu.memory_space<vmem>>, vector<2x1x4x72xf32>,
    %c0_74 = arith.constant 0 : index
    %c0_75 = arith.constant 0 : index
    %c0_76 = arith.constant 0 : index
    %c0_77 = arith.constant 0 : index
    %74 = vector.load %arg11[%c0_74, %c0_75, %c0_76, %c0_77] : memref<2x16x4x72xf32, #tpu.memory_space<vmem>>, vector<2x16x1x72xf32>
    tpu.vector_store %arg11[%c0_74, %c0_75, %c0_76, %c0_77], %71 {strides = array<i32>} : memref<2x16x4x72xf32, #tpu.memory_space<vmem>>, vector<2x16x1x72xf32>,
    %c0_78 = arith.constant 0 : index
    %c0_79 = arith.constant 0 : index
    %c3_80 = arith.constant 3 : index
    %c0_81 = arith.constant 0 : index
    %75 = vector.load %arg11[%c0_78, %c0_79, %c3_80, %c0_81] : memref<2x16x4x72xf32, #tpu.memory_space<vmem>>, vector<2x16x1x72xf32>
    tpu.vector_store %arg11[%c0_78, %c0_79, %c3_80, %c0_81], %71 {strides = array<i32>} : memref<2x16x4x72xf32, #tpu.memory_space<vmem>>, vector<2x16x1x72xf32>,
    %76 = vector.extract_strided_slice %69 {offsets = [0, 0, 0, 0], sizes = [2, 15, 3, 8], strides = [1, 1, 1, 1]} : vector<2x16x4x8xf32> to vector<2x15x3x8xf32>
    %c0_82 = arith.constant 0 : index
    %c1_83 = arith.constant 1 : index
    %c1_84 = arith.constant 1 : index
    %c0_85 = arith.constant 0 : index
    %77 = vector.load %arg11[%c0_82, %c1_83, %c1_84, %c0_85] : memref<2x16x4x72xf32, #tpu.memory_space<vmem>>, vector<2x15x3x8xf32>
    tpu.vector_store %arg11[%c0_82, %c1_83, %c1_84, %c0_85], %76 {strides = array<i32>} : memref<2x16x4x72xf32, #tpu.memory_space<vmem>>, vector<2x15x3x8xf32>,
    %78 = vector.extract_strided_slice %69 {offsets = [0, 0, 0, 0], sizes = [2, 15, 4, 8], strides = [1, 1, 1, 1]} : vector<2x16x4x8xf32> to vector<2x15x4x8xf32>
    %c0_86 = arith.constant 0 : index
    %c1_87 = arith.constant 1 : index
    %c0_88 = arith.constant 0 : index
    %c8_89 = arith.constant 8 : index
    %79 = vector.load %arg11[%c0_86, %c1_87, %c0_88, %c8_89] : memref<2x16x4x72xf32, #tpu.memory_space<vmem>>, vector<2x15x4x8xf32>
    tpu.vector_store %arg11[%c0_86, %c1_87, %c0_88, %c8_89], %78 {strides = array<i32>} : memref<2x16x4x72xf32, #tpu.memory_space<vmem>>, vector<2x15x4x8xf32>,
    %80 = vector.extract_strided_slice %69 {offsets = [0, 0, 1, 0], sizes = [2, 15, 3, 8], strides = [1, 1, 1, 1]} : vector<2x16x4x8xf32> to vector<2x15x3x8xf32>
    %c0_90 = arith.constant 0 : index
    %c1_91 = arith.constant 1 : index
    %c0_92 = arith.constant 0 : index
    %c16_93 = arith.constant 16 : index
    %81 = vector.load %arg11[%c0_90, %c1_91, %c0_92, %c16_93] : memref<2x16x4x72xf32, #tpu.memory_space<vmem>>, vector<2x15x3x8xf32>
    tpu.vector_store %arg11[%c0_90, %c1_91, %c0_92, %c16_93], %80 {strides = array<i32>} : memref<2x16x4x72xf32, #tpu.memory_space<vmem>>, vector<2x15x3x8xf32>,
    %82 = vector.extract_strided_slice %69 {offsets = [0, 0, 0, 0], sizes = [2, 16, 3, 8], strides = [1, 1, 1, 1]} : vector<2x16x4x8xf32> to vector<2x16x3x8xf32>
    %c0_94 = arith.constant 0 : index
    %c0_95 = arith.constant 0 : index
    %c1_96 = arith.constant 1 : index
    %c24_97 = arith.constant 24 : index
    %83 = vector.load %arg11[%c0_94, %c0_95, %c1_96, %c24_97] : memref<2x16x4x72xf32, #tpu.memory_space<vmem>>, vector<2x16x3x8xf32>
    tpu.vector_store %arg11[%c0_94, %c0_95, %c1_96, %c24_97], %82 {strides = array<i32>} : memref<2x16x4x72xf32, #tpu.memory_space<vmem>>, vector<2x16x3x8xf32>,
    %c0_98 = arith.constant 0 : index
    %c0_99 = arith.constant 0 : index
    %c0_100 = arith.constant 0 : index
    %c32_101 = arith.constant 32 : index
    %84 = vector.load %arg11[%c0_98, %c0_99, %c0_100, %c32_101] : memref<2x16x4x72xf32, #tpu.memory_space<vmem>>, vector<2x16x4x8xf32>
    tpu.vector_store %arg11[%c0_98, %c0_99, %c0_100, %c32_101], %69 {strides = array<i32>} : memref<2x16x4x72xf32, #tpu.memory_space<vmem>>, vector<2x16x4x8xf32>,
    %85 = vector.extract_strided_slice %69 {offsets = [0, 0, 1, 0], sizes = [2, 16, 3, 8], strides = [1, 1, 1, 1]} : vector<2x16x4x8xf32> to vector<2x16x3x8xf32>
    %c0_102 = arith.constant 0 : index
    %c0_103 = arith.constant 0 : index
    %c0_104 = arith.constant 0 : index
    %c40 = arith.constant 40 : index
    %86 = vector.load %arg11[%c0_102, %c0_103, %c0_104, %c40] : memref<2x16x4x72xf32, #tpu.memory_space<vmem>>, vector<2x16x3x8xf32>
    tpu.vector_store %arg11[%c0_102, %c0_103, %c0_104, %c40], %85 {strides = array<i32>} : memref<2x16x4x72xf32, #tpu.memory_space<vmem>>, vector<2x16x3x8xf32>,
    %87 = vector.extract_strided_slice %69 {offsets = [0, 1, 0, 0], sizes = [2, 15, 3, 8], strides = [1, 1, 1, 1]} : vector<2x16x4x8xf32> to vector<2x15x3x8xf32>
    %c0_105 = arith.constant 0 : index
    %c0_106 = arith.constant 0 : index
    %c1_107 = arith.constant 1 : index
    %c48 = arith.constant 48 : index
    %88 = vector.load %arg11[%c0_105, %c0_106, %c1_107, %c48] : memref<2x16x4x72xf32, #tpu.memory_space<vmem>>, vector<2x15x3x8xf32>
    tpu.vector_store %arg11[%c0_105, %c0_106, %c1_107, %c48], %87 {strides = array<i32>} : memref<2x16x4x72xf32, #tpu.memory_space<vmem>>, vector<2x15x3x8xf32>,
    %89 = vector.extract_strided_slice %69 {offsets = [0, 1, 0, 0], sizes = [2, 15, 4, 8], strides = [1, 1, 1, 1]} : vector<2x16x4x8xf32> to vector<2x15x4x8xf32>
    %c0_108 = arith.constant 0 : index
    %c0_109 = arith.constant 0 : index
    %c0_110 = arith.constant 0 : index
    %c56 = arith.constant 56 : index
    %90 = vector.load %arg11[%c0_108, %c0_109, %c0_110, %c56] : memref<2x16x4x72xf32, #tpu.memory_space<vmem>>, vector<2x15x4x8xf32>
    tpu.vector_store %arg11[%c0_108, %c0_109, %c0_110, %c56], %89 {strides = array<i32>} : memref<2x16x4x72xf32, #tpu.memory_space<vmem>>, vector<2x15x4x8xf32>,
    %91 = vector.extract_strided_slice %69 {offsets = [0, 1, 1, 0], sizes = [2, 15, 3, 8], strides = [1, 1, 1, 1]} : vector<2x16x4x8xf32> to vector<2x15x3x8xf32>
    %c0_111 = arith.constant 0 : index
    %c0_112 = arith.constant 0 : index
    %c0_113 = arith.constant 0 : index
    %c64 = arith.constant 64 : index
    %92 = vector.load %arg11[%c0_111, %c0_112, %c0_113, %c64] : memref<2x16x4x72xf32, #tpu.memory_space<vmem>>, vector<2x15x3x8xf32>
    tpu.vector_store %arg11[%c0_111, %c0_112, %c0_113, %c64], %91 {strides = array<i32>} : memref<2x16x4x72xf32, #tpu.memory_space<vmem>>, vector<2x15x3x8xf32>,
    %c0_114 = arith.constant 0 : index
    %c0_115 = arith.constant 0 : index
    %c0_116 = arith.constant 0 : index
    %c0_117 = arith.constant 0 : index
    %93 = vector.load %arg11[%c0_114, %c0_115, %c0_116, %c0_117] : memref<2x16x4x72xf32, #tpu.memory_space<vmem>>, vector<2x16x4x72xf32>
    %94 = vector.shape_cast %93 : vector<2x16x4x72xf32> to vector<128x72xf32>
    %95 = arith.truncf %94 : vector<128x72xf32> to vector<128x72xbf16>
    %c0_118 = arith.constant 0 : index
    %c0_119 = arith.constant 0 : index
    %96 = vector.load %arg7[%c0_118, %c0_119] : memref<72x8xbf16, #tpu.memory_space<vmem>>, vector<72x8xbf16>
    %cst_120 = arith.constant dense<0.000000e+00> : vector<128x8xf32>
    %97 = tpu.matmul %95, %96, %cst_120 {dimension_numbers = #tpu.dot_dimension_numbers<[1], [0], [0], [1], [0, 0, 1, 1], [], []>} : vector<128x72xbf16>, vector<72x8xbf16>, vector<128x8xf32> -> vector<128x8xf32>
    %98 = arith.truncf %29 : vector<128x4xf32> to vector<128x4xbf16>
    %c0_121 = arith.constant 0 : index
    %c0_122 = arith.constant 0 : index
    %99 = vector.load %arg8[%c0_121, %c0_122] : memref<4x8xbf16, #tpu.memory_space<vmem>>, vector<4x8xbf16>
    %cst_123 = arith.constant dense<0.000000e+00> : vector<128x8xf32>
    %100 = tpu.matmul %98, %99, %cst_123 {dimension_numbers = #tpu.dot_dimension_numbers<[1], [0], [0], [1], [0, 0, 1, 1], [], []>} : vector<128x4xbf16>, vector<4x8xbf16>, vector<128x8xf32> -> vector<128x8xf32>
    %101 = arith.addf %97, %100 : vector<128x8xf32>
    %102 = vector.shape_cast %101 : vector<128x8xf32> to vector<2x64x8xf32>
    %c0_124 = arith.constant 0 : index
    %c0_125 = arith.constant 0 : index
    %c0_126 = arith.constant 0 : index
    %103 = vector.load %arg9[%c0_124, %c0_125, %c0_126] : memref<2x64x8xf32, #tpu.memory_space<vmem>>, vector<2x64x8xf32>
    tpu.vector_store %arg9[%c0_124, %c0_125, %c0_126], %102 {strides = array<i32>} : memref<2x64x8xf32, #tpu.memory_space<vmem>>, vector<2x64x8xf32>,
    return
  }
  func.func @transform_0(%arg0: i32) -> (i32, i32, i32, i32) {
    %c0_i32 = arith.constant 0 : i32
    %c0_i32_0 = arith.constant 0 : i32
    %c0_i32_1 = arith.constant 0 : i32
    %c0_i32_2 = arith.constant 0 : i32
    return %arg0, %c0_i32, %c0_i32_0, %c0_i32_1 : i32, i32, i32, i32
  }
  func.func @transform_1(%arg0: i32) -> (i32, i32) {
    %c0_i32 = arith.constant 0 : i32
    %c0_i32_0 = arith.constant 0 : i32
    %c0_i32_1 = arith.constant 0 : i32
    return %c0_i32, %c0_i32_0 : i32, i32
  }
  func.func @transform_2(%arg0: i32) -> (i32, i32) {
    %c0_i32 = arith.constant 0 : i32
    %c0_i32_0 = arith.constant 0 : i32
    %c0_i32_1 = arith.constant 0 : i32
    return %c0_i32, %c0_i32_0 : i32, i32
  }
  func.func @transform_3(%arg0: i32) -> (i32, i32) {
    %c0_i32 = arith.constant 0 : i32
    %c0_i32_0 = arith.constant 0 : i32
    %c0_i32_1 = arith.constant 0 : i32
    return %c0_i32, %c0_i32_0 : i32, i32
  }
  func.func @transform_4(%arg0: i32) -> (i32, i32) {
    %c0_i32 = arith.constant 0 : i32
    %c0_i32_0 = arith.constant 0 : i32
    %c0_i32_1 = arith.constant 0 : i32
    return %c0_i32, %c0_i32_0 : i32, i32
  }
  func.func @transform_5(%arg0: i32) -> (i32, i32) {
    %c0_i32 = arith.constant 0 : i32
    %c0_i32_0 = arith.constant 0 : i32
    %c0_i32_1 = arith.constant 0 : i32
    return %c0_i32, %c0_i32_0 : i32, i32
  }
  func.func @transform_6(%arg0: i32) -> (i32, i32) {
    %c0_i32 = arith.constant 0 : i32
    %c0_i32_0 = arith.constant 0 : i32
    %c0_i32_1 = arith.constant 0 : i32
    return %c0_i32, %c0_i32_0 : i32, i32
  }
  func.func @transform_7(%arg0: i32) -> (i32, i32) {
    %c0_i32 = arith.constant 0 : i32
    %c0_i32_0 = arith.constant 0 : i32
    %c0_i32_1 = arith.constant 0 : i32
    return %c0_i32, %c0_i32_0 : i32, i32
  }
  func.func @transform_8(%arg0: i32) -> (i32, i32, i32) {
    %c0_i32 = arith.constant 0 : i32
    %c0_i32_0 = arith.constant 0 : i32
    %c0_i32_1 = arith.constant 0 : i32
    return %arg0, %c0_i32, %c0_i32_0 : i32, i32, i32
  }
}

</mosaic_0001>

<llo_original>
// kernel: tpu_custom_call.1
$region0: #{tpu_custom_call.1}
  #allocation0 [shape = 'u32[]', space=smem, size = 0x4, offset = 0x4, fixed_abs, tag = 'smem constant byte address 0x4 - core index']
  #allocation1 [shape = 'u32[144,128]{1,0:T(1,128)}', space=vmem, size = 0x12000, scoped, tag = 'internal scratch']
  #allocation2 [shape = 'f32[2,16,4,36]{3,2,1,0:T(4,128)}', space=vmem, size = 0x10000, scoped, tag = 'scratch operand']
  #allocation3 [shape = 'f32[2,16,4,72]{3,2,1,0:T(4,128)}', space=vmem, size = 0x10000, scoped, tag = 'scratch operand']
  %s0 = inlined_call_operand.vmem [shape: bf16[2,16,16,4], index: 0, kind: input, shape index: {}]
  %s1 = inlined_call_operand.vmem [shape: f32[1,4], index: 1, kind: input, shape index: {}]
  %s2 = inlined_call_operand.vmem [shape: f32[1,4], index: 2, kind: input, shape index: {}]
  %s3 = inlined_call_operand.vmem [shape: bf16[36,8], index: 3, kind: input, shape index: {}]
  %s4 = inlined_call_operand.vmem [shape: f32[1,8], index: 4, kind: input, shape index: {}]
  %s5 = inlined_call_operand.vmem [shape: f32[1,8], index: 5, kind: input, shape index: {}]
  %s6 = inlined_call_operand.vmem [shape: bf16[72,8], index: 6, kind: input, shape index: {}]
  %s7 = inlined_call_operand.vmem [shape: bf16[4,8], index: 7, kind: input, shape index: {}]
  %s8 = inlined_call_operand.vmem [shape: f32[2,64,8], index: 8, kind: output, shape index: {}]
  %s9 = sld [smem:[#allocation0]]
  $region42: #{tpu_custom_call.1} parent=0
    _
  %s11 = ssub.s32 1, %s9
  %s12 = scalar_select 0, %s11, %s9
  // Predicated region
  $region2: #{tpu_custom_call.1} parent=0 // pred_check
    _
  $region3: #{tpu_custom_call.1} parent=0 // pred_check_branch
    %14 = sbr.rel (0) target = $region5
  $region4: #{tpu_custom_call.1} parent=0 // pred_region
    _
  $region5: #{tpu_custom_call.1} parent=0 // pred_fallthru
    _
  // Predicated region
  $region6: #{tpu_custom_call.1} parent=0 // pred_check
    _
  $region7: #{tpu_custom_call.1} parent=0 // pred_check_branch
    %16 = sbr.rel (0) target = $region9
  $region8: #{tpu_custom_call.1} parent=0 // pred_region
    _
  $region9: #{tpu_custom_call.1} parent=0 // pred_fallthru
    _
  // Predicated region
  $region10: #{tpu_custom_call.1} parent=0 // pred_check
    _
  $region11: #{tpu_custom_call.1} parent=0 // pred_check_branch
    %18 = sbr.rel (0) target = $region13
  $region12: #{tpu_custom_call.1} parent=0 // pred_region
    _
  $region13: #{tpu_custom_call.1} parent=0 // pred_fallthru
    _
  // Predicated region
  $region14: #{tpu_custom_call.1} parent=0 // pred_check
    _
  $region15: #{tpu_custom_call.1} parent=0 // pred_check_branch
    %20 = sbr.rel (0) target = $region17
  $region16: #{tpu_custom_call.1} parent=0 // pred_region
    _
  $region17: #{tpu_custom_call.1} parent=0 // pred_fallthru
    _
  // Predicated region
  $region18: #{tpu_custom_call.1} parent=0 // pred_check
    _
  $region19: #{tpu_custom_call.1} parent=0 // pred_check_branch
    %22 = sbr.rel (0) target = $region21
  $region20: #{tpu_custom_call.1} parent=0 // pred_region
    _
  $region21: #{tpu_custom_call.1} parent=0 // pred_fallthru
    _
  // Predicated region
  $region22: #{tpu_custom_call.1} parent=0 // pred_check
    _
  $region23: #{tpu_custom_call.1} parent=0 // pred_check_branch
    %24 = sbr.rel (0) target = $region25
  $region24: #{tpu_custom_call.1} parent=0 // pred_region
    _
  $region25: #{tpu_custom_call.1} parent=0 // pred_fallthru
    _
  // Predicated region
  $region26: #{tpu_custom_call.1} parent=0 // pred_check
    _
  $region27: #{tpu_custom_call.1} parent=0 // pred_check_branch
    %26 = sbr.rel (0) target = $region29
  $region28: #{tpu_custom_call.1} parent=0 // pred_region
    _
  $region29: #{tpu_custom_call.1} parent=0 // pred_fallthru
    _
  // Predicated region
  $region30: #{tpu_custom_call.1} parent=0 // pred_check
    _
  $region31: #{tpu_custom_call.1} parent=0 // pred_check_branch
    %28 = sbr.rel (0) target = $region33
  $region32: #{tpu_custom_call.1} parent=0 // pred_region
    _
  $region33: #{tpu_custom_call.1} parent=0 // pred_fallthru
    _
  %v30 = vld [vmem:[%s0] sm:$0xf]
  %v31 = vld [vmem:[%s0 + $0x4] sm:$0xf]
  %v32 = vld [vmem:[%s0 + $0x8] sm:$0xf]
  %v33 = vld [vmem:[%s0 + $0xc] sm:$0xf]
  %v34 = vld [vmem:[%s0 + $0x10] sm:$0xf]
  %v35 = vld [vmem:[%s0 + $0x14] sm:$0xf]
  %v36 = vld [vmem:[%s0 + $0x18] sm:$0xf]
  %v37 = vld [vmem:[%s0 + $0x1c] sm:$0xf]
  %v38 = vld [vmem:[%s0 + $0x20] sm:$0xf]
  %v39 = vld [vmem:[%s0 + $0x24] sm:$0xf]
  %v40 = vld [vmem:[%s0 + $0x28] sm:$0xf]
  %v41 = vld [vmem:[%s0 + $0x2c] sm:$0xf]
  %v42 = vld [vmem:[%s0 + $0x30] sm:$0xf]
  %v43 = vld [vmem:[%s0 + $0x34] sm:$0xf]
  %v44 = vld [vmem:[%s0 + $0x38] sm:$0xf]
  %v45 = vld [vmem:[%s0 + $0x3c] sm:$0xf]
  %v46 = vld [vmem:[%s0 + $0x40] sm:$0xf]
  %v47 = vld [vmem:[%s0 + $0x44] sm:$0xf]
  %v48 = vld [vmem:[%s0 + $0x48] sm:$0xf]
  %v49 = vld [vmem:[%s0 + $0x4c] sm:$0xf]
  %v50 = vld [vmem:[%s0 + $0x50] sm:$0xf]
  %v51 = vld [vmem:[%s0 + $0x54] sm:$0xf]
  %v52 = vld [vmem:[%s0 + $0x58] sm:$0xf]
  %v53 = vld [vmem:[%s0 + $0x5c] sm:$0xf]
  %v54 = vld [vmem:[%s0 + $0x60] sm:$0xf]
  %v55 = vld [vmem:[%s0 + $0x64] sm:$0xf]
  %v56 = vld [vmem:[%s0 + $0x68] sm:$0xf]
  %v57 = vld [vmem:[%s0 + $0x6c] sm:$0xf]
  %v58 = vld [vmem:[%s0 + $0x70] sm:$0xf]
  %v59 = vld [vmem:[%s0 + $0x74] sm:$0xf]
  %v60 = vld [vmem:[%s0 + $0x78] sm:$0xf]
  %v61 = vld [vmem:[%s0 + $0x7c] sm:$0xf]
  %v62 = vld [vmem:[%s0 + $0x80] sm:$0xf]
  %v63 = vld [vmem:[%s0 + $0x84] sm:$0xf]
  %v64 = vld [vmem:[%s0 + $0x88] sm:$0xf]
  %v65 = vld [vmem:[%s0 + $0x8c] sm:$0xf]
  %v66 = vld [vmem:[%s0 + $0x90] sm:$0xf]
  %v67 = vld [vmem:[%s0 + $0x94] sm:$0xf]
  %v68 = vld [vmem:[%s0 + $0x98] sm:$0xf]
  %v69 = vld [vmem:[%s0 + $0x9c] sm:$0xf]
  %v70 = vld [vmem:[%s0 + $0xa0] sm:$0xf]
  %v71 = vld [vmem:[%s0 + $0xa4] sm:$0xf]
  %v72 = vld [vmem:[%s0 + $0xa8] sm:$0xf]
  %v73 = vld [vmem:[%s0 + $0xac] sm:$0xf]
  %v74 = vld [vmem:[%s0 + $0xb0] sm:$0xf]
  %v75 = vld [vmem:[%s0 + $0xb4] sm:$0xf]
  %v76 = vld [vmem:[%s0 + $0xb8] sm:$0xf]
  %v77 = vld [vmem:[%s0 + $0xbc] sm:$0xf]
  %v78 = vld [vmem:[%s0 + $0xc0] sm:$0xf]
  %v79 = vld [vmem:[%s0 + $0xc4] sm:$0xf]
  %v80 = vld [vmem:[%s0 + $0xc8] sm:$0xf]
  %v81 = vld [vmem:[%s0 + $0xcc] sm:$0xf]
  %v82 = vld [vmem:[%s0 + $0xd0] sm:$0xf]
  %v83 = vld [vmem:[%s0 + $0xd4] sm:$0xf]
  %v84 = vld [vmem:[%s0 + $0xd8] sm:$0xf]
  %v85 = vld [vmem:[%s0 + $0xdc] sm:$0xf]
  %v86 = vld [vmem:[%s0 + $0xe0] sm:$0xf]
  %v87 = vld [vmem:[%s0 + $0xe4] sm:$0xf]
  %v88 = vld [vmem:[%s0 + $0xe8] sm:$0xf]
  %v89 = vld [vmem:[%s0 + $0xec] sm:$0xf]
  %v90 = vld [vmem:[%s0 + $0xf0] sm:$0xf]
  %v91 = vld [vmem:[%s0 + $0xf4] sm:$0xf]
  %v92 = vld [vmem:[%s0 + $0xf8] sm:$0xf]
  %v93 = vld [vmem:[%s0 + $0xfc] sm:$0xf]
  %v94 = vunpack.c.l.bf16 %v30
  %v95 = vunpack.c.l.bf16 %v31
  %v96 = vunpack.c.l.bf16 %v32
  %v97 = vunpack.c.l.bf16 %v33
  %v98 = vunpack.c.l.bf16 %v34
  %v99 = vunpack.c.l.bf16 %v35
  %v100 = vunpack.c.l.bf16 %v36
  %v101 = vunpack.c.l.bf16 %v37
  %v102 = vunpack.c.l.bf16 %v38
  %v103 = vunpack.c.l.bf16 %v39
  %v104 = vunpack.c.l.bf16 %v40
  %v105 = vunpack.c.l.bf16 %v41
  %v106 = vunpack.c.l.bf16 %v42
  %v107 = vunpack.c.l.bf16 %v43
  %v108 = vunpack.c.l.bf16 %v44
  %v109 = vunpack.c.l.bf16 %v45
  %v110 = vunpack.c.l.bf16 %v46
  %v111 = vunpack.c.l.bf16 %v47
  %v112 = vunpack.c.l.bf16 %v48
  %v113 = vunpack.c.l.bf16 %v49
  %v114 = vunpack.c.l.bf16 %v50
  %v115 = vunpack.c.l.bf16 %v51
  %v116 = vunpack.c.l.bf16 %v52
  %v117 = vunpack.c.l.bf16 %v53
  %v118 = vunpack.c.l.bf16 %v54
  %v119 = vunpack.c.l.bf16 %v55
  %v120 = vunpack.c.l.bf16 %v56
  %v121 = vunpack.c.l.bf16 %v57
  %v122 = vunpack.c.l.bf16 %v58
  %v123 = vunpack.c.l.bf16 %v59
  %v124 = vunpack.c.l.bf16 %v60
  %v125 = vunpack.c.l.bf16 %v61
  %v126 = vunpack.c.l.bf16 %v62
  %v127 = vunpack.c.l.bf16 %v63
  %v128 = vunpack.c.l.bf16 %v64
  %v129 = vunpack.c.l.bf16 %v65
  %v130 = vunpack.c.l.bf16 %v66
  %v131 = vunpack.c.l.bf16 %v67
  %v132 = vunpack.c.l.bf16 %v68
  %v133 = vunpack.c.l.bf16 %v69
  %v134 = vunpack.c.l.bf16 %v70
  %v135 = vunpack.c.l.bf16 %v71
  %v136 = vunpack.c.l.bf16 %v72
  %v137 = vunpack.c.l.bf16 %v73
  %v138 = vunpack.c.l.bf16 %v74
  %v139 = vunpack.c.l.bf16 %v75
  %v140 = vunpack.c.l.bf16 %v76
  %v141 = vunpack.c.l.bf16 %v77
  %v142 = vunpack.c.l.bf16 %v78
  %v143 = vunpack.c.l.bf16 %v79
  %v144 = vunpack.c.l.bf16 %v80
  %v145 = vunpack.c.l.bf16 %v81
  %v146 = vunpack.c.l.bf16 %v82
  %v147 = vunpack.c.l.bf16 %v83
  %v148 = vunpack.c.l.bf16 %v84
  %v149 = vunpack.c.l.bf16 %v85
  %v150 = vunpack.c.l.bf16 %v86
  %v151 = vunpack.c.l.bf16 %v87
  %v152 = vunpack.c.l.bf16 %v88
  %v153 = vunpack.c.l.bf16 %v89
  %v154 = vunpack.c.l.bf16 %v90
  %v155 = vunpack.c.l.bf16 %v91
  %v156 = vunpack.c.l.bf16 %v92
  %v157 = vunpack.c.l.bf16 %v93
  %v158 = vld [vmem:[%s1] sm:$0x1]
  %v160 = vlaneseq
  %v161 = vshrl.u32 %v160, 7
  %v162 = vsub.s32 0, %v161
  %v163 = vrot.slane %v158, %v162
  %v165 = vmul.f32 %v94, %v163
  %v166 = vmul.f32 %v95, %v163
  %v167 = vmul.f32 %v96, %v163
  %v168 = vmul.f32 %v97, %v163
  %v169 = vmul.f32 %v98, %v163
  %v170 = vmul.f32 %v99, %v163
  %v171 = vmul.f32 %v100, %v163
  %v172 = vmul.f32 %v101, %v163
  %v173 = vmul.f32 %v102, %v163
  %v174 = vmul.f32 %v103, %v163
  %v175 = vmul.f32 %v104, %v163
  %v176 = vmul.f32 %v105, %v163
  %v177 = vmul.f32 %v106, %v163
  %v178 = vmul.f32 %v107, %v163
  %v179 = vmul.f32 %v108, %v163
  %v180 = vmul.f32 %v109, %v163
  %v181 = vmul.f32 %v110, %v163
  %v182 = vmul.f32 %v111, %v163
  %v183 = vmul.f32 %v112, %v163
  %v184 = vmul.f32 %v113, %v163
  %v185 = vmul.f32 %v114, %v163
  %v186 = vmul.f32 %v115, %v163
  %v187 = vmul.f32 %v116, %v163
  %v188 = vmul.f32 %v117, %v163
  %v189 = vmul.f32 %v118, %v163
  %v190 = vmul.f32 %v119, %v163
  %v191 = vmul.f32 %v120, %v163
  %v192 = vmul.f32 %v121, %v163
  %v193 = vmul.f32 %v122, %v163
  %v194 = vmul.f32 %v123, %v163
  %v195 = vmul.f32 %v124, %v163
  %v196 = vmul.f32 %v125, %v163
  %v197 = vmul.f32 %v126, %v163
  %v198 = vmul.f32 %v127, %v163
  %v199 = vmul.f32 %v128, %v163
  %v200 = vmul.f32 %v129, %v163
  %v201 = vmul.f32 %v130, %v163
  %v202 = vmul.f32 %v131, %v163
  %v203 = vmul.f32 %v132, %v163
  %v204 = vmul.f32 %v133, %v163
  %v205 = vmul.f32 %v134, %v163
  %v206 = vmul.f32 %v135, %v163
  %v207 = vmul.f32 %v136, %v163
  %v208 = vmul.f32 %v137, %v163
  %v209 = vmul.f32 %v138, %v163
  %v210 = vmul.f32 %v139, %v163
  %v211 = vmul.f32 %v140, %v163
  %v212 = vmul.f32 %v141, %v163
  %v213 = vmul.f32 %v142, %v163
  %v214 = vmul.f32 %v143, %v163
  %v215 = vmul.f32 %v144, %v163
  %v216 = vmul.f32 %v145, %v163
  %v217 = vmul.f32 %v146, %v163
  %v218 = vmul.f32 %v147, %v163
  %v219 = vmul.f32 %v148, %v163
  %v220 = vmul.f32 %v149, %v163
  %v221 = vmul.f32 %v150, %v163
  %v222 = vmul.f32 %v151, %v163
  %v223 = vmul.f32 %v152, %v163
  %v224 = vmul.f32 %v153, %v163
  %v225 = vmul.f32 %v154, %v163
  %v226 = vmul.f32 %v155, %v163
  %v227 = vmul.f32 %v156, %v163
  %v228 = vmul.f32 %v157, %v163
  %v229 = vld [vmem:[%s2] sm:$0x1]
  %v231 = vlaneseq
  %v232 = vshrl.u32 %v231, 7
  %v233 = vsub.s32 0, %v232
  %v234 = vrot.slane %v229, %v233
  %v236 = vadd.f32 %v165, %v234
  %v237 = vadd.f32 %v166, %v234
  %v238 = vadd.f32 %v167, %v234
  %v239 = vadd.f32 %v168, %v234
  %v240 = vadd.f32 %v169, %v234
  %v241 = vadd.f32 %v170, %v234
  %v242 = vadd.f32 %v171, %v234
  %v243 = vadd.f32 %v172, %v234
  %v244 = vadd.f32 %v173, %v234
  %v245 = vadd.f32 %v174, %v234
  %v246 = vadd.f32 %v175, %v234
  %v247 = vadd.f32 %v176, %v234
  %v248 = vadd.f32 %v177, %v234
  %v249 = vadd.f32 %v178, %v234
  %v250 = vadd.f32 %v179, %v234
  %v251 = vadd.f32 %v180, %v234
  %v252 = vadd.f32 %v181, %v234
  %v253 = vadd.f32 %v182, %v234
  %v254 = vadd.f32 %v183, %v234
  %v255 = vadd.f32 %v184, %v234
  %v256 = vadd.f32 %v185, %v234
  %v257 = vadd.f32 %v186, %v234
  %v258 = vadd.f32 %v187, %v234
  %v259 = vadd.f32 %v188, %v234
  %v260 = vadd.f32 %v189, %v234
  %v261 = vadd.f32 %v190, %v234
  %v262 = vadd.f32 %v191, %v234
  %v263 = vadd.f32 %v192, %v234
  %v264 = vadd.f32 %v193, %v234
  %v265 = vadd.f32 %v194, %v234
  %v266 = vadd.f32 %v195, %v234
  %v267 = vadd.f32 %v196, %v234
  %v268 = vadd.f32 %v197, %v234
  %v269 = vadd.f32 %v198, %v234
  %v270 = vadd.f32 %v199, %v234
  %v271 = vadd.f32 %v200, %v234
  %v272 = vadd.f32 %v201, %v234
  %v273 = vadd.f32 %v202, %v234
  %v274 = vadd.f32 %v203, %v234
  %v275 = vadd.f32 %v204, %v234
  %v276 = vadd.f32 %v205, %v234
  %v277 = vadd.f32 %v206, %v234
  %v278 = vadd.f32 %v207, %v234
  %v279 = vadd.f32 %v208, %v234
  %v280 = vadd.f32 %v209, %v234
  %v281 = vadd.f32 %v210, %v234
  %v282 = vadd.f32 %v211, %v234
  %v283 = vadd.f32 %v212, %v234
  %v284 = vadd.f32 %v213, %v234
  %v285 = vadd.f32 %v214, %v234
  %v286 = vadd.f32 %v215, %v234
  %v287 = vadd.f32 %v216, %v234
  %v288 = vadd.f32 %v217, %v234
  %v289 = vadd.f32 %v218, %v234
  %v290 = vadd.f32 %v219, %v234
  %v291 = vadd.f32 %v220, %v234
  %v292 = vadd.f32 %v221, %v234
  %v293 = vadd.f32 %v222, %v234
  %v294 = vadd.f32 %v223, %v234
  %v295 = vadd.f32 %v224, %v234
  %v296 = vadd.f32 %v225, %v234
  %v297 = vadd.f32 %v226, %v234
  %v298 = vadd.f32 %v227, %v234
  %v299 = vadd.f32 %v228, %v234
  %vm300 = vcmp.ge.f32.partialorder %v236, 0.0
  %vm301 = vcmp.ge.f32.partialorder %v237, 0.0
  %vm302 = vcmp.ge.f32.partialorder %v238, 0.0
  %vm303 = vcmp.ge.f32.partialorder %v239, 0.0
  %vm304 = vcmp.ge.f32.partialorder %v240, 0.0
  %vm305 = vcmp.ge.f32.partialorder %v241, 0.0
  %vm306 = vcmp.ge.f32.partialorder %v242, 0.0
  %vm307 = vcmp.ge.f32.partialorder %v243, 0.0
  %vm308 = vcmp.ge.f32.partialorder %v244, 0.0
  %vm309 = vcmp.ge.f32.partialorder %v245, 0.0
  %vm310 = vcmp.ge.f32.partialorder %v246, 0.0
  %vm311 = vcmp.ge.f32.partialorder %v247, 0.0
  %vm312 = vcmp.ge.f32.partialorder %v248, 0.0
  %vm313 = vcmp.ge.f32.partialorder %v249, 0.0
  %vm314 = vcmp.ge.f32.partialorder %v250, 0.0
  %vm315 = vcmp.ge.f32.partialorder %v251, 0.0
  %vm316 = vcmp.ge.f32.partialorder %v252, 0.0
  %vm317 = vcmp.ge.f32.partialorder %v253, 0.0
  %vm318 = vcmp.ge.f32.partialorder %v254, 0.0
  %vm319 = vcmp.ge.f32.partialorder %v255, 0.0
  %vm320 = vcmp.ge.f32.partialorder %v256, 0.0
  %vm321 = vcmp.ge.f32.partialorder %v257, 0.0
  %vm322 = vcmp.ge.f32.partialorder %v258, 0.0
  %vm323 = vcmp.ge.f32.partialorder %v259, 0.0
  %vm324 = vcmp.ge.f32.partialorder %v260, 0.0
  %vm325 = vcmp.ge.f32.partialorder %v261, 0.0
  %vm326 = vcmp.ge.f32.partialorder %v262, 0.0
  %vm327 = vcmp.ge.f32.partialorder %v263, 0.0
  %vm328 = vcmp.ge.f32.partialorder %v264, 0.0
  %vm329 = vcmp.ge.f32.partialorder %v265, 0.0
  %vm330 = vcmp.ge.f32.partialorder %v266, 0.0
  %vm331 = vcmp.ge.f32.partialorder %v267, 0.0
  %vm332 = vcmp.ge.f32.partialorder %v268, 0.0
  %vm333 = vcmp.ge.f32.partialorder %v269, 0.0
  %vm334 = vcmp.ge.f32.partialorder %v270, 0.0
  %vm335 = vcmp.ge.f32.partialorder %v271, 0.0
  %vm336 = vcmp.ge.f32.partialorder %v272, 0.0
  %vm337 = vcmp.ge.f32.partialorder %v273, 0.0
  %vm338 = vcmp.ge.f32.partialorder %v274, 0.0
  %vm339 = vcmp.ge.f32.partialorder %v275, 0.0
  %vm340 = vcmp.ge.f32.partialorder %v276, 0.0
  %vm341 = vcmp.ge.f32.partialorder %v277, 0.0
  %vm342 = vcmp.ge.f32.partialorder %v278, 0.0
  %vm343 = vcmp.ge.f32.partialorder %v279, 0.0
  %vm344 = vcmp.ge.f32.partialorder %v280, 0.0
  %vm345 = vcmp.ge.f32.partialorder %v281, 0.0
  %vm346 = vcmp.ge.f32.partialorder %v282, 0.0
  %vm347 = vcmp.ge.f32.partialorder %v283, 0.0
  %vm348 = vcmp.ge.f32.partialorder %v284, 0.0
  %vm349 = vcmp.ge.f32.partialorder %v285, 0.0
  %vm350 = vcmp.ge.f32.partialorder %v286, 0.0
  %vm351 = vcmp.ge.f32.partialorder %v287, 0.0
  %vm352 = vcmp.ge.f32.partialorder %v288, 0.0
  %vm353 = vcmp.ge.f32.partialorder %v289, 0.0
  %vm354 = vcmp.ge.f32.partialorder %v290, 0.0
  %vm355 = vcmp.ge.f32.partialorder %v291, 0.0
  %vm356 = vcmp.ge.f32.partialorder %v292, 0.0
  %vm357 = vcmp.ge.f32.partialorder %v293, 0.0
  %vm358 = vcmp.ge.f32.partialorder %v294, 0.0
  %vm359 = vcmp.ge.f32.partialorder %v295, 0.0
  %vm360 = vcmp.ge.f32.partialorder %v296, 0.0
  %vm361 = vcmp.ge.f32.partialorder %v297, 0.0
  %vm362 = vcmp.ge.f32.partialorder %v298, 0.0
  %vm363 = vcmp.ge.f32.partialorder %v299, 0.0
  %v364 = vmul.f32 %v236, 0.01
  %v365 = vmul.f32 %v237, 0.01
  %v366 = vmul.f32 %v238, 0.01
  %v367 = vmul.f32 %v239, 0.01
  %v368 = vmul.f32 %v240, 0.01
  %v369 = vmul.f32 %v241, 0.01
  %v370 = vmul.f32 %v242, 0.01
  %v371 = vmul.f32 %v243, 0.01
  %v372 = vmul.f32 %v244, 0.01
  %v373 = vmul.f32 %v245, 0.01
  %v374 = vmul.f32 %v246, 0.01
  %v375 = vmul.f32 %v247, 0.01
  %v376 = vmul.f32 %v248, 0.01
  %v377 = vmul.f32 %v249, 0.01
  %v378 = vmul.f32 %v250, 0.01
  %v379 = vmul.f32 %v251, 0.01
  %v380 = vmul.f32 %v252, 0.01
  %v381 = vmul.f32 %v253, 0.01
  %v382 = vmul.f32 %v254, 0.01
  %v383 = vmul.f32 %v255, 0.01
  %v384 = vmul.f32 %v256, 0.01
  %v385 = vmul.f32 %v257, 0.01
  %v386 = vmul.f32 %v258, 0.01
  %v387 = vmul.f32 %v259, 0.01
  %v388 = vmul.f32 %v260, 0.01
  %v389 = vmul.f32 %v261, 0.01
  %v390 = vmul.f32 %v262, 0.01
  %v391 = vmul.f32 %v263, 0.01
  %v392 = vmul.f32 %v264, 0.01
  %v393 = vmul.f32 %v265, 0.01
  %v394 = vmul.f32 %v266, 0.01
  %v395 = vmul.f32 %v267, 0.01
  %v396 = vmul.f32 %v268, 0.01
  %v397 = vmul.f32 %v269, 0.01
  %v398 = vmul.f32 %v270, 0.01
  %v399 = vmul.f32 %v271, 0.01
  %v400 = vmul.f32 %v272, 0.01
  %v401 = vmul.f32 %v273, 0.01
  %v402 = vmul.f32 %v274, 0.01
  %v403 = vmul.f32 %v275, 0.01
  %v404 = vmul.f32 %v276, 0.01
  %v405 = vmul.f32 %v277, 0.01
  %v406 = vmul.f32 %v278, 0.01
  %v407 = vmul.f32 %v279, 0.01
  %v408 = vmul.f32 %v280, 0.01
  %v409 = vmul.f32 %v281, 0.01
  %v410 = vmul.f32 %v282, 0.01
  %v411 = vmul.f32 %v283, 0.01
  %v412 = vmul.f32 %v284, 0.01
  %v413 = vmul.f32 %v285, 0.01
  %v414 = vmul.f32 %v286, 0.01
  %v415 = vmul.f32 %v287, 0.01
  %v416 = vmul.f32 %v288, 0.01
  %v417 = vmul.f32 %v289, 0.01
  %v418 = vmul.f32 %v290, 0.01
  %v419 = vmul.f32 %v291, 0.01
  %v420 = vmul.f32 %v292, 0.01
  %v421 = vmul.f32 %v293, 0.01
  %v422 = vmul.f32 %v294, 0.01
  %v423 = vmul.f32 %v295, 0.01
  %v424 = vmul.f32 %v296, 0.01
  %v425 = vmul.f32 %v297, 0.01
  %v426 = vmul.f32 %v298, 0.01
  %v427 = vmul.f32 %v299, 0.01
  %v428 = vsel %vm300, %v236, %v364
  %v429 = vsel %vm301, %v237, %v365
  %v430 = vsel %vm302, %v238, %v366
  %v431 = vsel %vm303, %v239, %v367
  %v432 = vsel %vm304, %v240, %v368
  %v433 = vsel %vm305, %v241, %v369
  %v434 = vsel %vm306, %v242, %v370
  %v435 = vsel %vm307, %v243, %v371
  %v436 = vsel %vm308, %v244, %v372
  %v437 = vsel %vm309, %v245, %v373
  %v438 = vsel %vm310, %v246, %v374
  %v439 = vsel %vm311, %v247, %v375
  %v440 = vsel %vm312, %v248, %v376
  %v441 = vsel %vm313, %v249, %v377
  %v442 = vsel %vm314, %v250, %v378
  %v443 = vsel %vm315, %v251, %v379
  %v444 = vsel %vm316, %v252, %v380
  %v445 = vsel %vm317, %v253, %v381
  %v446 = vsel %vm318, %v254, %v382
  %v447 = vsel %vm319, %v255, %v383
  %v448 = vsel %vm320, %v256, %v384
  %v449 = vsel %vm321, %v257, %v385
  %v450 = vsel %vm322, %v258, %v386
  %v451 = vsel %vm323, %v259, %v387
  %v452 = vsel %vm324, %v260, %v388
  %v453 = vsel %vm325, %v261, %v389
  %v454 = vsel %vm326, %v262, %v390
  %v455 = vsel %vm327, %v263, %v391
  %v456 = vsel %vm328, %v264, %v392
  %v457 = vsel %vm329, %v265, %v393
  %v458 = vsel %vm330, %v266, %v394
  %v459 = vsel %vm331, %v267, %v395
  %v460 = vsel %vm332, %v268, %v396
  %v461 = vsel %vm333, %v269, %v397
  %v462 = vsel %vm334, %v270, %v398
  %v463 = vsel %vm335, %v271, %v399
  %v464 = vsel %vm336, %v272, %v400
  %v465 = vsel %vm337, %v273, %v401
  %v466 = vsel %vm338, %v274, %v402
  %v467 = vsel %vm339, %v275, %v403
  %v468 = vsel %vm340, %v276, %v404
  %v469 = vsel %vm341, %v277, %v405
  %v470 = vsel %vm342, %v278, %v406
  %v471 = vsel %vm343, %v279, %v407
  %v472 = vsel %vm344, %v280, %v408
  %v473 = vsel %vm345, %v281, %v409
  %v474 = vsel %vm346, %v282, %v410
  %v475 = vsel %vm347, %v283, %v411
  %v476 = vsel %vm348, %v284, %v412
  %v477 = vsel %vm349, %v285, %v413
  %v478 = vsel %vm350, %v286, %v414
  %v479 = vsel %vm351, %v287, %v415
  %v480 = vsel %vm352, %v288, %v416
  %v481 = vsel %vm353, %v289, %v417
  %v482 = vsel %vm354, %v290, %v418
  %v483 = vsel %vm355, %v291, %v419
  %v484 = vsel %vm356, %v292, %v420
  %v485 = vsel %vm357, %v293, %v421
  %v486 = vsel %vm358, %v294, %v422
  %v487 = vsel %vm359, %v295, %v423
  %v488 = vsel %vm360, %v296, %v424
  %v489 = vsel %vm361, %v297, %v425
  %v490 = vsel %vm362, %v298, %v426
  %v491 = vsel %vm363, %v299, %v427
  %v556 = vcombine.high %v428, %v428
  %v557 = vcombine.high %v429, %v429
  %v558 = vcombine.high %v430, %v430
  %v559 = vcombine.high %v431, %v431
  %v560 = vcombine.high %v432, %v432
  %v561 = vcombine.high %v433, %v433
  %v562 = vcombine.high %v434, %v434
  %v563 = vcombine.high %v435, %v435
  %v564 = vcombine.high %v436, %v436
  %v565 = vcombine.high %v437, %v437
  %v566 = vcombine.high %v438, %v438
  %v567 = vcombine.high %v439, %v439
  %v568 = vcombine.high %v440, %v440
  %v569 = vcombine.high %v441, %v441
  %v570 = vcombine.high %v442, %v442
  %v571 = vcombine.high %v443, %v443
  %v572 = vcombine.high %v444, %v444
  %v573 = vcombine.high %v445, %v445
  %v574 = vcombine.high %v446, %v446
  %v575 = vcombine.high %v447, %v447
  %v576 = vcombine.high %v448, %v448
  %v577 = vcombine.high %v449, %v449
  %v578 = vcombine.high %v450, %v450
  %v579 = vcombine.high %v451, %v451
  %v580 = vcombine.high %v452, %v452
  %v581 = vcombine.high %v453, %v453
  %v582 = vcombine.high %v454, %v454
  %v583 = vcombine.high %v455, %v455
  %v584 = vcombine.high %v456, %v456
  %v585 = vcombine.high %v457, %v457
  %v586 = vcombine.high %v458, %v458
  %v587 = vcombine.high %v459, %v459
  %v588 = vcombine.high %v460, %v460
  %v589 = vcombine.high %v461, %v461
  %v590 = vcombine.high %v462, %v462
  %v591 = vcombine.high %v463, %v463
  %v592 = vcombine.high %v464, %v464
  %v593 = vcombine.high %v465, %v465
  %v594 = vcombine.high %v466, %v466
  %v595 = vcombine.high %v467, %v467
  %v596 = vcombine.high %v468, %v468
  %v597 = vcombine.high %v469, %v469
  %v598 = vcombine.high %v470, %v470
  %v599 = vcombine.high %v471, %v471
  %v600 = vcombine.high %v472, %v472
  %v601 = vcombine.high %v473, %v473
  %v602 = vcombine.high %v474, %v474
  %v603 = vcombine.high %v475, %v475
  %v604 = vcombine.high %v476, %v476
  %v605 = vcombine.high %v477, %v477
  %v606 = vcombine.high %v478, %v478
  %v607 = vcombine.high %v479, %v479
  %v608 = vcombine.high %v480, %v480
  %v609 = vcombine.high %v481, %v481
  %v610 = vcombine.high %v482, %v482
  %v611 = vcombine.high %v483, %v483
  %v612 = vcombine.high %v484, %v484
  %v613 = vcombine.high %v485, %v485
  %v614 = vcombine.high %v486, %v486
  %v615 = vcombine.high %v487, %v487
  %v616 = vcombine.high %v488, %v488
  %v617 = vcombine.high %v489, %v489
  %v618 = vcombine.high %v490, %v490
  %v619 = vcombine.high %v491, %v491
  %v684 = vrot.slane %v428, 5
  %v685 = vrot.slane %v684, 4
  %v686 = vrot.slane %v556, 5
  %v687 = vrot.slane %v686, 4
  %v688 = vrot.slane %v429, 5
  %v689 = vrot.slane %v688, 4
  %v690 = vrot.slane %v557, 5
  %v691 = vrot.slane %v690, 4
  %v692 = vrot.slane %v430, 5
  %v693 = vrot.slane %v692, 4
  %v694 = vrot.slane %v558, 5
  %v695 = vrot.slane %v694, 4
  %v696 = vrot.slane %v431, 5
  %v697 = vrot.slane %v696, 4
  %v698 = vrot.slane %v559, 5
  %v699 = vrot.slane %v698, 4
  %v700 = vrot.slane %v432, 5
  %v701 = vrot.slane %v700, 4
  %v702 = vrot.slane %v560, 5
  %v703 = vrot.slane %v702, 4
  %v704 = vrot.slane %v433, 5
  %v705 = vrot.slane %v704, 4
  %v706 = vrot.slane %v561, 5
  %v707 = vrot.slane %v706, 4
  %v708 = vrot.slane %v434, 5
  %v709 = vrot.slane %v708, 4
  %v710 = vrot.slane %v562, 5
  %v711 = vrot.slane %v710, 4
  %v712 = vrot.slane %v435, 5
  %v713 = vrot.slane %v712, 4
  %v714 = vrot.slane %v563, 5
  %v715 = vrot.slane %v714, 4
  %v716 = vrot.slane %v436, 5
  %v717 = vrot.slane %v716, 4
  %v718 = vrot.slane %v564, 5
  %v719 = vrot.slane %v718, 4
  %v720 = vrot.slane %v437, 5
  %v721 = vrot.slane %v720, 4
  %v722 = vrot.slane %v565, 5
  %v723 = vrot.slane %v722, 4
  %v724 = vrot.slane %v438, 5
  %v725 = vrot.slane %v724, 4
  %v726 = vrot.slane %v566, 5
  %v727 = vrot.slane %v726, 4
  %v728 = vrot.slane %v439, 5
  %v729 = vrot.slane %v728, 4
  %v730 = vrot.slane %v567, 5
  %v731 = vrot.slane %v730, 4
  %v732 = vrot.slane %v440, 5
  %v733 = vrot.slane %v732, 4
  %v734 = vrot.slane %v568, 5
  %v735 = vrot.slane %v734, 4
  %v736 = vrot.slane %v441, 5
  %v737 = vrot.slane %v736, 4
  %v738 = vrot.slane %v569, 5
  %v739 = vrot.slane %v738, 4
  %v740 = vrot.slane %v442, 5
  %v741 = vrot.slane %v740, 4
  %v742 = vrot.slane %v570, 5
  %v743 = vrot.slane %v742, 4
  %v744 = vrot.slane %v443, 5
  %v745 = vrot.slane %v744, 4
  %v746 = vrot.slane %v571, 5
  %v747 = vrot.slane %v746, 4
  %v748 = vrot.slane %v444, 5
  %v749 = vrot.slane %v748, 4
  %v750 = vrot.slane %v572, 5
  %v751 = vrot.slane %v750, 4
  %v752 = vrot.slane %v445, 5
  %v753 = vrot.slane %v752, 4
  %v754 = vrot.slane %v573, 5
  %v755 = vrot.slane %v754, 4
  %v756 = vrot.slane %v446, 5
  %v757 = vrot.slane %v756, 4
  %v758 = vrot.slane %v574, 5
  %v759 = vrot.slane %v758, 4
  %v760 = vrot.slane %v447, 5
  %v761 = vrot.slane %v760, 4
  %v762 = vrot.slane %v575, 5
  %v763 = vrot.slane %v762, 4
  %v764 = vrot.slane %v448, 5
  %v765 = vrot.slane %v764, 4
  %v766 = vrot.slane %v576, 5
  %v767 = vrot.slane %v766, 4
  %v768 = vrot.slane %v449, 5
  %v769 = vrot.slane %v768, 4
  %v770 = vrot.slane %v577, 5
  %v771 = vrot.slane %v770, 4
  %v772 = vrot.slane %v450, 5
  %v773 = vrot.slane %v772, 4
  %v774 = vrot.slane %v578, 5
  %v775 = vrot.slane %v774, 4
  %v776 = vrot.slane %v451, 5
  %v777 = vrot.slane %v776, 4
  %v778 = vrot.slane %v579, 5
  %v779 = vrot.slane %v778, 4
  %v780 = vrot.slane %v452, 5
  %v781 = vrot.slane %v780, 4
  %v782 = vrot.slane %v580, 5
  %v783 = vrot.slane %v782, 4
  %v784 = vrot.slane %v453, 5
  %v785 = vrot.slane %v784, 4
  %v786 = vrot.slane %v581, 5
  %v787 = vrot.slane %v786, 4
  %v788 = vrot.slane %v454, 5
  %v789 = vrot.slane %v788, 4
  %v790 = vrot.slane %v582, 5
  %v791 = vrot.slane %v790, 4
  %v792 = vrot.slane %v455, 5
  %v793 = vrot.slane %v792, 4
  %v794 = vrot.slane %v583, 5
  %v795 = vrot.slane %v794, 4
  %v796 = vrot.slane %v456, 5
  %v797 = vrot.slane %v796, 4
  %v798 = vrot.slane %v584, 5
  %v799 = vrot.slane %v798, 4
  %v800 = vrot.slane %v457, 5
  %v801 = vrot.slane %v800, 4
  %v802 = vrot.slane %v585, 5
  %v803 = vrot.slane %v802, 4
  %v804 = vrot.slane %v458, 5
  %v805 = vrot.slane %v804, 4
  %v806 = vrot.slane %v586, 5
  %v807 = vrot.slane %v806, 4
  %v808 = vrot.slane %v459, 5
  %v809 = vrot.slane %v808, 4
  %v810 = vrot.slane %v587, 5
  %v811 = vrot.slane %v810, 4
  %v812 = vrot.slane %v460, 5
  %v813 = vrot.slane %v812, 4
  %v814 = vrot.slane %v588, 5
  %v815 = vrot.slane %v814, 4
  %v816 = vrot.slane %v461, 5
  %v817 = vrot.slane %v816, 4
  %v818 = vrot.slane %v589, 5
  %v819 = vrot.slane %v818, 4
  %v820 = vrot.slane %v462, 5
  %v821 = vrot.slane %v820, 4
  %v822 = vrot.slane %v590, 5
  %v823 = vrot.slane %v822, 4
  %v824 = vrot.slane %v463, 5
  %v825 = vrot.slane %v824, 4
  %v826 = vrot.slane %v591, 5
  %v827 = vrot.slane %v826, 4
  %v828 = vrot.slane %v464, 5
  %v829 = vrot.slane %v828, 4
  %v830 = vrot.slane %v592, 5
  %v831 = vrot.slane %v830, 4
  %v832 = vrot.slane %v465, 5
  %v833 = vrot.slane %v832, 4
  %v834 = vrot.slane %v593, 5
  %v835 = vrot.slane %v834, 4
  %v836 = vrot.slane %v466, 5
  %v837 = vrot.slane %v836, 4
  %v838 = vrot.slane %v594, 5
  %v839 = vrot.slane %v838, 4
  %v840 = vrot.slane %v467, 5
  %v841 = vrot.slane %v840, 4
  %v842 = vrot.slane %v595, 5
  %v843 = vrot.slane %v842, 4
  %v844 = vrot.slane %v468, 5
  %v845 = vrot.slane %v844, 4
  %v846 = vrot.slane %v596, 5
  %v847 = vrot.slane %v846, 4
  %v848 = vrot.slane %v469, 5
  %v849 = vrot.slane %v848, 4
  %v850 = vrot.slane %v597, 5
  %v851 = vrot.slane %v850, 4
  %v852 = vrot.slane %v470, 5
  %v853 = vrot.slane %v852, 4
  %v854 = vrot.slane %v598, 5
  %v855 = vrot.slane %v854, 4
  %v856 = vrot.slane %v471, 5
  %v857 = vrot.slane %v856, 4
  %v858 = vrot.slane %v599, 5
  %v859 = vrot.slane %v858, 4
  %v860 = vrot.slane %v472, 5
  %v861 = vrot.slane %v860, 4
  %v862 = vrot.slane %v600, 5
  %v863 = vrot.slane %v862, 4
  %v864 = vrot.slane %v473, 5
  %v865 = vrot.slane %v864, 4
  %v866 = vrot.slane %v601, 5
  %v867 = vrot.slane %v866, 4
  %v868 = vrot.slane %v474, 5
  %v869 = vrot.slane %v868, 4
  %v870 = vrot.slane %v602, 5
  %v871 = vrot.slane %v870, 4
  %v872 = vrot.slane %v475, 5
  %v873 = vrot.slane %v872, 4
  %v874 = vrot.slane %v603, 5
  %v875 = vrot.slane %v874, 4
  %v876 = vrot.slane %v476, 5
  %v877 = vrot.slane %v876, 4
  %v878 = vrot.slane %v604, 5
  %v879 = vrot.slane %v878, 4
  %v880 = vrot.slane %v477, 5
  %v881 = vrot.slane %v880, 4
  %v882 = vrot.slane %v605, 5
  %v883 = vrot.slane %v882, 4
  %v884 = vrot.slane %v478, 5
  %v885 = vrot.slane %v884, 4
  %v886 = vrot.slane %v606, 5
  %v887 = vrot.slane %v886, 4
  %v888 = vrot.slane %v479, 5
  %v889 = vrot.slane %v888, 4
  %v890 = vrot.slane %v607, 5
  %v891 = vrot.slane %v890, 4
  %v892 = vrot.slane %v480, 5
  %v893 = vrot.slane %v892, 4
  %v894 = vrot.slane %v608, 5
  %v895 = vrot.slane %v894, 4
  %v896 = vrot.slane %v481, 5
  %v897 = vrot.slane %v896, 4
  %v898 = vrot.slane %v609, 5
  %v899 = vrot.slane %v898, 4
  %v900 = vrot.slane %v482, 5
  %v901 = vrot.slane %v900, 4
  %v902 = vrot.slane %v610, 5
  %v903 = vrot.slane %v902, 4
  %v904 = vrot.slane %v483, 5
  %v905 = vrot.slane %v904, 4
  %v906 = vrot.slane %v611, 5
  %v907 = vrot.slane %v906, 4
  %v908 = vrot.slane %v484, 5
  %v909 = vrot.slane %v908, 4
  %v910 = vrot.slane %v612, 5
  %v911 = vrot.slane %v910, 4
  %v912 = vrot.slane %v485, 5
  %v913 = vrot.slane %v912, 4
  %v914 = vrot.slane %v613, 5
  %v915 = vrot.slane %v914, 4
  %v916 = vrot.slane %v486, 5
  %v917 = vrot.slane %v916, 4
  %v918 = vrot.slane %v614, 5
  %v919 = vrot.slane %v918, 4
  %v920 = vrot.slane %v487, 5
  %v921 = vrot.slane %v920, 4
  %v922 = vrot.slane %v615, 5
  %v923 = vrot.slane %v922, 4
  %v924 = vrot.slane %v488, 5
  %v925 = vrot.slane %v924, 4
  %v926 = vrot.slane %v616, 5
  %v927 = vrot.slane %v926, 4
  %v928 = vrot.slane %v489, 5
  %v929 = vrot.slane %v928, 4
  %v930 = vrot.slane %v617, 5
  %v931 = vrot.slane %v930, 4
  %v932 = vrot.slane %v490, 5
  %v933 = vrot.slane %v932, 4
  %v934 = vrot.slane %v618, 5
  %v935 = vrot.slane %v934, 4
  %v936 = vrot.slane %v491, 5
  %v937 = vrot.slane %v936, 4
  %v938 = vrot.slane %v619, 5
  %v939 = vrot.slane %v938, 4
  %v1068 = vmax.f32 %v428, %v685
  %v1069 = vmax.f32 %v556, %v687
  %v1070 = vmax.f32 %v429, %v689
  %v1071 = vmax.f32 %v557, %v691
  %v1072 = vmax.f32 %v430, %v693
  %v1073 = vmax.f32 %v558, %v695
  %v1074 = vmax.f32 %v431, %v697
  %v1075 = vmax.f32 %v559, %v699
  %v1076 = vmax.f32 %v432, %v701
  %v1077 = vmax.f32 %v560, %v703
  %v1078 = vmax.f32 %v433, %v705
  %v1079 = vmax.f32 %v561, %v707
  %v1080 = vmax.f32 %v434, %v709
  %v1081 = vmax.f32 %v562, %v711
  %v1082 = vmax.f32 %v435, %v713
  %v1083 = vmax.f32 %v563, %v715
  %v1084 = vmax.f32 %v436, %v717
  %v1085 = vmax.f32 %v564, %v719
  %v1086 = vmax.f32 %v437, %v721
  %v1087 = vmax.f32 %v565, %v723
  %v1088 = vmax.f32 %v438, %v725
  %v1089 = vmax.f32 %v566, %v727
  %v1090 = vmax.f32 %v439, %v729
  %v1091 = vmax.f32 %v567, %v731
  %v1092 = vmax.f32 %v440, %v733
  %v1093 = vmax.f32 %v568, %v735
  %v1094 = vmax.f32 %v441, %v737
  %v1095 = vmax.f32 %v569, %v739
  %v1096 = vmax.f32 %v442, %v741
  %v1097 = vmax.f32 %v570, %v743
  %v1098 = vmax.f32 %v443, %v745
  %v1099 = vmax.f32 %v571, %v747
  %v1100 = vmax.f32 %v444, %v749
  %v1101 = vmax.f32 %v572, %v751
  %v1102 = vmax.f32 %v445, %v753
  %v1103 = vmax.f32 %v573, %v755
  %v1104 = vmax.f32 %v446, %v757
  %v1105 = vmax.f32 %v574, %v759
  %v1106 = vmax.f32 %v447, %v761
  %v1107 = vmax.f32 %v575, %v763
  %v1108 = vmax.f32 %v448, %v765
  %v1109 = vmax.f32 %v576, %v767
  %v1110 = vmax.f32 %v449, %v769
  %v1111 = vmax.f32 %v577, %v771
  %v1112 = vmax.f32 %v450, %v773
  %v1113 = vmax.f32 %v578, %v775
  %v1114 = vmax.f32 %v451, %v777
  %v1115 = vmax.f32 %v579, %v779
  %v1116 = vmax.f32 %v452, %v781
  %v1117 = vmax.f32 %v580, %v783
  %v1118 = vmax.f32 %v453, %v785
  %v1119 = vmax.f32 %v581, %v787
  %v1120 = vmax.f32 %v454, %v789
  %v1121 = vmax.f32 %v582, %v791
  %v1122 = vmax.f32 %v455, %v793
  %v1123 = vmax.f32 %v583, %v795
  %v1124 = vmax.f32 %v456, %v797
  %v1125 = vmax.f32 %v584, %v799
  %v1126 = vmax.f32 %v457, %v801
  %v1127 = vmax.f32 %v585, %v803
  %v1128 = vmax.f32 %v458, %v805
  %v1129 = vmax.f32 %v586, %v807
  %v1130 = vmax.f32 %v459, %v809
  %v1131 = vmax.f32 %v587, %v811
  %v1132 = vmax.f32 %v460, %v813
  %v1133 = vmax.f32 %v588, %v815
  %v1134 = vmax.f32 %v461, %v817
  %v1135 = vmax.f32 %v589, %v819
  %v1136 = vmax.f32 %v462, %v821
  %v1137 = vmax.f32 %v590, %v823
  %v1138 = vmax.f32 %v463, %v825
  %v1139 = vmax.f32 %v591, %v827
  %v1140 = vmax.f32 %v464, %v829
  %v1141 = vmax.f32 %v592, %v831
  %v1142 = vmax.f32 %v465, %v833
  %v1143 = vmax.f32 %v593, %v835
  %v1144 = vmax.f32 %v466, %v837
  %v1145 = vmax.f32 %v594, %v839
  %v1146 = vmax.f32 %v467, %v841
  %v1147 = vmax.f32 %v595, %v843
  %v1148 = vmax.f32 %v468, %v845
  %v1149 = vmax.f32 %v596, %v847
  %v1150 = vmax.f32 %v469, %v849
  %v1151 = vmax.f32 %v597, %v851
  %v1152 = vmax.f32 %v470, %v853
  %v1153 = vmax.f32 %v598, %v855
  %v1154 = vmax.f32 %v471, %v857
  %v1155 = vmax.f32 %v599, %v859
  %v1156 = vmax.f32 %v472, %v861
  %v1157 = vmax.f32 %v600, %v863
  %v1158 = vmax.f32 %v473, %v865
  %v1159 = vmax.f32 %v601, %v867
  %v1160 = vmax.f32 %v474, %v869
  %v1161 = vmax.f32 %v602, %v871
  %v1162 = vmax.f32 %v475, %v873
  %v1163 = vmax.f32 %v603, %v875
  %v1164 = vmax.f32 %v476, %v877
  %v1165 = vmax.f32 %v604, %v879
  %v1166 = vmax.f32 %v477, %v881
  %v1167 = vmax.f32 %v605, %v883
  %v1168 = vmax.f32 %v478, %v885
  %v1169 = vmax.f32 %v606, %v887
  %v1170 = vmax.f32 %v479, %v889
  %v1171 = vmax.f32 %v607, %v891
  %v1172 = vmax.f32 %v480, %v893
  %v1173 = vmax.f32 %v608, %v895
  %v1174 = vmax.f32 %v481, %v897
  %v1175 = vmax.f32 %v609, %v899
  %v1176 = vmax.f32 %v482, %v901
  %v1177 = vmax.f32 %v610, %v903
  %v1178 = vmax.f32 %v483, %v905
  %v1179 = vmax.f32 %v611, %v907
  %v1180 = vmax.f32 %v484, %v909
  %v1181 = vmax.f32 %v612, %v911
  %v1182 = vmax.f32 %v485, %v913
  %v1183 = vmax.f32 %v613, %v915
  %v1184 = vmax.f32 %v486, %v917
  %v1185 = vmax.f32 %v614, %v919
  %v1186 = vmax.f32 %v487, %v921
  %v1187 = vmax.f32 %v615, %v923
  %v1188 = vmax.f32 %v488, %v925
  %v1189 = vmax.f32 %v616, %v927
  %v1190 = vmax.f32 %v489, %v929
  %v1191 = vmax.f32 %v617, %v931
  %v1192 = vmax.f32 %v490, %v933
  %v1193 = vmax.f32 %v618, %v935
  %v1194 = vmax.f32 %v491, %v937
  %v1195 = vmax.f32 %v619, %v939
  %v1324 = vrot.slane %v1068, 6
  %v1325 = vrot.slane %v1324, 4
  %v1326 = vrot.slane %v1069, 6
  %v1327 = vrot.slane %v1326, 4
  %v1328 = vrot.slane %v1070, 6
  %v1329 = vrot.slane %v1328, 4
  %v1330 = vrot.slane %v1071, 6
  %v1331 = vrot.slane %v1330, 4
  %v1332 = vrot.slane %v1072, 6
  %v1333 = vrot.slane %v1332, 4
  %v1334 = vrot.slane %v1073, 6
  %v1335 = vrot.slane %v1334, 4
  %v1336 = vrot.slane %v1074, 6
  %v1337 = vrot.slane %v1336, 4
  %v1338 = vrot.slane %v1075, 6
  %v1339 = vrot.slane %v1338, 4
  %v1340 = vrot.slane %v1076, 6
  %v1341 = vrot.slane %v1340, 4
  %v1342 = vrot.slane %v1077, 6
  %v1343 = vrot.slane %v1342, 4
  %v1344 = vrot.slane %v1078, 6
  %v1345 = vrot.slane %v1344, 4
  %v1346 = vrot.slane %v1079, 6
  %v1347 = vrot.slane %v1346, 4
  %v1348 = vrot.slane %v1080, 6
  %v1349 = vrot.slane %v1348, 4
  %v1350 = vrot.slane %v1081, 6
  %v1351 = vrot.slane %v1350, 4
  %v1352 = vrot.slane %v1082, 6
  %v1353 = vrot.slane %v1352, 4
  %v1354 = vrot.slane %v1083, 6
  %v1355 = vrot.slane %v1354, 4
  %v1356 = vrot.slane %v1084, 6
  %v1357 = vrot.slane %v1356, 4
  %v1358 = vrot.slane %v1085, 6
  %v1359 = vrot.slane %v1358, 4
  %v1360 = vrot.slane %v1086, 6
  %v1361 = vrot.slane %v1360, 4
  %v1362 = vrot.slane %v1087, 6
  %v1363 = vrot.slane %v1362, 4
  %v1364 = vrot.slane %v1088, 6
  %v1365 = vrot.slane %v1364, 4
  %v1366 = vrot.slane %v1089, 6
  %v1367 = vrot.slane %v1366, 4
  %v1368 = vrot.slane %v1090, 6
  %v1369 = vrot.slane %v1368, 4
  %v1370 = vrot.slane %v1091, 6
  %v1371 = vrot.slane %v1370, 4
  %v1372 = vrot.slane %v1092, 6
  %v1373 = vrot.slane %v1372, 4
  %v1374 = vrot.slane %v1093, 6
  %v1375 = vrot.slane %v1374, 4
  %v1376 = vrot.slane %v1094, 6
  %v1377 = vrot.slane %v1376, 4
  %v1378 = vrot.slane %v1095, 6
  %v1379 = vrot.slane %v1378, 4
  %v1380 = vrot.slane %v1096, 6
  %v1381 = vrot.slane %v1380, 4
  %v1382 = vrot.slane %v1097, 6
  %v1383 = vrot.slane %v1382, 4
  %v1384 = vrot.slane %v1098, 6
  %v1385 = vrot.slane %v1384, 4
  %v1386 = vrot.slane %v1099, 6
  %v1387 = vrot.slane %v1386, 4
  %v1388 = vrot.slane %v1100, 6
  %v1389 = vrot.slane %v1388, 4
  %v1390 = vrot.slane %v1101, 6
  %v1391 = vrot.slane %v1390, 4
  %v1392 = vrot.slane %v1102, 6
  %v1393 = vrot.slane %v1392, 4
  %v1394 = vrot.slane %v1103, 6
  %v1395 = vrot.slane %v1394, 4
  %v1396 = vrot.slane %v1104, 6
  %v1397 = vrot.slane %v1396, 4
  %v1398 = vrot.slane %v1105, 6
  %v1399 = vrot.slane %v1398, 4
  %v1400 = vrot.slane %v1106, 6
  %v1401 = vrot.slane %v1400, 4
  %v1402 = vrot.slane %v1107, 6
  %v1403 = vrot.slane %v1402, 4
  %v1404 = vrot.slane %v1108, 6
  %v1405 = vrot.slane %v1404, 4
  %v1406 = vrot.slane %v1109, 6
  %v1407 = vrot.slane %v1406, 4
  %v1408 = vrot.slane %v1110, 6
  %v1409 = vrot.slane %v1408, 4
  %v1410 = vrot.slane %v1111, 6
  %v1411 = vrot.slane %v1410, 4
  %v1412 = vrot.slane %v1112, 6
  %v1413 = vrot.slane %v1412, 4
  %v1414 = vrot.slane %v1113, 6
  %v1415 = vrot.slane %v1414, 4
  %v1416 = vrot.slane %v1114, 6
  %v1417 = vrot.slane %v1416, 4
  %v1418 = vrot.slane %v1115, 6
  %v1419 = vrot.slane %v1418, 4
  %v1420 = vrot.slane %v1116, 6
  %v1421 = vrot.slane %v1420, 4
  %v1422 = vrot.slane %v1117, 6
  %v1423 = vrot.slane %v1422, 4
  %v1424 = vrot.slane %v1118, 6
  %v1425 = vrot.slane %v1424, 4
  %v1426 = vrot.slane %v1119, 6
  %v1427 = vrot.slane %v1426, 4
  %v1428 = vrot.slane %v1120, 6
  %v1429 = vrot.slane %v1428, 4
  %v1430 = vrot.slane %v1121, 6
  %v1431 = vrot.slane %v1430, 4
  %v1432 = vrot.slane %v1122, 6
  %v1433 = vrot.slane %v1432, 4
  %v1434 = vrot.slane %v1123, 6
  %v1435 = vrot.slane %v1434, 4
  %v1436 = vrot.slane %v1124, 6
  %v1437 = vrot.slane %v1436, 4
  %v1438 = vrot.slane %v1125, 6
  %v1439 = vrot.slane %v1438, 4
  %v1440 = vrot.slane %v1126, 6
  %v1441 = vrot.slane %v1440, 4
  %v1442 = vrot.slane %v1127, 6
  %v1443 = vrot.slane %v1442, 4
  %v1444 = vrot.slane %v1128, 6
  %v1445 = vrot.slane %v1444, 4
  %v1446 = vrot.slane %v1129, 6
  %v1447 = vrot.slane %v1446, 4
  %v1448 = vrot.slane %v1130, 6
  %v1449 = vrot.slane %v1448, 4
  %v1450 = vrot.slane %v1131, 6
  %v1451 = vrot.slane %v1450, 4
  %v1452 = vrot.slane %v1132, 6
  %v1453 = vrot.slane %v1452, 4
  %v1454 = vrot.slane %v1133, 6
  %v1455 = vrot.slane %v1454, 4
  %v1456 = vrot.slane %v1134, 6
  %v1457 = vrot.slane %v1456, 4
  %v1458 = vrot.slane %v1135, 6
  %v1459 = vrot.slane %v1458, 4
  %v1460 = vrot.slane %v1136, 6
  %v1461 = vrot.slane %v1460, 4
  %v1462 = vrot.slane %v1137, 6
  %v1463 = vrot.slane %v1462, 4
  %v1464 = vrot.slane %v1138, 6
  %v1465 = vrot.slane %v1464, 4
  %v1466 = vrot.slane %v1139, 6
  %v1467 = vrot.slane %v1466, 4
  %v1468 = vrot.slane %v1140, 6
  %v1469 = vrot.slane %v1468, 4
  %v1470 = vrot.slane %v1141, 6
  %v1471 = vrot.slane %v1470, 4
  %v1472 = vrot.slane %v1142, 6
  %v1473 = vrot.slane %v1472, 4
  %v1474 = vrot.slane %v1143, 6
  %v1475 = vrot.slane %v1474, 4
  %v1476 = vrot.slane %v1144, 6
  %v1477 = vrot.slane %v1476, 4
  %v1478 = vrot.slane %v1145, 6
  %v1479 = vrot.slane %v1478, 4
  %v1480 = vrot.slane %v1146, 6
  %v1481 = vrot.slane %v1480, 4
  %v1482 = vrot.slane %v1147, 6
  %v1483 = vrot.slane %v1482, 4
  %v1484 = vrot.slane %v1148, 6
  %v1485 = vrot.slane %v1484, 4
  %v1486 = vrot.slane %v1149, 6
  %v1487 = vrot.slane %v1486, 4
  %v1488 = vrot.slane %v1150, 6
  %v1489 = vrot.slane %v1488, 4
  %v1490 = vrot.slane %v1151, 6
  %v1491 = vrot.slane %v1490, 4
  %v1492 = vrot.slane %v1152, 6
  %v1493 = vrot.slane %v1492, 4
  %v1494 = vrot.slane %v1153, 6
  %v1495 = vrot.slane %v1494, 4
  %v1496 = vrot.slane %v1154, 6
  %v1497 = vrot.slane %v1496, 4
  %v1498 = vrot.slane %v1155, 6
  %v1499 = vrot.slane %v1498, 4
  %v1500 = vrot.slane %v1156, 6
  %v1501 = vrot.slane %v1500, 4
  %v1502 = vrot.slane %v1157, 6
  %v1503 = vrot.slane %v1502, 4
  %v1504 = vrot.slane %v1158, 6
  %v1505 = vrot.slane %v1504, 4
  %v1506 = vrot.slane %v1159, 6
  %v1507 = vrot.slane %v1506, 4
  %v1508 = vrot.slane %v1160, 6
  %v1509 = vrot.slane %v1508, 4
  %v1510 = vrot.slane %v1161, 6
  %v1511 = vrot.slane %v1510, 4
  %v1512 = vrot.slane %v1162, 6
  %v1513 = vrot.slane %v1512, 4
  %v1514 = vrot.slane %v1163, 6
  %v1515 = vrot.slane %v1514, 4
  %v1516 = vrot.slane %v1164, 6
  %v1517 = vrot.slane %v1516, 4
  %v1518 = vrot.slane %v1165, 6
  %v1519 = vrot.slane %v1518, 4
  %v1520 = vrot.slane %v1166, 6
  %v1521 = vrot.slane %v1520, 4
  %v1522 = vrot.slane %v1167, 6
  %v1523 = vrot.slane %v1522, 4
  %v1524 = vrot.slane %v1168, 6
  %v1525 = vrot.slane %v1524, 4
  %v1526 = vrot.slane %v1169, 6
  %v1527 = vrot.slane %v1526, 4
  %v1528 = vrot.slane %v1170, 6
  %v1529 = vrot.slane %v1528, 4
  %v1530 = vrot.slane %v1171, 6
  %v1531 = vrot.slane %v1530, 4
  %v1532 = vrot.slane %v1172, 6
  %v1533 = vrot.slane %v1532, 4
  %v1534 = vrot.slane %v1173, 6
  %v1535 = vrot.slane %v1534, 4
  %v1536 = vrot.slane %v1174, 6
  %v1537 = vrot.slane %v1536, 4
  %v1538 = vrot.slane %v1175, 6
  %v1539 = vrot.slane %v1538, 4
  %v1540 = vrot.slane %v1176, 6
  %v1541 = vrot.slane %v1540, 4
  %v1542 = vrot.slane %v1177, 6
  %v1543 = vrot.slane %v1542, 4
  %v1544 = vrot.slane %v1178, 6
  %v1545 = vrot.slane %v1544, 4
  %v1546 = vrot.slane %v1179, 6
  %v1547 = vrot.slane %v1546, 4
  %v1548 = vrot.slane %v1180, 6
  %v1549 = vrot.slane %v1548, 4
  %v1550 = vrot.slane %v1181, 6
  %v1551 = vrot.slane %v1550, 4
  %v1552 = vrot.slane %v1182, 6
  %v1553 = vrot.slane %v1552, 4
  %v1554 = vrot.slane %v1183, 6
  %v1555 = vrot.slane %v1554, 4
  %v1556 = vrot.slane %v1184, 6
  %v1557 = vrot.slane %v1556, 4
  %v1558 = vrot.slane %v1185, 6
  %v1559 = vrot.slane %v1558, 4
  %v1560 = vrot.slane %v1186, 6
  %v1561 = vrot.slane %v1560, 4
  %v1562 = vrot.slane %v1187, 6
  %v1563 = vrot.slane %v1562, 4
  %v1564 = vrot.slane %v1188, 6
  %v1565 = vrot.slane %v1564, 4
  %v1566 = vrot.slane %v1189, 6
  %v1567 = vrot.slane %v1566, 4
  %v1568 = vrot.slane %v1190, 6
  %v1569 = vrot.slane %v1568, 4
  %v1570 = vrot.slane %v1191, 6
  %v1571 = vrot.slane %v1570, 4
  %v1572 = vrot.slane %v1192, 6
  %v1573 = vrot.slane %v1572, 4
  %v1574 = vrot.slane %v1193, 6
  %v1575 = vrot.slane %v1574, 4
  %v1576 = vrot.slane %v1194, 6
  %v1577 = vrot.slane %v1576, 4
  %v1578 = vrot.slane %v1195, 6
  %v1579 = vrot.slane %v1578, 4
  %v1708 = vmax.f32 %v1068, %v1325
  %v1709 = vmax.f32 %v1069, %v1327
  %v1710 = vmax.f32 %v1070, %v1329
  %v1711 = vmax.f32 %v1071, %v1331
  %v1712 = vmax.f32 %v1072, %v1333
  %v1713 = vmax.f32 %v1073, %v1335
  %v1714 = vmax.f32 %v1074, %v1337
  %v1715 = vmax.f32 %v1075, %v1339
  %v1716 = vmax.f32 %v1076, %v1341
  %v1717 = vmax.f32 %v1077, %v1343
  %v1718 = vmax.f32 %v1078, %v1345
  %v1719 = vmax.f32 %v1079, %v1347
  %v1720 = vmax.f32 %v1080, %v1349
  %v1721 = vmax.f32 %v1081, %v1351
  %v1722 = vmax.f32 %v1082, %v1353
  %v1723 = vmax.f32 %v1083, %v1355
  %v1724 = vmax.f32 %v1084, %v1357
  %v1725 = vmax.f32 %v1085, %v1359
  %v1726 = vmax.f32 %v1086, %v1361
  %v1727 = vmax.f32 %v1087, %v1363
  %v1728 = vmax.f32 %v1088, %v1365
  %v1729 = vmax.f32 %v1089, %v1367
  %v1730 = vmax.f32 %v1090, %v1369
  %v1731 = vmax.f32 %v1091, %v1371
  %v1732 = vmax.f32 %v1092, %v1373
  %v1733 = vmax.f32 %v1093, %v1375
  %v1734 = vmax.f32 %v1094, %v1377
  %v1735 = vmax.f32 %v1095, %v1379
  %v1736 = vmax.f32 %v1096, %v1381
  %v1737 = vmax.f32 %v1097, %v1383
  %v1738 = vmax.f32 %v1098, %v1385
  %v1739 = vmax.f32 %v1099, %v1387
  %v1740 = vmax.f32 %v1100, %v1389
  %v1741 = vmax.f32 %v1101, %v1391
  %v1742 = vmax.f32 %v1102, %v1393
  %v1743 = vmax.f32 %v1103, %v1395
  %v1744 = vmax.f32 %v1104, %v1397
  %v1745 = vmax.f32 %v1105, %v1399
  %v1746 = vmax.f32 %v1106, %v1401
  %v1747 = vmax.f32 %v1107, %v1403
  %v1748 = vmax.f32 %v1108, %v1405
  %v1749 = vmax.f32 %v1109, %v1407
  %v1750 = vmax.f32 %v1110, %v1409
  %v1751 = vmax.f32 %v1111, %v1411
  %v1752 = vmax.f32 %v1112, %v1413
  %v1753 = vmax.f32 %v1113, %v1415
  %v1754 = vmax.f32 %v1114, %v1417
  %v1755 = vmax.f32 %v1115, %v1419
  %v1756 = vmax.f32 %v1116, %v1421
  %v1757 = vmax.f32 %v1117, %v1423
  %v1758 = vmax.f32 %v1118, %v1425
  %v1759 = vmax.f32 %v1119, %v1427
  %v1760 = vmax.f32 %v1120, %v1429
  %v1761 = vmax.f32 %v1121, %v1431
  %v1762 = vmax.f32 %v1122, %v1433
  %v1763 = vmax.f32 %v1123, %v1435
  %v1764 = vmax.f32 %v1124, %v1437
  %v1765 = vmax.f32 %v1125, %v1439
  %v1766 = vmax.f32 %v1126, %v1441
  %v1767 = vmax.f32 %v1127, %v1443
  %v1768 = vmax.f32 %v1128, %v1445
  %v1769 = vmax.f32 %v1129, %v1447
  %v1770 = vmax.f32 %v1130, %v1449
  %v1771 = vmax.f32 %v1131, %v1451
  %v1772 = vmax.f32 %v1132, %v1453
  %v1773 = vmax.f32 %v1133, %v1455
  %v1774 = vmax.f32 %v1134, %v1457
  %v1775 = vmax.f32 %v1135, %v1459
  %v1776 = vmax.f32 %v1136, %v1461
  %v1777 = vmax.f32 %v1137, %v1463
  %v1778 = vmax.f32 %v1138, %v1465
  %v1779 = vmax.f32 %v1139, %v1467
  %v1780 = vmax.f32 %v1140, %v1469
  %v1781 = vmax.f32 %v1141, %v1471
  %v1782 = vmax.f32 %v1142, %v1473
  %v1783 = vmax.f32 %v1143, %v1475
  %v1784 = vmax.f32 %v1144, %v1477
  %v1785 = vmax.f32 %v1145, %v1479
  %v1786 = vmax.f32 %v1146, %v1481
  %v1787 = vmax.f32 %v1147, %v1483
  %v1788 = vmax.f32 %v1148, %v1485
  %v1789 = vmax.f32 %v1149, %v1487
  %v1790 = vmax.f32 %v1150, %v1489
  %v1791 = vmax.f32 %v1151, %v1491
  %v1792 = vmax.f32 %v1152, %v1493
  %v1793 = vmax.f32 %v1153, %v1495
  %v1794 = vmax.f32 %v1154, %v1497
  %v1795 = vmax.f32 %v1155, %v1499
  %v1796 = vmax.f32 %v1156, %v1501
  %v1797 = vmax.f32 %v1157, %v1503
  %v1798 = vmax.f32 %v1158, %v1505
  %v1799 = vmax.f32 %v1159, %v1507
  %v1800 = vmax.f32 %v1160, %v1509
  %v1801 = vmax.f32 %v1161, %v1511
  %v1802 = vmax.f32 %v1162, %v1513
  %v1803 = vmax.f32 %v1163, %v1515
  %v1804 = vmax.f32 %v1164, %v1517
  %v1805 = vmax.f32 %v1165, %v1519
  %v1806 = vmax.f32 %v1166, %v1521
  %v1807 = vmax.f32 %v1167, %v1523
  %v1808 = vmax.f32 %v1168, %v1525
  %v1809 = vmax.f32 %v1169, %v1527
  %v1810 = vmax.f32 %v1170, %v1529
  %v1811 = vmax.f32 %v1171, %v1531
  %v1812 = vmax.f32 %v1172, %v1533
  %v1813 = vmax.f32 %v1173, %v1535
  %v1814 = vmax.f32 %v1174, %v1537
  %v1815 = vmax.f32 %v1175, %v1539
  %v1816 = vmax.f32 %v1176, %v1541
  %v1817 = vmax.f32 %v1177, %v1543
  %v1818 = vmax.f32 %v1178, %v1545
  %v1819 = vmax.f32 %v1179, %v1547
  %v1820 = vmax.f32 %v1180, %v1549
  %v1821 = vmax.f32 %v1181, %v1551
  %v1822 = vmax.f32 %v1182, %v1553
  %v1823 = vmax.f32 %v1183, %v1555
  %v1824 = vmax.f32 %v1184, %v1557
  %v1825 = vmax.f32 %v1185, %v1559
  %v1826 = vmax.f32 %v1186, %v1561
  %v1827 = vmax.f32 %v1187, %v1563
  %v1828 = vmax.f32 %v1188, %v1565
  %v1829 = vmax.f32 %v1189, %v1567
  %v1830 = vmax.f32 %v1190, %v1569
  %v1831 = vmax.f32 %v1191, %v1571
  %v1832 = vmax.f32 %v1192, %v1573
  %v1833 = vmax.f32 %v1193, %v1575
  %v1834 = vmax.f32 %v1194, %v1577
  %v1835 = vmax.f32 %v1195, %v1579
  %vm1836 = vcmask 289792
  %1837 = vst.msk [vmem:[#allocation2] sm:$0xf] %vm1836, 0.0
  %1838 = vst.msk [vmem:[#allocation2 + $0x40] sm:$0xf] %vm1836, 0.0
  %s1839 = scalar_lea.vmem [#allocation2], 60
  %1840 = vst.msk [vmem:[%s1839] sm:$0xf] %vm1836, 0.0
  %1841 = vst.msk [vmem:[%s1839 + $0x40] sm:$0xf] %vm1836, 0.0
  %vm1842 = vcmask 286720
  %1843 = vst.msk [vmem:[#allocation2] sm:$0x1] %vm1842, 0.0
  %1844 = vst.msk [vmem:[#allocation2 + $0x4] sm:$0x1] %vm1842, 0.0
  %1845 = vst.msk [vmem:[#allocation2 + $0x8] sm:$0x1] %vm1842, 0.0
  %1846 = vst.msk [vmem:[#allocation2 + $0xc] sm:$0x1] %vm1842, 0.0
  %1847 = vst.msk [vmem:[#allocation2 + $0x10] sm:$0x1] %vm1842, 0.0
  %1848 = vst.msk [vmem:[#allocation2 + $0x14] sm:$0x1] %vm1842, 0.0
  %1849 = vst.msk [vmem:[#allocation2 + $0x18] sm:$0x1] %vm1842, 0.0
  %1850 = vst.msk [vmem:[#allocation2 + $0x1c] sm:$0x1] %vm1842, 0.0
  %1851 = vst.msk [vmem:[#allocation2 + $0x20] sm:$0x1] %vm1842, 0.0
  %1852 = vst.msk [vmem:[#allocation2 + $0x24] sm:$0x1] %vm1842, 0.0
  %1853 = vst.msk [vmem:[#allocation2 + $0x28] sm:$0x1] %vm1842, 0.0
  %1854 = vst.msk [vmem:[#allocation2 + $0x2c] sm:$0x1] %vm1842, 0.0
  %1855 = vst.msk [vmem:[#allocation2 + $0x30] sm:$0x1] %vm1842, 0.0
  %1856 = vst.msk [vmem:[#allocation2 + $0x34] sm:$0x1] %vm1842, 0.0
  %1857 = vst.msk [vmem:[#allocation2 + $0x38] sm:$0x1] %vm1842, 0.0
  %1858 = vst.msk [vmem:[#allocation2 + $0x3c] sm:$0x1] %vm1842, 0.0
  %1859 = vst.msk [vmem:[#allocation2 + $0x40] sm:$0x1] %vm1842, 0.0
  %1860 = vst.msk [vmem:[#allocation2 + $0x44] sm:$0x1] %vm1842, 0.0
  %1861 = vst.msk [vmem:[#allocation2 + $0x48] sm:$0x1] %vm1842, 0.0
  %1862 = vst.msk [vmem:[#allocation2 + $0x4c] sm:$0x1] %vm1842, 0.0
  %1863 = vst.msk [vmem:[#allocation2 + $0x50] sm:$0x1] %vm1842, 0.0
  %1864 = vst.msk [vmem:[#allocation2 + $0x54] sm:$0x1] %vm1842, 0.0
  %1865 = vst.msk [vmem:[#allocation2 + $0x58] sm:$0x1] %vm1842, 0.0
  %1866 = vst.msk [vmem:[#allocation2 + $0x5c] sm:$0x1] %vm1842, 0.0
  %1867 = vst.msk [vmem:[#allocation2 + $0x60] sm:$0x1] %vm1842, 0.0
  %1868 = vst.msk [vmem:[#allocation2 + $0x64] sm:$0x1] %vm1842, 0.0
  %1869 = vst.msk [vmem:[#allocation2 + $0x68] sm:$0x1] %vm1842, 0.0
  %1870 = vst.msk [vmem:[#allocation2 + $0x6c] sm:$0x1] %vm1842, 0.0
  %1871 = vst.msk [vmem:[#allocation2 + $0x70] sm:$0x1] %vm1842, 0.0
  %1872 = vst.msk [vmem:[#allocation2 + $0x74] sm:$0x1] %vm1842, 0.0
  %1873 = vst.msk [vmem:[#allocation2 + $0x78] sm:$0x1] %vm1842, 0.0
  %1874 = vst.msk [vmem:[#allocation2 + $0x7c] sm:$0x1] %vm1842, 0.0
  %1875 = vst.msk [vmem:[#allocation2 + $0x3] sm:$0x1] %vm1842, 0.0
  %1876 = vst.msk [vmem:[#allocation2 + $0x7] sm:$0x1] %vm1842, 0.0
  %1877 = vst.msk [vmem:[#allocation2 + $0xb] sm:$0x1] %vm1842, 0.0
  %1878 = vst.msk [vmem:[#allocation2 + $0xf] sm:$0x1] %vm1842, 0.0
  %1879 = vst.msk [vmem:[#allocation2 + $0x13] sm:$0x1] %vm1842, 0.0
  %1880 = vst.msk [vmem:[#allocation2 + $0x17] sm:$0x1] %vm1842, 0.0
  %1881 = vst.msk [vmem:[#allocation2 + $0x1b] sm:$0x1] %vm1842, 0.0
  %1882 = vst.msk [vmem:[#allocation2 + $0x1f] sm:$0x1] %vm1842, 0.0
  %1883 = vst.msk [vmem:[#allocation2 + $0x23] sm:$0x1] %vm1842, 0.0
  %1884 = vst.msk [vmem:[#allocation2 + $0x27] sm:$0x1] %vm1842, 0.0
  %1885 = vst.msk [vmem:[#allocation2 + $0x2b] sm:$0x1] %vm1842, 0.0
  %1886 = vst.msk [vmem:[#allocation2 + $0x2f] sm:$0x1] %vm1842, 0.0
  %1887 = vst.msk [vmem:[#allocation2 + $0x33] sm:$0x1] %vm1842, 0.0
  %1888 = vst.msk [vmem:[#allocation2 + $0x37] sm:$0x1] %vm1842, 0.0
  %1889 = vst.msk [vmem:[#allocation2 + $0x3b] sm:$0x1] %vm1842, 0.0
  %1890 = vst.msk [vmem:[#allocation2 + $0x3f] sm:$0x1] %vm1842, 0.0
  %1891 = vst.msk [vmem:[#allocation2 + $0x43] sm:$0x1] %vm1842, 0.0
  %1892 = vst.msk [vmem:[#allocation2 + $0x47] sm:$0x1] %vm1842, 0.0
  %1893 = vst.msk [vmem:[#allocation2 + $0x4b] sm:$0x1] %vm1842, 0.0
  %1894 = vst.msk [vmem:[#allocation2 + $0x4f] sm:$0x1] %vm1842, 0.0
  %1895 = vst.msk [vmem:[#allocation2 + $0x53] sm:$0x1] %vm1842, 0.0
  %1896 = vst.msk [vmem:[#allocation2 + $0x57] sm:$0x1] %vm1842, 0.0
  %1897 = vst.msk [vmem:[#allocation2 + $0x5b] sm:$0x1] %vm1842, 0.0
  %1898 = vst.msk [vmem:[#allocation2 + $0x5f] sm:$0x1] %vm1842, 0.0
  %1899 = vst.msk [vmem:[#allocation2 + $0x63] sm:$0x1] %vm1842, 0.0
  %1900 = vst.msk [vmem:[#allocation2 + $0x67] sm:$0x1] %vm1842, 0.0
  %1901 = vst.msk [vmem:[#allocation2 + $0x6b] sm:$0x1] %vm1842, 0.0
  %1902 = vst.msk [vmem:[#allocation2 + $0x6f] sm:$0x1] %vm1842, 0.0
  %1903 = vst.msk [vmem:[#allocation2 + $0x73] sm:$0x1] %vm1842, 0.0
  %1904 = vst.msk [vmem:[#allocation2 + $0x77] sm:$0x1] %vm1842, 0.0
  %1905 = vst.msk [vmem:[#allocation2 + $0x7b] sm:$0x1] %vm1842, 0.0
  %1906 = vst.msk [vmem:[#allocation2 + $0x7f] sm:$0x1] %vm1842, 0.0
  %v1997 = vlaneseq
  %v1998 = vshrl.u32 %v1997, 7
  %v1999 = vsub.s32 0, %v1998
  %v2000 = vrot.slane %v1708, %v1999
  %v2001 = vlaneseq
  %v2002 = vshrl.u32 %v2001, 7
  %v2003 = vsub.s32 0, %v2002
  %v2004 = vrot.slane %v1709, %v2003
  %v2005 = vlaneseq
  %v2006 = vshrl.u32 %v2005, 7
  %v2007 = vsub.s32 0, %v2006
  %v2008 = vrot.slane %v1710, %v2007
  %v2009 = vlaneseq
  %v2010 = vshrl.u32 %v2009, 7
  %v2011 = vsub.s32 0, %v2010
  %v2012 = vrot.slane %v1712, %v2011
  %v2013 = vlaneseq
  %v2014 = vshrl.u32 %v2013, 7
  %v2015 = vsub.s32 0, %v2014
  %v2016 = vrot.slane %v1713, %v2015
  %v2017 = vlaneseq
  %v2018 = vshrl.u32 %v2017, 7
  %v2019 = vsub.s32 0, %v2018
  %v2020 = vrot.slane %v1714, %v2019
  %v2021 = vlaneseq
  %v2022 = vshrl.u32 %v2021, 7
  %v2023 = vsub.s32 0, %v2022
  %v2024 = vrot.slane %v1716, %v2023
  %v2025 = vlaneseq
  %v2026 = vshrl.u32 %v2025, 7
  %v2027 = vsub.s32 0, %v2026
  %v2028 = vrot.slane %v1717, %v2027
  %v2029 = vlaneseq
  %v2030 = vshrl.u32 %v2029, 7
  %v2031 = vsub.s32 0, %v2030
  %v2032 = vrot.slane %v1718, %v2031
  %v2033 = vlaneseq
  %v2034 = vshrl.u32 %v2033, 7
  %v2035 = vsub.s32 0, %v2034
  %v2036 = vrot.slane %v1720, %v2035
  %v2037 = vlaneseq
  %v2038 = vshrl.u32 %v2037, 7
  %v2039 = vsub.s32 0, %v2038
  %v2040 = vrot.slane %v1721, %v2039
  %v2041 = vlaneseq
  %v2042 = vshrl.u32 %v2041, 7
  %v2043 = vsub.s32 0, %v2042
  %v2044 = vrot.slane %v1722, %v2043
  %v2045 = vlaneseq
  %v2046 = vshrl.u32 %v2045, 7
  %v2047 = vsub.s32 0, %v2046
  %v2048 = vrot.slane %v1724, %v2047
  %v2049 = vlaneseq
  %v2050 = vshrl.u32 %v2049, 7
  %v2051 = vsub.s32 0, %v2050
  %v2052 = vrot.slane %v1725, %v2051
  %v2053 = vlaneseq
  %v2054 = vshrl.u32 %v2053, 7
  %v2055 = vsub.s32 0, %v2054
  %v2056 = vrot.slane %v1726, %v2055
  %v2057 = vlaneseq
  %v2058 = vshrl.u32 %v2057, 7
  %v2059 = vsub.s32 0, %v2058
  %v2060 = vrot.slane %v1728, %v2059
  %v2061 = vlaneseq
  %v2062 = vshrl.u32 %v2061, 7
  %v2063 = vsub.s32 0, %v2062
  %v2064 = vrot.slane %v1729, %v2063
  %v2065 = vlaneseq
  %v2066 = vshrl.u32 %v2065, 7
  %v2067 = vsub.s32 0, %v2066
  %v2068 = vrot.slane %v1730, %v2067
  %v2069 = vlaneseq
  %v2070 = vshrl.u32 %v2069, 7
  %v2071 = vsub.s32 0, %v2070
  %v2072 = vrot.slane %v1732, %v2071
  %v2073 = vlaneseq
  %v2074 = vshrl.u32 %v2073, 7
  %v2075 = vsub.s32 0, %v2074
  %v2076 = vrot.slane %v1733, %v2075
  %v2077 = vlaneseq
  %v2078 = vshrl.u32 %v2077, 7
  %v2079 = vsub.s32 0, %v2078
  %v2080 = vrot.slane %v1734, %v2079
  %v2081 = vlaneseq
  %v2082 = vshrl.u32 %v2081, 7
  %v2083 = vsub.s32 0, %v2082
  %v2084 = vrot.slane %v1736, %v2083
  %v2085 = vlaneseq
  %v2086 = vshrl.u32 %v2085, 7
  %v2087 = vsub.s32 0, %v2086
  %v2088 = vrot.slane %v1737, %v2087
  %v2089 = vlaneseq
  %v2090 = vshrl.u32 %v2089, 7
  %v2091 = vsub.s32 0, %v2090
  %v2092 = vrot.slane %v1738, %v2091
  %v2093 = vlaneseq
  %v2094 = vshrl.u32 %v2093, 7
  %v2095 = vsub.s32 0, %v2094
  %v2096 = vrot.slane %v1740, %v2095
  %v2097 = vlaneseq
  %v2098 = vshrl.u32 %v2097, 7
  %v2099 = vsub.s32 0, %v2098
  %v2100 = vrot.slane %v1741, %v2099
  %v2101 = vlaneseq
  %v2102 = vshrl.u32 %v2101, 7
  %v2103 = vsub.s32 0, %v2102
  %v2104 = vrot.slane %v1742, %v2103
  %v2105 = vlaneseq
  %v2106 = vshrl.u32 %v2105, 7
  %v2107 = vsub.s32 0, %v2106
  %v2108 = vrot.slane %v1744, %v2107
  %v2109 = vlaneseq
  %v2110 = vshrl.u32 %v2109, 7
  %v2111 = vsub.s32 0, %v2110
  %v2112 = vrot.slane %v1745, %v2111
  %v2113 = vlaneseq
  %v2114 = vshrl.u32 %v2113, 7
  %v2115 = vsub.s32 0, %v2114
  %v2116 = vrot.slane %v1746, %v2115
  %v2117 = vlaneseq
  %v2118 = vshrl.u32 %v2117, 7
  %v2119 = vsub.s32 0, %v2118
  %v2120 = vrot.slane %v1748, %v2119
  %v2121 = vlaneseq
  %v2122 = vshrl.u32 %v2121, 7
  %v2123 = vsub.s32 0, %v2122
  %v2124 = vrot.slane %v1749, %v2123
  %v2125 = vlaneseq
  %v2126 = vshrl.u32 %v2125, 7
  %v2127 = vsub.s32 0, %v2126
  %v2128 = vrot.slane %v1750, %v2127
  %v2129 = vlaneseq
  %v2130 = vshrl.u32 %v2129, 7
  %v2131 = vsub.s32 0, %v2130
  %v2132 = vrot.slane %v1752, %v2131
  %v2133 = vlaneseq
  %v2134 = vshrl.u32 %v2133, 7
  %v2135 = vsub.s32 0, %v2134
  %v2136 = vrot.slane %v1753, %v2135
  %v2137 = vlaneseq
  %v2138 = vshrl.u32 %v2137, 7
  %v2139 = vsub.s32 0, %v2138
  %v2140 = vrot.slane %v1754, %v2139
  %v2141 = vlaneseq
  %v2142 = vshrl.u32 %v2141, 7
  %v2143 = vsub.s32 0, %v2142
  %v2144 = vrot.slane %v1756, %v2143
  %v2145 = vlaneseq
  %v2146 = vshrl.u32 %v2145, 7
  %v2147 = vsub.s32 0, %v2146
  %v2148 = vrot.slane %v1757, %v2147
  %v2149 = vlaneseq
  %v2150 = vshrl.u32 %v2149, 7
  %v2151 = vsub.s32 0, %v2150
  %v2152 = vrot.slane %v1758, %v2151
  %v2153 = vlaneseq
  %v2154 = vshrl.u32 %v2153, 7
  %v2155 = vsub.s32 0, %v2154
  %v2156 = vrot.slane %v1760, %v2155
  %v2157 = vlaneseq
  %v2158 = vshrl.u32 %v2157, 7
  %v2159 = vsub.s32 0, %v2158
  %v2160 = vrot.slane %v1761, %v2159
  %v2161 = vlaneseq
  %v2162 = vshrl.u32 %v2161, 7
  %v2163 = vsub.s32 0, %v2162
  %v2164 = vrot.slane %v1762, %v2163
  %v2165 = vlaneseq
  %v2166 = vshrl.u32 %v2165, 7
  %v2167 = vsub.s32 0, %v2166
  %v2168 = vrot.slane %v1764, %v2167
  %v2169 = vlaneseq
  %v2170 = vshrl.u32 %v2169, 7
  %v2171 = vsub.s32 0, %v2170
  %v2172 = vrot.slane %v1765, %v2171
  %v2173 = vlaneseq
  %v2174 = vshrl.u32 %v2173, 7
  %v2175 = vsub.s32 0, %v2174
  %v2176 = vrot.slane %v1766, %v2175
  %v2177 = vlaneseq
  %v2178 = vshrl.u32 %v2177, 7
  %v2179 = vsub.s32 0, %v2178
  %v2180 = vrot.slane %v1772, %v2179
  %v2181 = vlaneseq
  %v2182 = vshrl.u32 %v2181, 7
  %v2183 = vsub.s32 0, %v2182
  %v2184 = vrot.slane %v1773, %v2183
  %v2185 = vlaneseq
  %v2186 = vshrl.u32 %v2185, 7
  %v2187 = vsub.s32 0, %v2186
  %v2188 = vrot.slane %v1774, %v2187
  %v2189 = vlaneseq
  %v2190 = vshrl.u32 %v2189, 7
  %v2191 = vsub.s32 0, %v2190
  %v2192 = vrot.slane %v1776, %v2191
  %v2193 = vlaneseq
  %v2194 = vshrl.u32 %v2193, 7
  %v2195 = vsub.s32 0, %v2194
  %v2196 = vrot.slane %v1777, %v2195
  %v2197 = vlaneseq
  %v2198 = vshrl.u32 %v2197, 7
  %v2199 = vsub.s32 0, %v2198
  %v2200 = vrot.slane %v1778, %v2199
  %v2201 = vlaneseq
  %v2202 = vshrl.u32 %v2201, 7
  %v2203 = vsub.s32 0, %v2202
  %v2204 = vrot.slane %v1780, %v2203
  %v2205 = vlaneseq
  %v2206 = vshrl.u32 %v2205, 7
  %v2207 = vsub.s32 0, %v2206
  %v2208 = vrot.slane %v1781, %v2207
  %v2209 = vlaneseq
  %v2210 = vshrl.u32 %v2209, 7
  %v2211 = vsub.s32 0, %v2210
  %v2212 = vrot.slane %v1782, %v2211
  %v2213 = vlaneseq
  %v2214 = vshrl.u32 %v2213, 7
  %v2215 = vsub.s32 0, %v2214
  %v2216 = vrot.slane %v1784, %v2215
  %v2217 = vlaneseq
  %v2218 = vshrl.u32 %v2217, 7
  %v2219 = vsub.s32 0, %v2218
  %v2220 = vrot.slane %v1785, %v2219
  %v2221 = vlaneseq
  %v2222 = vshrl.u32 %v2221, 7
  %v2223 = vsub.s32 0, %v2222
  %v2224 = vrot.slane %v1786, %v2223
  %v2225 = vlaneseq
  %v2226 = vshrl.u32 %v2225, 7
  %v2227 = vsub.s32 0, %v2226
  %v2228 = vrot.slane %v1788, %v2227
  %v2229 = vlaneseq
  %v2230 = vshrl.u32 %v2229, 7
  %v2231 = vsub.s32 0, %v2230
  %v2232 = vrot.slane %v1789, %v2231
  %v2233 = vlaneseq
  %v2234 = vshrl.u32 %v2233, 7
  %v2235 = vsub.s32 0, %v2234
  %v2236 = vrot.slane %v1790, %v2235
  %v2237 = vlaneseq
  %v2238 = vshrl.u32 %v2237, 7
  %v2239 = vsub.s32 0, %v2238
  %v2240 = vrot.slane %v1792, %v2239
  %v2241 = vlaneseq
  %v2242 = vshrl.u32 %v2241, 7
  %v2243 = vsub.s32 0, %v2242
  %v2244 = vrot.slane %v1793, %v2243
  %v2245 = vlaneseq
  %v2246 = vshrl.u32 %v2245, 7
  %v2247 = vsub.s32 0, %v2246
  %v2248 = vrot.slane %v1794, %v2247
  %v2249 = vlaneseq
  %v2250 = vshrl.u32 %v2249, 7
  %v2251 = vsub.s32 0, %v2250
  %v2252 = vrot.slane %v1796, %v2251
  %v2253 = vlaneseq
  %v2254 = vshrl.u32 %v2253, 7
  %v2255 = vsub.s32 0, %v2254
  %v2256 = vrot.slane %v1797, %v2255
  %v2257 = vlaneseq
  %v2258 = vshrl.u32 %v2257, 7
  %v2259 = vsub.s32 0, %v2258
  %v2260 = vrot.slane %v1798, %v2259
  %v2261 = vlaneseq
  %v2262 = vshrl.u32 %v2261, 7
  %v2263 = vsub.s32 0, %v2262
  %v2264 = vrot.slane %v1800, %v2263
  %v2265 = vlaneseq
  %v2266 = vshrl.u32 %v2265, 7
  %v2267 = vsub.s32 0, %v2266
  %v2268 = vrot.slane %v1801, %v2267
  %v2269 = vlaneseq
  %v2270 = vshrl.u32 %v2269, 7
  %v2271 = vsub.s32 0, %v2270
  %v2272 = vrot.slane %v1802, %v2271
  %v2273 = vlaneseq
  %v2274 = vshrl.u32 %v2273, 7
  %v2275 = vsub.s32 0, %v2274
  %v2276 = vrot.slane %v1804, %v2275
  %v2277 = vlaneseq
  %v2278 = vshrl.u32 %v2277, 7
  %v2279 = vsub.s32 0, %v2278
  %v2280 = vrot.slane %v1805, %v2279
  %v2281 = vlaneseq
  %v2282 = vshrl.u32 %v2281, 7
  %v2283 = vsub.s32 0, %v2282
  %v2284 = vrot.slane %v1806, %v2283
  %v2285 = vlaneseq
  %v2286 = vshrl.u32 %v2285, 7
  %v2287 = vsub.s32 0, %v2286
  %v2288 = vrot.slane %v1808, %v2287
  %v2289 = vlaneseq
  %v2290 = vshrl.u32 %v2289, 7
  %v2291 = vsub.s32 0, %v2290
  %v2292 = vrot.slane %v1809, %v2291
  %v2293 = vlaneseq
  %v2294 = vshrl.u32 %v2293, 7
  %v2295 = vsub.s32 0, %v2294
  %v2296 = vrot.slane %v1810, %v2295
  %v2297 = vlaneseq
  %v2298 = vshrl.u32 %v2297, 7
  %v2299 = vsub.s32 0, %v2298
  %v2300 = vrot.slane %v1812, %v2299
  %v2301 = vlaneseq
  %v2302 = vshrl.u32 %v2301, 7
  %v2303 = vsub.s32 0, %v2302
  %v2304 = vrot.slane %v1813, %v2303
  %v2305 = vlaneseq
  %v2306 = vshrl.u32 %v2305, 7
  %v2307 = vsub.s32 0, %v2306
  %v2308 = vrot.slane %v1814, %v2307
  %v2309 = vlaneseq
  %v2310 = vshrl.u32 %v2309, 7
  %v2311 = vsub.s32 0, %v2310
  %v2312 = vrot.slane %v1816, %v2311
  %v2313 = vlaneseq
  %v2314 = vshrl.u32 %v2313, 7
  %v2315 = vsub.s32 0, %v2314
  %v2316 = vrot.slane %v1817, %v2315
  %v2317 = vlaneseq
  %v2318 = vshrl.u32 %v2317, 7
  %v2319 = vsub.s32 0, %v2318
  %v2320 = vrot.slane %v1818, %v2319
  %v2321 = vlaneseq
  %v2322 = vshrl.u32 %v2321, 7
  %v2323 = vsub.s32 0, %v2322
  %v2324 = vrot.slane %v1820, %v2323
  %v2325 = vlaneseq
  %v2326 = vshrl.u32 %v2325, 7
  %v2327 = vsub.s32 0, %v2326
  %v2328 = vrot.slane %v1821, %v2327
  %v2329 = vlaneseq
  %v2330 = vshrl.u32 %v2329, 7
  %v2331 = vsub.s32 0, %v2330
  %v2332 = vrot.slane %v1822, %v2331
  %v2333 = vlaneseq
  %v2334 = vshrl.u32 %v2333, 7
  %v2335 = vsub.s32 0, %v2334
  %v2336 = vrot.slane %v1824, %v2335
  %v2337 = vlaneseq
  %v2338 = vshrl.u32 %v2337, 7
  %v2339 = vsub.s32 0, %v2338
  %v2340 = vrot.slane %v1825, %v2339
  %v2341 = vlaneseq
  %v2342 = vshrl.u32 %v2341, 7
  %v2343 = vsub.s32 0, %v2342
  %v2344 = vrot.slane %v1826, %v2343
  %v2345 = vlaneseq
  %v2346 = vshrl.u32 %v2345, 7
  %v2347 = vsub.s32 0, %v2346
  %v2348 = vrot.slane %v1828, %v2347
  %v2349 = vlaneseq
  %v2350 = vshrl.u32 %v2349, 7
  %v2351 = vsub.s32 0, %v2350
  %v2352 = vrot.slane %v1829, %v2351
  %v2353 = vlaneseq
  %v2354 = vshrl.u32 %v2353, 7
  %v2355 = vsub.s32 0, %v2354
  %v2356 = vrot.slane %v1830, %v2355
  %vm2357 = vcmask 1041409
  %v2358 = vsel %vm2357, %v2004, %v2000
  %vm2359 = vcmask 1042434
  %v2360 = vsel %vm2359, %v2008, %v2358
  %v2361 = vsel %vm2357, %v2016, %v2012
  %v2362 = vsel %vm2359, %v2020, %v2361
  %v2363 = vsel %vm2357, %v2028, %v2024
  %v2364 = vsel %vm2359, %v2032, %v2363
  %v2365 = vsel %vm2357, %v2040, %v2036
  %v2366 = vsel %vm2359, %v2044, %v2365
  %v2367 = vsel %vm2357, %v2052, %v2048
  %v2368 = vsel %vm2359, %v2056, %v2367
  %v2369 = vsel %vm2357, %v2064, %v2060
  %v2370 = vsel %vm2359, %v2068, %v2369
  %v2371 = vsel %vm2357, %v2076, %v2072
  %v2372 = vsel %vm2359, %v2080, %v2371
  %v2373 = vsel %vm2357, %v2088, %v2084
  %v2374 = vsel %vm2359, %v2092, %v2373
  %v2375 = vsel %vm2357, %v2100, %v2096
  %v2376 = vsel %vm2359, %v2104, %v2375
  %v2377 = vsel %vm2357, %v2112, %v2108
  %v2378 = vsel %vm2359, %v2116, %v2377
  %v2379 = vsel %vm2357, %v2124, %v2120
  %v2380 = vsel %vm2359, %v2128, %v2379
  %v2381 = vsel %vm2357, %v2136, %v2132
  %v2382 = vsel %vm2359, %v2140, %v2381
  %v2383 = vsel %vm2357, %v2148, %v2144
  %v2384 = vsel %vm2359, %v2152, %v2383
  %v2385 = vsel %vm2357, %v2160, %v2156
  %v2386 = vsel %vm2359, %v2164, %v2385
  %v2387 = vsel %vm2357, %v2172, %v2168
  %v2388 = vsel %vm2359, %v2176, %v2387
  %v2389 = vsel %vm2357, %v2184, %v2180
  %v2390 = vsel %vm2359, %v2188, %v2389
  %v2391 = vsel %vm2357, %v2196, %v2192
  %v2392 = vsel %vm2359, %v2200, %v2391
  %v2393 = vsel %vm2357, %v2208, %v2204
  %v2394 = vsel %vm2359, %v2212, %v2393
  %v2395 = vsel %vm2357, %v2220, %v2216
  %v2396 = vsel %vm2359, %v2224, %v2395
  %v2397 = vsel %vm2357, %v2232, %v2228
  %v2398 = vsel %vm2359, %v2236, %v2397
  %v2399 = vsel %vm2357, %v2244, %v2240
  %v2400 = vsel %vm2359, %v2248, %v2399
  %v2401 = vsel %vm2357, %v2256, %v2252
  %v2402 = vsel %vm2359, %v2260, %v2401
  %v2403 = vsel %vm2357, %v2268, %v2264
  %v2404 = vsel %vm2359, %v2272, %v2403
  %v2405 = vsel %vm2357, %v2280, %v2276
  %v2406 = vsel %vm2359, %v2284, %v2405
  %v2407 = vsel %vm2357, %v2292, %v2288
  %v2408 = vsel %vm2359, %v2296, %v2407
  %v2409 = vsel %vm2357, %v2304, %v2300
  %v2410 = vsel %vm2359, %v2308, %v2409
  %v2411 = vsel %vm2357, %v2316, %v2312
  %v2412 = vsel %vm2359, %v2320, %v2411
  %v2413 = vsel %vm2357, %v2328, %v2324
  %v2414 = vsel %vm2359, %v2332, %v2413
  %v2415 = vsel %vm2357, %v2340, %v2336
  %v2416 = vsel %vm2359, %v2344, %v2415
  %v2417 = vsel %vm2357, %v2352, %v2348
  %v2418 = vsel %vm2359, %v2356, %v2417
  %s2449 = scalar_lea.vmem [#allocation2], 4
  %vm2450 = vcmask 26624
  %2451 = vst.msk [vmem:[%s2449 + $0x1] sm:$0x7] %vm2450, %v2360
  %2452 = vst.msk [vmem:[%s2449 + $0x5] sm:$0x7] %vm2450, %v2362
  %2453 = vst.msk [vmem:[%s2449 + $0x9] sm:$0x7] %vm2450, %v2364
  %2454 = vst.msk [vmem:[%s2449 + $0xd] sm:$0x7] %vm2450, %v2366
  %2455 = vst.msk [vmem:[%s2449 + $0x11] sm:$0x7] %vm2450, %v2368
  %2456 = vst.msk [vmem:[%s2449 + $0x15] sm:$0x7] %vm2450, %v2370
  %2457 = vst.msk [vmem:[%s2449 + $0x19] sm:$0x7] %vm2450, %v2372
  %2458 = vst.msk [vmem:[%s2449 + $0x1d] sm:$0x7] %vm2450, %v2374
  %2459 = vst.msk [vmem:[%s2449 + $0x21] sm:$0x7] %vm2450, %v2376
  %2460 = vst.msk [vmem:[%s2449 + $0x25] sm:$0x7] %vm2450, %v2378
  %2461 = vst.msk [vmem:[%s2449 + $0x29] sm:$0x7] %vm2450, %v2380
  %2462 = vst.msk [vmem:[%s2449 + $0x2d] sm:$0x7] %vm2450, %v2382
  %2463 = vst.msk [vmem:[%s2449 + $0x31] sm:$0x7] %vm2450, %v2384
  %2464 = vst.msk [vmem:[%s2449 + $0x35] sm:$0x7] %vm2450, %v2386
  %2465 = vst.msk [vmem:[%s2449 + $0x39] sm:$0x7] %vm2450, %v2388
  %2466 = vst.msk [vmem:[%s2449 + $0x41] sm:$0x7] %vm2450, %v2390
  %2467 = vst.msk [vmem:[%s2449 + $0x45] sm:$0x7] %vm2450, %v2392
  %2468 = vst.msk [vmem:[%s2449 + $0x49] sm:$0x7] %vm2450, %v2394
  %2469 = vst.msk [vmem:[%s2449 + $0x4d] sm:$0x7] %vm2450, %v2396
  %2470 = vst.msk [vmem:[%s2449 + $0x51] sm:$0x7] %vm2450, %v2398
  %2471 = vst.msk [vmem:[%s2449 + $0x55] sm:$0x7] %vm2450, %v2400
  %2472 = vst.msk [vmem:[%s2449 + $0x59] sm:$0x7] %vm2450, %v2402
  %2473 = vst.msk [vmem:[%s2449 + $0x5d] sm:$0x7] %vm2450, %v2404
  %2474 = vst.msk [vmem:[%s2449 + $0x61] sm:$0x7] %vm2450, %v2406
  %2475 = vst.msk [vmem:[%s2449 + $0x65] sm:$0x7] %vm2450, %v2408
  %2476 = vst.msk [vmem:[%s2449 + $0x69] sm:$0x7] %vm2450, %v2410
  %2477 = vst.msk [vmem:[%s2449 + $0x6d] sm:$0x7] %vm2450, %v2412
  %2478 = vst.msk [vmem:[%s2449 + $0x71] sm:$0x7] %vm2450, %v2414
  %2479 = vst.msk [vmem:[%s2449 + $0x75] sm:$0x7] %vm2450, %v2416
  %2480 = vst.msk [vmem:[%s2449 + $0x79] sm:$0x7] %vm2450, %v2418
  %v2511 = vlaneseq
  %v2512 = vshrl.u32 %v2511, 7
  %v2513 = vsub.s32 0, %v2512
  %v2514 = vrot.slane %v1711, %v2513
  %v2515 = vlaneseq
  %v2516 = vshrl.u32 %v2515, 7
  %v2517 = vsub.s32 0, %v2516
  %v2518 = vrot.slane %v1715, %v2517
  %v2519 = vlaneseq
  %v2520 = vshrl.u32 %v2519, 7
  %v2521 = vsub.s32 0, %v2520
  %v2522 = vrot.slane %v1719, %v2521
  %v2523 = vlaneseq
  %v2524 = vshrl.u32 %v2523, 7
  %v2525 = vsub.s32 0, %v2524
  %v2526 = vrot.slane %v1723, %v2525
  %v2527 = vlaneseq
  %v2528 = vshrl.u32 %v2527, 7
  %v2529 = vsub.s32 0, %v2528
  %v2530 = vrot.slane %v1727, %v2529
  %v2531 = vlaneseq
  %v2532 = vshrl.u32 %v2531, 7
  %v2533 = vsub.s32 0, %v2532
  %v2534 = vrot.slane %v1731, %v2533
  %v2535 = vlaneseq
  %v2536 = vshrl.u32 %v2535, 7
  %v2537 = vsub.s32 0, %v2536
  %v2538 = vrot.slane %v1735, %v2537
  %v2539 = vlaneseq
  %v2540 = vshrl.u32 %v2539, 7
  %v2541 = vsub.s32 0, %v2540
  %v2542 = vrot.slane %v1739, %v2541
  %v2543 = vlaneseq
  %v2544 = vshrl.u32 %v2543, 7
  %v2545 = vsub.s32 0, %v2544
  %v2546 = vrot.slane %v1743, %v2545
  %v2547 = vlaneseq
  %v2548 = vshrl.u32 %v2547, 7
  %v2549 = vsub.s32 0, %v2548
  %v2550 = vrot.slane %v1747, %v2549
  %v2551 = vlaneseq
  %v2552 = vshrl.u32 %v2551, 7
  %v2553 = vsub.s32 0, %v2552
  %v2554 = vrot.slane %v1751, %v2553
  %v2555 = vlaneseq
  %v2556 = vshrl.u32 %v2555, 7
  %v2557 = vsub.s32 0, %v2556
  %v2558 = vrot.slane %v1755, %v2557
  %v2559 = vlaneseq
  %v2560 = vshrl.u32 %v2559, 7
  %v2561 = vsub.s32 0, %v2560
  %v2562 = vrot.slane %v1759, %v2561
  %v2563 = vlaneseq
  %v2564 = vshrl.u32 %v2563, 7
  %v2565 = vsub.s32 0, %v2564
  %v2566 = vrot.slane %v1763, %v2565
  %v2567 = vlaneseq
  %v2568 = vshrl.u32 %v2567, 7
  %v2569 = vsub.s32 0, %v2568
  %v2570 = vrot.slane %v1767, %v2569
  %v2571 = vlaneseq
  %v2572 = vshrl.u32 %v2571, 7
  %v2573 = vsub.s32 0, %v2572
  %v2574 = vrot.slane %v1775, %v2573
  %v2575 = vlaneseq
  %v2576 = vshrl.u32 %v2575, 7
  %v2577 = vsub.s32 0, %v2576
  %v2578 = vrot.slane %v1779, %v2577
  %v2579 = vlaneseq
  %v2580 = vshrl.u32 %v2579, 7
  %v2581 = vsub.s32 0, %v2580
  %v2582 = vrot.slane %v1783, %v2581
  %v2583 = vlaneseq
  %v2584 = vshrl.u32 %v2583, 7
  %v2585 = vsub.s32 0, %v2584
  %v2586 = vrot.slane %v1787, %v2585
  %v2587 = vlaneseq
  %v2588 = vshrl.u32 %v2587, 7
  %v2589 = vsub.s32 0, %v2588
  %v2590 = vrot.slane %v1791, %v2589
  %v2591 = vlaneseq
  %v2592 = vshrl.u32 %v2591, 7
  %v2593 = vsub.s32 0, %v2592
  %v2594 = vrot.slane %v1795, %v2593
  %v2595 = vlaneseq
  %v2596 = vshrl.u32 %v2595, 7
  %v2597 = vsub.s32 0, %v2596
  %v2598 = vrot.slane %v1799, %v2597
  %v2599 = vlaneseq
  %v2600 = vshrl.u32 %v2599, 7
  %v2601 = vsub.s32 0, %v2600
  %v2602 = vrot.slane %v1803, %v2601
  %v2603 = vlaneseq
  %v2604 = vshrl.u32 %v2603, 7
  %v2605 = vsub.s32 0, %v2604
  %v2606 = vrot.slane %v1807, %v2605
  %v2607 = vlaneseq
  %v2608 = vshrl.u32 %v2607, 7
  %v2609 = vsub.s32 0, %v2608
  %v2610 = vrot.slane %v1811, %v2609
  %v2611 = vlaneseq
  %v2612 = vshrl.u32 %v2611, 7
  %v2613 = vsub.s32 0, %v2612
  %v2614 = vrot.slane %v1815, %v2613
  %v2615 = vlaneseq
  %v2616 = vshrl.u32 %v2615, 7
  %v2617 = vsub.s32 0, %v2616
  %v2618 = vrot.slane %v1819, %v2617
  %v2619 = vlaneseq
  %v2620 = vshrl.u32 %v2619, 7
  %v2621 = vsub.s32 0, %v2620
  %v2622 = vrot.slane %v1823, %v2621
  %v2623 = vlaneseq
  %v2624 = vshrl.u32 %v2623, 7
  %v2625 = vsub.s32 0, %v2624
  %v2626 = vrot.slane %v1827, %v2625
  %v2627 = vlaneseq
  %v2628 = vshrl.u32 %v2627, 7
  %v2629 = vsub.s32 0, %v2628
  %v2630 = vrot.slane %v1831, %v2629
  %vm2631 = vcmask 1043459
  %v2632 = vsel %vm2631, %v2514, %v2360
  %v2633 = vsel %vm2631, %v2518, %v2362
  %v2634 = vsel %vm2631, %v2522, %v2364
  %v2635 = vsel %vm2631, %v2526, %v2366
  %v2636 = vsel %vm2631, %v2530, %v2368
  %v2637 = vsel %vm2631, %v2534, %v2370
  %v2638 = vsel %vm2631, %v2538, %v2372
  %v2639 = vsel %vm2631, %v2542, %v2374
  %v2640 = vsel %vm2631, %v2546, %v2376
  %v2641 = vsel %vm2631, %v2550, %v2378
  %v2642 = vsel %vm2631, %v2554, %v2380
  %v2643 = vsel %vm2631, %v2558, %v2382
  %v2644 = vsel %vm2631, %v2562, %v2384
  %v2645 = vsel %vm2631, %v2566, %v2386
  %v2646 = vsel %vm2631, %v2570, %v2388
  %v2647 = vsel %vm2631, %v2574, %v2390
  %v2648 = vsel %vm2631, %v2578, %v2392
  %v2649 = vsel %vm2631, %v2582, %v2394
  %v2650 = vsel %vm2631, %v2586, %v2396
  %v2651 = vsel %vm2631, %v2590, %v2398
  %v2652 = vsel %vm2631, %v2594, %v2400
  %v2653 = vsel %vm2631, %v2598, %v2402
  %v2654 = vsel %vm2631, %v2602, %v2404
  %v2655 = vsel %vm2631, %v2606, %v2406
  %v2656 = vsel %vm2631, %v2610, %v2408
  %v2657 = vsel %vm2631, %v2614, %v2410
  %v2658 = vsel %vm2631, %v2618, %v2412
  %v2659 = vsel %vm2631, %v2622, %v2414
  %v2660 = vsel %vm2631, %v2626, %v2416
  %v2661 = vsel %vm2631, %v2630, %v2418
  %2662 = vrot.lane.b32.xlu0 %v2632, 4
  %v2663 = vpop.permute.xlu0 %2662
  %2664 = vrot.lane.b32.xlu0 %v2633, 4
  %v2665 = vpop.permute.xlu0 %2664
  %2666 = vrot.lane.b32.xlu0 %v2634, 4
  %v2667 = vpop.permute.xlu0 %2666
  %2668 = vrot.lane.b32.xlu0 %v2635, 4
  %v2669 = vpop.permute.xlu0 %2668
  %2670 = vrot.lane.b32.xlu0 %v2636, 4
  %v2671 = vpop.permute.xlu0 %2670
  %2672 = vrot.lane.b32.xlu0 %v2637, 4
  %v2673 = vpop.permute.xlu0 %2672
  %2674 = vrot.lane.b32.xlu0 %v2638, 4
  %v2675 = vpop.permute.xlu0 %2674
  %2676 = vrot.lane.b32.xlu0 %v2639, 4
  %v2677 = vpop.permute.xlu0 %2676
  %2678 = vrot.lane.b32.xlu0 %v2640, 4
  %v2679 = vpop.permute.xlu0 %2678
  %2680 = vrot.lane.b32.xlu0 %v2641, 4
  %v2681 = vpop.permute.xlu0 %2680
  %2682 = vrot.lane.b32.xlu0 %v2642, 4
  %v2683 = vpop.permute.xlu0 %2682
  %2684 = vrot.lane.b32.xlu0 %v2643, 4
  %v2685 = vpop.permute.xlu0 %2684
  %2686 = vrot.lane.b32.xlu0 %v2644, 4
  %v2687 = vpop.permute.xlu0 %2686
  %2688 = vrot.lane.b32.xlu0 %v2645, 4
  %v2689 = vpop.permute.xlu0 %2688
  %2690 = vrot.lane.b32.xlu0 %v2646, 4
  %v2691 = vpop.permute.xlu0 %2690
  %2692 = vrot.lane.b32.xlu0 %v2647, 4
  %v2693 = vpop.permute.xlu0 %2692
  %2694 = vrot.lane.b32.xlu0 %v2648, 4
  %v2695 = vpop.permute.xlu0 %2694
  %2696 = vrot.lane.b32.xlu0 %v2649, 4
  %v2697 = vpop.permute.xlu0 %2696
  %2698 = vrot.lane.b32.xlu0 %v2650, 4
  %v2699 = vpop.permute.xlu0 %2698
  %2700 = vrot.lane.b32.xlu0 %v2651, 4
  %v2701 = vpop.permute.xlu0 %2700
  %2702 = vrot.lane.b32.xlu0 %v2652, 4
  %v2703 = vpop.permute.xlu0 %2702
  %2704 = vrot.lane.b32.xlu0 %v2653, 4
  %v2705 = vpop.permute.xlu0 %2704
  %2706 = vrot.lane.b32.xlu0 %v2654, 4
  %v2707 = vpop.permute.xlu0 %2706
  %2708 = vrot.lane.b32.xlu0 %v2655, 4
  %v2709 = vpop.permute.xlu0 %2708
  %2710 = vrot.lane.b32.xlu0 %v2656, 4
  %v2711 = vpop.permute.xlu0 %2710
  %2712 = vrot.lane.b32.xlu0 %v2657, 4
  %v2713 = vpop.permute.xlu0 %2712
  %2714 = vrot.lane.b32.xlu0 %v2658, 4
  %v2715 = vpop.permute.xlu0 %2714
  %2716 = vrot.lane.b32.xlu0 %v2659, 4
  %v2717 = vpop.permute.xlu0 %2716
  %2718 = vrot.lane.b32.xlu0 %v2660, 4
  %v2719 = vpop.permute.xlu0 %2718
  %2720 = vrot.lane.b32.xlu0 %v2661, 4
  %v2721 = vpop.permute.xlu0 %2720
  %vm2752 = vcmask 60448
  %2753 = vst.msk [vmem:[%s2449] sm:$0xf] %vm2752, %v2663
  %2754 = vst.msk [vmem:[%s2449 + $0x4] sm:$0xf] %vm2752, %v2665
  %2755 = vst.msk [vmem:[%s2449 + $0x8] sm:$0xf] %vm2752, %v2667
  %2756 = vst.msk [vmem:[%s2449 + $0xc] sm:$0xf] %vm2752, %v2669
  %2757 = vst.msk [vmem:[%s2449 + $0x10] sm:$0xf] %vm2752, %v2671
  %2758 = vst.msk [vmem:[%s2449 + $0x14] sm:$0xf] %vm2752, %v2673
  %2759 = vst.msk [vmem:[%s2449 + $0x18] sm:$0xf] %vm2752, %v2675
  %2760 = vst.msk [vmem:[%s2449 + $0x1c] sm:$0xf] %vm2752, %v2677
  %2761 = vst.msk [vmem:[%s2449 + $0x20] sm:$0xf] %vm2752, %v2679
  %2762 = vst.msk [vmem:[%s2449 + $0x24] sm:$0xf] %vm2752, %v2681
  %2763 = vst.msk [vmem:[%s2449 + $0x28] sm:$0xf] %vm2752, %v2683
  %2764 = vst.msk [vmem:[%s2449 + $0x2c] sm:$0xf] %vm2752, %v2685
  %2765 = vst.msk [vmem:[%s2449 + $0x30] sm:$0xf] %vm2752, %v2687
  %2766 = vst.msk [vmem:[%s2449 + $0x34] sm:$0xf] %vm2752, %v2689
  %2767 = vst.msk [vmem:[%s2449 + $0x38] sm:$0xf] %vm2752, %v2691
  %2768 = vst.msk [vmem:[%s2449 + $0x40] sm:$0xf] %vm2752, %v2693
  %2769 = vst.msk [vmem:[%s2449 + $0x44] sm:$0xf] %vm2752, %v2695
  %2770 = vst.msk [vmem:[%s2449 + $0x48] sm:$0xf] %vm2752, %v2697
  %2771 = vst.msk [vmem:[%s2449 + $0x4c] sm:$0xf] %vm2752, %v2699
  %2772 = vst.msk [vmem:[%s2449 + $0x50] sm:$0xf] %vm2752, %v2701
  %2773 = vst.msk [vmem:[%s2449 + $0x54] sm:$0xf] %vm2752, %v2703
  %2774 = vst.msk [vmem:[%s2449 + $0x58] sm:$0xf] %vm2752, %v2705
  %2775 = vst.msk [vmem:[%s2449 + $0x5c] sm:$0xf] %vm2752, %v2707
  %2776 = vst.msk [vmem:[%s2449 + $0x60] sm:$0xf] %vm2752, %v2709
  %2777 = vst.msk [vmem:[%s2449 + $0x64] sm:$0xf] %vm2752, %v2711
  %2778 = vst.msk [vmem:[%s2449 + $0x68] sm:$0xf] %vm2752, %v2713
  %2779 = vst.msk [vmem:[%s2449 + $0x6c] sm:$0xf] %vm2752, %v2715
  %2780 = vst.msk [vmem:[%s2449 + $0x70] sm:$0xf] %vm2752, %v2717
  %2781 = vst.msk [vmem:[%s2449 + $0x74] sm:$0xf] %vm2752, %v2719
  %2782 = vst.msk [vmem:[%s2449 + $0x78] sm:$0xf] %vm2752, %v2721
  %v2783 = vsel %vm2357, %v2008, %v2004
  %v2784 = vsel %vm2359, %v2514, %v2783
  %v2785 = vsel %vm2357, %v2020, %v2016
  %v2786 = vsel %vm2359, %v2518, %v2785
  %v2787 = vsel %vm2357, %v2032, %v2028
  %v2788 = vsel %vm2359, %v2522, %v2787
  %v2789 = vsel %vm2357, %v2044, %v2040
  %v2790 = vsel %vm2359, %v2526, %v2789
  %v2791 = vsel %vm2357, %v2056, %v2052
  %v2792 = vsel %vm2359, %v2530, %v2791
  %v2793 = vsel %vm2357, %v2068, %v2064
  %v2794 = vsel %vm2359, %v2534, %v2793
  %v2795 = vsel %vm2357, %v2080, %v2076
  %v2796 = vsel %vm2359, %v2538, %v2795
  %v2797 = vsel %vm2357, %v2092, %v2088
  %v2798 = vsel %vm2359, %v2542, %v2797
  %v2799 = vsel %vm2357, %v2104, %v2100
  %v2800 = vsel %vm2359, %v2546, %v2799
  %v2801 = vsel %vm2357, %v2116, %v2112
  %v2802 = vsel %vm2359, %v2550, %v2801
  %v2803 = vsel %vm2357, %v2128, %v2124
  %v2804 = vsel %vm2359, %v2554, %v2803
  %v2805 = vsel %vm2357, %v2140, %v2136
  %v2806 = vsel %vm2359, %v2558, %v2805
  %v2807 = vsel %vm2357, %v2152, %v2148
  %v2808 = vsel %vm2359, %v2562, %v2807
  %v2809 = vsel %vm2357, %v2164, %v2160
  %v2810 = vsel %vm2359, %v2566, %v2809
  %v2811 = vsel %vm2357, %v2176, %v2172
  %v2812 = vsel %vm2359, %v2570, %v2811
  %v2813 = vsel %vm2357, %v2188, %v2184
  %v2814 = vsel %vm2359, %v2574, %v2813
  %v2815 = vsel %vm2357, %v2200, %v2196
  %v2816 = vsel %vm2359, %v2578, %v2815
  %v2817 = vsel %vm2357, %v2212, %v2208
  %v2818 = vsel %vm2359, %v2582, %v2817
  %v2819 = vsel %vm2357, %v2224, %v2220
  %v2820 = vsel %vm2359, %v2586, %v2819
  %v2821 = vsel %vm2357, %v2236, %v2232
  %v2822 = vsel %vm2359, %v2590, %v2821
  %v2823 = vsel %vm2357, %v2248, %v2244
  %v2824 = vsel %vm2359, %v2594, %v2823
  %v2825 = vsel %vm2357, %v2260, %v2256
  %v2826 = vsel %vm2359, %v2598, %v2825
  %v2827 = vsel %vm2357, %v2272, %v2268
  %v2828 = vsel %vm2359, %v2602, %v2827
  %v2829 = vsel %vm2357, %v2284, %v2280
  %v2830 = vsel %vm2359, %v2606, %v2829
  %v2831 = vsel %vm2357, %v2296, %v2292
  %v2832 = vsel %vm2359, %v2610, %v2831
  %v2833 = vsel %vm2357, %v2308, %v2304
  %v2834 = vsel %vm2359, %v2614, %v2833
  %v2835 = vsel %vm2357, %v2320, %v2316
  %v2836 = vsel %vm2359, %v2618, %v2835
  %v2837 = vsel %vm2357, %v2332, %v2328
  %v2838 = vsel %vm2359, %v2622, %v2837
  %v2839 = vsel %vm2357, %v2344, %v2340
  %v2840 = vsel %vm2359, %v2626, %v2839
  %v2841 = vsel %vm2357, %v2356, %v2352
  %v2842 = vsel %vm2359, %v2630, %v2841
  %2843 = vrot.lane.b32.xlu0 %v2784, 8
  %v2844 = vpop.permute.xlu0 %2843
  %2845 = vrot.lane.b32.xlu0 %v2786, 8
  %v2846 = vpop.permute.xlu0 %2845
  %2847 = vrot.lane.b32.xlu0 %v2788, 8
  %v2848 = vpop.permute.xlu0 %2847
  %2849 = vrot.lane.b32.xlu0 %v2790, 8
  %v2850 = vpop.permute.xlu0 %2849
  %2851 = vrot.lane.b32.xlu0 %v2792, 8
  %v2852 = vpop.permute.xlu0 %2851
  %2853 = vrot.lane.b32.xlu0 %v2794, 8
  %v2854 = vpop.permute.xlu0 %2853
  %2855 = vrot.lane.b32.xlu0 %v2796, 8
  %v2856 = vpop.permute.xlu0 %2855
  %2857 = vrot.lane.b32.xlu0 %v2798, 8
  %v2858 = vpop.permute.xlu0 %2857
  %2859 = vrot.lane.b32.xlu0 %v2800, 8
  %v2860 = vpop.permute.xlu0 %2859
  %2861 = vrot.lane.b32.xlu0 %v2802, 8
  %v2862 = vpop.permute.xlu0 %2861
  %2863 = vrot.lane.b32.xlu0 %v2804, 8
  %v2864 = vpop.permute.xlu0 %2863
  %2865 = vrot.lane.b32.xlu0 %v2806, 8
  %v2866 = vpop.permute.xlu0 %2865
  %2867 = vrot.lane.b32.xlu0 %v2808, 8
  %v2868 = vpop.permute.xlu0 %2867
  %2869 = vrot.lane.b32.xlu0 %v2810, 8
  %v2870 = vpop.permute.xlu0 %2869
  %2871 = vrot.lane.b32.xlu0 %v2812, 8
  %v2872 = vpop.permute.xlu0 %2871
  %2873 = vrot.lane.b32.xlu0 %v2814, 8
  %v2874 = vpop.permute.xlu0 %2873
  %2875 = vrot.lane.b32.xlu0 %v2816, 8
  %v2876 = vpop.permute.xlu0 %2875
  %2877 = vrot.lane.b32.xlu0 %v2818, 8
  %v2878 = vpop.permute.xlu0 %2877
  %2879 = vrot.lane.b32.xlu0 %v2820, 8
  %v2880 = vpop.permute.xlu0 %2879
  %2881 = vrot.lane.b32.xlu0 %v2822, 8
  %v2882 = vpop.permute.xlu0 %2881
  %2883 = vrot.lane.b32.xlu0 %v2824, 8
  %v2884 = vpop.permute.xlu0 %2883
  %2885 = vrot.lane.b32.xlu0 %v2826, 8
  %v2886 = vpop.permute.xlu0 %2885
  %2887 = vrot.lane.b32.xlu0 %v2828, 8
  %v2888 = vpop.permute.xlu0 %2887
  %2889 = vrot.lane.b32.xlu0 %v2830, 8
  %v2890 = vpop.permute.xlu0 %2889
  %2891 = vrot.lane.b32.xlu0 %v2832, 8
  %v2892 = vpop.permute.xlu0 %2891
  %2893 = vrot.lane.b32.xlu0 %v2834, 8
  %v2894 = vpop.permute.xlu0 %2893
  %2895 = vrot.lane.b32.xlu0 %v2836, 8
  %v2896 = vpop.permute.xlu0 %2895
  %2897 = vrot.lane.b32.xlu0 %v2838, 8
  %v2898 = vpop.permute.xlu0 %2897
  %2899 = vrot.lane.b32.xlu0 %v2840, 8
  %v2900 = vpop.permute.xlu0 %2899
  %2901 = vrot.lane.b32.xlu0 %v2842, 8
  %v2902 = vpop.permute.xlu0 %2901
  %vm2933 = vcmask 92224
  %2934 = vst.msk [vmem:[%s2449] sm:$0x7] %vm2933, %v2844
  %2935 = vst.msk [vmem:[%s2449 + $0x4] sm:$0x7] %vm2933, %v2846
  %2936 = vst.msk [vmem:[%s2449 + $0x8] sm:$0x7] %vm2933, %v2848
  %2937 = vst.msk [vmem:[%s2449 + $0xc] sm:$0x7] %vm2933, %v2850
  %2938 = vst.msk [vmem:[%s2449 + $0x10] sm:$0x7] %vm2933, %v2852
  %2939 = vst.msk [vmem:[%s2449 + $0x14] sm:$0x7] %vm2933, %v2854
  %2940 = vst.msk [vmem:[%s2449 + $0x18] sm:$0x7] %vm2933, %v2856
  %2941 = vst.msk [vmem:[%s2449 + $0x1c] sm:$0x7] %vm2933, %v2858
  %2942 = vst.msk [vmem:[%s2449 + $0x20] sm:$0x7] %vm2933, %v2860
  %2943 = vst.msk [vmem:[%s2449 + $0x24] sm:$0x7] %vm2933, %v2862
  %2944 = vst.msk [vmem:[%s2449 + $0x28] sm:$0x7] %vm2933, %v2864
  %2945 = vst.msk [vmem:[%s2449 + $0x2c] sm:$0x7] %vm2933, %v2866
  %2946 = vst.msk [vmem:[%s2449 + $0x30] sm:$0x7] %vm2933, %v2868
  %2947 = vst.msk [vmem:[%s2449 + $0x34] sm:$0x7] %vm2933, %v2870
  %2948 = vst.msk [vmem:[%s2449 + $0x38] sm:$0x7] %vm2933, %v2872
  %2949 = vst.msk [vmem:[%s2449 + $0x40] sm:$0x7] %vm2933, %v2874
  %2950 = vst.msk [vmem:[%s2449 + $0x44] sm:$0x7] %vm2933, %v2876
  %2951 = vst.msk [vmem:[%s2449 + $0x48] sm:$0x7] %vm2933, %v2878
  %2952 = vst.msk [vmem:[%s2449 + $0x4c] sm:$0x7] %vm2933, %v2880
  %2953 = vst.msk [vmem:[%s2449 + $0x50] sm:$0x7] %vm2933, %v2882
  %2954 = vst.msk [vmem:[%s2449 + $0x54] sm:$0x7] %vm2933, %v2884
  %2955 = vst.msk [vmem:[%s2449 + $0x58] sm:$0x7] %vm2933, %v2886
  %2956 = vst.msk [vmem:[%s2449 + $0x5c] sm:$0x7] %vm2933, %v2888
  %2957 = vst.msk [vmem:[%s2449 + $0x60] sm:$0x7] %vm2933, %v2890
  %2958 = vst.msk [vmem:[%s2449 + $0x64] sm:$0x7] %vm2933, %v2892
  %2959 = vst.msk [vmem:[%s2449 + $0x68] sm:$0x7] %vm2933, %v2894
  %2960 = vst.msk [vmem:[%s2449 + $0x6c] sm:$0x7] %vm2933, %v2896
  %2961 = vst.msk [vmem:[%s2449 + $0x70] sm:$0x7] %vm2933, %v2898
  %2962 = vst.msk [vmem:[%s2449 + $0x74] sm:$0x7] %vm2933, %v2900
  %2963 = vst.msk [vmem:[%s2449 + $0x78] sm:$0x7] %vm2933, %v2902
  %v2970 = vlaneseq
  %v2971 = vshrl.u32 %v2970, 7
  %v2972 = vsub.s32 0, %v2971
  %v2973 = vrot.slane %v1768, %v2972
  %v2974 = vlaneseq
  %v2975 = vshrl.u32 %v2974, 7
  %v2976 = vsub.s32 0, %v2975
  %v2977 = vrot.slane %v1769, %v2976
  %v2978 = vlaneseq
  %v2979 = vshrl.u32 %v2978, 7
  %v2980 = vsub.s32 0, %v2979
  %v2981 = vrot.slane %v1770, %v2980
  %v2982 = vlaneseq
  %v2983 = vshrl.u32 %v2982, 7
  %v2984 = vsub.s32 0, %v2983
  %v2985 = vrot.slane %v1832, %v2984
  %v2986 = vlaneseq
  %v2987 = vshrl.u32 %v2986, 7
  %v2988 = vsub.s32 0, %v2987
  %v2989 = vrot.slane %v1833, %v2988
  %v2990 = vlaneseq
  %v2991 = vshrl.u32 %v2990, 7
  %v2992 = vsub.s32 0, %v2991
  %v2993 = vrot.slane %v1834, %v2992
  %v2994 = vsel %vm2357, %v2977, %v2973
  %v2995 = vsel %vm2359, %v2981, %v2994
  %v2996 = vsel %vm2357, %v2989, %v2985
  %v2997 = vsel %vm2359, %v2993, %v2996
  %2998 = vrot.lane.b32.xlu0 %v2360, 12
  %v2999 = vpop.permute.xlu0 %2998
  %3000 = vrot.lane.b32.xlu0 %v2362, 12
  %v3001 = vpop.permute.xlu0 %3000
  %3002 = vrot.lane.b32.xlu0 %v2364, 12
  %v3003 = vpop.permute.xlu0 %3002
  %3004 = vrot.lane.b32.xlu0 %v2366, 12
  %v3005 = vpop.permute.xlu0 %3004
  %3006 = vrot.lane.b32.xlu0 %v2368, 12
  %v3007 = vpop.permute.xlu0 %3006
  %3008 = vrot.lane.b32.xlu0 %v2370, 12
  %v3009 = vpop.permute.xlu0 %3008
  %3010 = vrot.lane.b32.xlu0 %v2372, 12
  %v3011 = vpop.permute.xlu0 %3010
  %3012 = vrot.lane.b32.xlu0 %v2374, 12
  %v3013 = vpop.permute.xlu0 %3012
  %3014 = vrot.lane.b32.xlu0 %v2376, 12
  %v3015 = vpop.permute.xlu0 %3014
  %3016 = vrot.lane.b32.xlu0 %v2378, 12
  %v3017 = vpop.permute.xlu0 %3016
  %3018 = vrot.lane.b32.xlu0 %v2380, 12
  %v3019 = vpop.permute.xlu0 %3018
  %3020 = vrot.lane.b32.xlu0 %v2382, 12
  %v3021 = vpop.permute.xlu0 %3020
  %3022 = vrot.lane.b32.xlu0 %v2384, 12
  %v3023 = vpop.permute.xlu0 %3022
  %3024 = vrot.lane.b32.xlu0 %v2386, 12
  %v3025 = vpop.permute.xlu0 %3024
  %3026 = vrot.lane.b32.xlu0 %v2388, 12
  %v3027 = vpop.permute.xlu0 %3026
  %3028 = vrot.lane.b32.xlu0 %v2995, 12
  %v3029 = vpop.permute.xlu0 %3028
  %3030 = vrot.lane.b32.xlu0 %v2390, 12
  %v3031 = vpop.permute.xlu0 %3030
  %3032 = vrot.lane.b32.xlu0 %v2392, 12
  %v3033 = vpop.permute.xlu0 %3032
  %3034 = vrot.lane.b32.xlu0 %v2394, 12
  %v3035 = vpop.permute.xlu0 %3034
  %3036 = vrot.lane.b32.xlu0 %v2396, 12
  %v3037 = vpop.permute.xlu0 %3036
  %3038 = vrot.lane.b32.xlu0 %v2398, 12
  %v3039 = vpop.permute.xlu0 %3038
  %3040 = vrot.lane.b32.xlu0 %v2400, 12
  %v3041 = vpop.permute.xlu0 %3040
  %3042 = vrot.lane.b32.xlu0 %v2402, 12
  %v3043 = vpop.permute.xlu0 %3042
  %3044 = vrot.lane.b32.xlu0 %v2404, 12
  %v3045 = vpop.permute.xlu0 %3044
  %3046 = vrot.lane.b32.xlu0 %v2406, 12
  %v3047 = vpop.permute.xlu0 %3046
  %3048 = vrot.lane.b32.xlu0 %v2408, 12
  %v3049 = vpop.permute.xlu0 %3048
  %3050 = vrot.lane.b32.xlu0 %v2410, 12
  %v3051 = vpop.permute.xlu0 %3050
  %3052 = vrot.lane.b32.xlu0 %v2412, 12
  %v3053 = vpop.permute.xlu0 %3052
  %3054 = vrot.lane.b32.xlu0 %v2414, 12
  %v3055 = vpop.permute.xlu0 %3054
  %3056 = vrot.lane.b32.xlu0 %v2416, 12
  %v3057 = vpop.permute.xlu0 %3056
  %3058 = vrot.lane.b32.xlu0 %v2418, 12
  %v3059 = vpop.permute.xlu0 %3058
  %3060 = vrot.lane.b32.xlu0 %v2997, 12
  %v3061 = vpop.permute.xlu0 %3060
  %vm3094 = vcmask 125024
  %3095 = vst.msk [vmem:[#allocation2 + $0x1] sm:$0x7] %vm3094, %v2999
  %3096 = vst.msk [vmem:[#allocation2 + $0x5] sm:$0x7] %vm3094, %v3001
  %3097 = vst.msk [vmem:[#allocation2 + $0x9] sm:$0x7] %vm3094, %v3003
  %3098 = vst.msk [vmem:[#allocation2 + $0xd] sm:$0x7] %vm3094, %v3005
  %3099 = vst.msk [vmem:[#allocation2 + $0x11] sm:$0x7] %vm3094, %v3007
  %3100 = vst.msk [vmem:[#allocation2 + $0x15] sm:$0x7] %vm3094, %v3009
  %3101 = vst.msk [vmem:[#allocation2 + $0x19] sm:$0x7] %vm3094, %v3011
  %3102 = vst.msk [vmem:[#allocation2 + $0x1d] sm:$0x7] %vm3094, %v3013
  %3103 = vst.msk [vmem:[#allocation2 + $0x21] sm:$0x7] %vm3094, %v3015
  %3104 = vst.msk [vmem:[#allocation2 + $0x25] sm:$0x7] %vm3094, %v3017
  %3105 = vst.msk [vmem:[#allocation2 + $0x29] sm:$0x7] %vm3094, %v3019
  %3106 = vst.msk [vmem:[#allocation2 + $0x2d] sm:$0x7] %vm3094, %v3021
  %3107 = vst.msk [vmem:[#allocation2 + $0x31] sm:$0x7] %vm3094, %v3023
  %3108 = vst.msk [vmem:[#allocation2 + $0x35] sm:$0x7] %vm3094, %v3025
  %3109 = vst.msk [vmem:[#allocation2 + $0x39] sm:$0x7] %vm3094, %v3027
  %3110 = vst.msk [vmem:[#allocation2 + $0x3d] sm:$0x7] %vm3094, %v3029
  %3111 = vst.msk [vmem:[#allocation2 + $0x41] sm:$0x7] %vm3094, %v3031
  %3112 = vst.msk [vmem:[#allocation2 + $0x45] sm:$0x7] %vm3094, %v3033
  %3113 = vst.msk [vmem:[#allocation2 + $0x49] sm:$0x7] %vm3094, %v3035
  %3114 = vst.msk [vmem:[#allocation2 + $0x4d] sm:$0x7] %vm3094, %v3037
  %3115 = vst.msk [vmem:[#allocation2 + $0x51] sm:$0x7] %vm3094, %v3039
  %3116 = vst.msk [vmem:[#allocation2 + $0x55] sm:$0x7] %vm3094, %v3041
  %3117 = vst.msk [vmem:[#allocation2 + $0x59] sm:$0x7] %vm3094, %v3043
  %3118 = vst.msk [vmem:[#allocation2 + $0x5d] sm:$0x7] %vm3094, %v3045
  %3119 = vst.msk [vmem:[#allocation2 + $0x61] sm:$0x7] %vm3094, %v3047
  %3120 = vst.msk [vmem:[#allocation2 + $0x65] sm:$0x7] %vm3094, %v3049
  %3121 = vst.msk [vmem:[#allocation2 + $0x69] sm:$0x7] %vm3094, %v3051
  %3122 = vst.msk [vmem:[#allocation2 + $0x6d] sm:$0x7] %vm3094, %v3053
  %3123 = vst.msk [vmem:[#allocation2 + $0x71] sm:$0x7] %vm3094, %v3055
  %3124 = vst.msk [vmem:[#allocation2 + $0x75] sm:$0x7] %vm3094, %v3057
  %3125 = vst.msk [vmem:[#allocation2 + $0x79] sm:$0x7] %vm3094, %v3059
  %3126 = vst.msk [vmem:[#allocation2 + $0x7d] sm:$0x7] %vm3094, %v3061
  %v3129 = vlaneseq
  %v3130 = vshrl.u32 %v3129, 7
  %v3131 = vsub.s32 0, %v3130
  %v3132 = vrot.slane %v1771, %v3131
  %v3133 = vlaneseq
  %v3134 = vshrl.u32 %v3133, 7
  %v3135 = vsub.s32 0, %v3134
  %v3136 = vrot.slane %v1835, %v3135
  %v3137 = vsel %vm2631, %v3132, %v2995
  %v3138 = vsel %vm2631, %v3136, %v2997
  %3139 = vrot.lane.b32.xlu0 %v2632, 16
  %v3140 = vpop.permute.xlu0 %3139
  %3141 = vrot.lane.b32.xlu0 %v2633, 16
  %v3142 = vpop.permute.xlu0 %3141
  %3143 = vrot.lane.b32.xlu0 %v2634, 16
  %v3144 = vpop.permute.xlu0 %3143
  %3145 = vrot.lane.b32.xlu0 %v2635, 16
  %v3146 = vpop.permute.xlu0 %3145
  %3147 = vrot.lane.b32.xlu0 %v2636, 16
  %v3148 = vpop.permute.xlu0 %3147
  %3149 = vrot.lane.b32.xlu0 %v2637, 16
  %v3150 = vpop.permute.xlu0 %3149
  %3151 = vrot.lane.b32.xlu0 %v2638, 16
  %v3152 = vpop.permute.xlu0 %3151
  %3153 = vrot.lane.b32.xlu0 %v2639, 16
  %v3154 = vpop.permute.xlu0 %3153
  %3155 = vrot.lane.b32.xlu0 %v2640, 16
  %v3156 = vpop.permute.xlu0 %3155
  %3157 = vrot.lane.b32.xlu0 %v2641, 16
  %v3158 = vpop.permute.xlu0 %3157
  %3159 = vrot.lane.b32.xlu0 %v2642, 16
  %v3160 = vpop.permute.xlu0 %3159
  %3161 = vrot.lane.b32.xlu0 %v2643, 16
  %v3162 = vpop.permute.xlu0 %3161
  %3163 = vrot.lane.b32.xlu0 %v2644, 16
  %v3164 = vpop.permute.xlu0 %3163
  %3165 = vrot.lane.b32.xlu0 %v2645, 16
  %v3166 = vpop.permute.xlu0 %3165
  %3167 = vrot.lane.b32.xlu0 %v2646, 16
  %v3168 = vpop.permute.xlu0 %3167
  %3169 = vrot.lane.b32.xlu0 %v3137, 16
  %v3170 = vpop.permute.xlu0 %3169
  %3171 = vrot.lane.b32.xlu0 %v2647, 16
  %v3172 = vpop.permute.xlu0 %3171
  %3173 = vrot.lane.b32.xlu0 %v2648, 16
  %v3174 = vpop.permute.xlu0 %3173
  %3175 = vrot.lane.b32.xlu0 %v2649, 16
  %v3176 = vpop.permute.xlu0 %3175
  %3177 = vrot.lane.b32.xlu0 %v2650, 16
  %v3178 = vpop.permute.xlu0 %3177
  %3179 = vrot.lane.b32.xlu0 %v2651, 16
  %v3180 = vpop.permute.xlu0 %3179
  %3181 = vrot.lane.b32.xlu0 %v2652, 16
  %v3182 = vpop.permute.xlu0 %3181
  %3183 = vrot.lane.b32.xlu0 %v2653, 16
  %v3184 = vpop.permute.xlu0 %3183
  %3185 = vrot.lane.b32.xlu0 %v2654, 16
  %v3186 = vpop.permute.xlu0 %3185
  %3187 = vrot.lane.b32.xlu0 %v2655, 16
  %v3188 = vpop.permute.xlu0 %3187
  %3189 = vrot.lane.b32.xlu0 %v2656, 16
  %v3190 = vpop.permute.xlu0 %3189
  %3191 = vrot.lane.b32.xlu0 %v2657, 16
  %v3192 = vpop.permute.xlu0 %3191
  %3193 = vrot.lane.b32.xlu0 %v2658, 16
  %v3194 = vpop.permute.xlu0 %3193
  %3195 = vrot.lane.b32.xlu0 %v2659, 16
  %v3196 = vpop.permute.xlu0 %3195
  %3197 = vrot.lane.b32.xlu0 %v2660, 16
  %v3198 = vpop.permute.xlu0 %3197
  %3199 = vrot.lane.b32.xlu0 %v2661, 16
  %v3200 = vpop.permute.xlu0 %3199
  %3201 = vrot.lane.b32.xlu0 %v3138, 16
  %v3202 = vpop.permute.xlu0 %3201
  %vm3235 = vcmask 158848
  %3236 = vst.msk [vmem:[#allocation2] sm:$0xf] %vm3235, %v3140
  %3237 = vst.msk [vmem:[#allocation2 + $0x4] sm:$0xf] %vm3235, %v3142
  %3238 = vst.msk [vmem:[#allocation2 + $0x8] sm:$0xf] %vm3235, %v3144
  %3239 = vst.msk [vmem:[#allocation2 + $0xc] sm:$0xf] %vm3235, %v3146
  %3240 = vst.msk [vmem:[#allocation2 + $0x10] sm:$0xf] %vm3235, %v3148
  %3241 = vst.msk [vmem:[#allocation2 + $0x14] sm:$0xf] %vm3235, %v3150
  %3242 = vst.msk [vmem:[#allocation2 + $0x18] sm:$0xf] %vm3235, %v3152
  %3243 = vst.msk [vmem:[#allocation2 + $0x1c] sm:$0xf] %vm3235, %v3154
  %3244 = vst.msk [vmem:[#allocation2 + $0x20] sm:$0xf] %vm3235, %v3156
  %3245 = vst.msk [vmem:[#allocation2 + $0x24] sm:$0xf] %vm3235, %v3158
  %3246 = vst.msk [vmem:[#allocation2 + $0x28] sm:$0xf] %vm3235, %v3160
  %3247 = vst.msk [vmem:[#allocation2 + $0x2c] sm:$0xf] %vm3235, %v3162
  %3248 = vst.msk [vmem:[#allocation2 + $0x30] sm:$0xf] %vm3235, %v3164
  %3249 = vst.msk [vmem:[#allocation2 + $0x34] sm:$0xf] %vm3235, %v3166
  %3250 = vst.msk [vmem:[#allocation2 + $0x38] sm:$0xf] %vm3235, %v3168
  %3251 = vst.msk [vmem:[#allocation2 + $0x3c] sm:$0xf] %vm3235, %v3170
  %3252 = vst.msk [vmem:[#allocation2 + $0x40] sm:$0xf] %vm3235, %v3172
  %3253 = vst.msk [vmem:[#allocation2 + $0x44] sm:$0xf] %vm3235, %v3174
  %3254 = vst.msk [vmem:[#allocation2 + $0x48] sm:$0xf] %vm3235, %v3176
  %3255 = vst.msk [vmem:[#allocation2 + $0x4c] sm:$0xf] %vm3235, %v3178
  %3256 = vst.msk [vmem:[#allocation2 + $0x50] sm:$0xf] %vm3235, %v3180
  %3257 = vst.msk [vmem:[#allocation2 + $0x54] sm:$0xf] %vm3235, %v3182
  %3258 = vst.msk [vmem:[#allocation2 + $0x58] sm:$0xf] %vm3235, %v3184
  %3259 = vst.msk [vmem:[#allocation2 + $0x5c] sm:$0xf] %vm3235, %v3186
  %3260 = vst.msk [vmem:[#allocation2 + $0x60] sm:$0xf] %vm3235, %v3188
  %3261 = vst.msk [vmem:[#allocation2 + $0x64] sm:$0xf] %vm3235, %v3190
  %3262 = vst.msk [vmem:[#allocation2 + $0x68] sm:$0xf] %vm3235, %v3192
  %3263 = vst.msk [vmem:[#allocation2 + $0x6c] sm:$0xf] %vm3235, %v3194
  %3264 = vst.msk [vmem:[#allocation2 + $0x70] sm:$0xf] %vm3235, %v3196
  %3265 = vst.msk [vmem:[#allocation2 + $0x74] sm:$0xf] %vm3235, %v3198
  %3266 = vst.msk [vmem:[#allocation2 + $0x78] sm:$0xf] %vm3235, %v3200
  %3267 = vst.msk [vmem:[#allocation2 + $0x7c] sm:$0xf] %vm3235, %v3202
  %v3268 = vsel %vm2357, %v2981, %v2977
  %v3269 = vsel %vm2359, %v3132, %v3268
  %v3270 = vsel %vm2357, %v2993, %v2989
  %v3271 = vsel %vm2359, %v3136, %v3270
  %3272 = vrot.lane.b32.xlu0 %v2784, 20
  %v3273 = vpop.permute.xlu0 %3272
  %3274 = vrot.lane.b32.xlu0 %v2786, 20
  %v3275 = vpop.permute.xlu0 %3274
  %3276 = vrot.lane.b32.xlu0 %v2788, 20
  %v3277 = vpop.permute.xlu0 %3276
  %3278 = vrot.lane.b32.xlu0 %v2790, 20
  %v3279 = vpop.permute.xlu0 %3278
  %3280 = vrot.lane.b32.xlu0 %v2792, 20
  %v3281 = vpop.permute.xlu0 %3280
  %3282 = vrot.lane.b32.xlu0 %v2794, 20
  %v3283 = vpop.permute.xlu0 %3282
  %3284 = vrot.lane.b32.xlu0 %v2796, 20
  %v3285 = vpop.permute.xlu0 %3284
  %3286 = vrot.lane.b32.xlu0 %v2798, 20
  %v3287 = vpop.permute.xlu0 %3286
  %3288 = vrot.lane.b32.xlu0 %v2800, 20
  %v3289 = vpop.permute.xlu0 %3288
  %3290 = vrot.lane.b32.xlu0 %v2802, 20
  %v3291 = vpop.permute.xlu0 %3290
  %3292 = vrot.lane.b32.xlu0 %v2804, 20
  %v3293 = vpop.permute.xlu0 %3292
  %3294 = vrot.lane.b32.xlu0 %v2806, 20
  %v3295 = vpop.permute.xlu0 %3294
  %3296 = vrot.lane.b32.xlu0 %v2808, 20
  %v3297 = vpop.permute.xlu0 %3296
  %3298 = vrot.lane.b32.xlu0 %v2810, 20
  %v3299 = vpop.permute.xlu0 %3298
  %3300 = vrot.lane.b32.xlu0 %v2812, 20
  %v3301 = vpop.permute.xlu0 %3300
  %3302 = vrot.lane.b32.xlu0 %v3269, 20
  %v3303 = vpop.permute.xlu0 %3302
  %3304 = vrot.lane.b32.xlu0 %v2814, 20
  %v3305 = vpop.permute.xlu0 %3304
  %3306 = vrot.lane.b32.xlu0 %v2816, 20
  %v3307 = vpop.permute.xlu0 %3306
  %3308 = vrot.lane.b32.xlu0 %v2818, 20
  %v3309 = vpop.permute.xlu0 %3308
  %3310 = vrot.lane.b32.xlu0 %v2820, 20
  %v3311 = vpop.permute.xlu0 %3310
  %3312 = vrot.lane.b32.xlu0 %v2822, 20
  %v3313 = vpop.permute.xlu0 %3312
  %3314 = vrot.lane.b32.xlu0 %v2824, 20
  %v3315 = vpop.permute.xlu0 %3314
  %3316 = vrot.lane.b32.xlu0 %v2826, 20
  %v3317 = vpop.permute.xlu0 %3316
  %3318 = vrot.lane.b32.xlu0 %v2828, 20
  %v3319 = vpop.permute.xlu0 %3318
  %3320 = vrot.lane.b32.xlu0 %v2830, 20
  %v3321 = vpop.permute.xlu0 %3320
  %3322 = vrot.lane.b32.xlu0 %v2832, 20
  %v3323 = vpop.permute.xlu0 %3322
  %3324 = vrot.lane.b32.xlu0 %v2834, 20
  %v3325 = vpop.permute.xlu0 %3324
  %3326 = vrot.lane.b32.xlu0 %v2836, 20
  %v3327 = vpop.permute.xlu0 %3326
  %3328 = vrot.lane.b32.xlu0 %v2838, 20
  %v3329 = vpop.permute.xlu0 %3328
  %3330 = vrot.lane.b32.xlu0 %v2840, 20
  %v3331 = vpop.permute.xlu0 %3330
  %3332 = vrot.lane.b32.xlu0 %v2842, 20
  %v3333 = vpop.permute.xlu0 %3332
  %3334 = vrot.lane.b32.xlu0 %v3271, 20
  %v3335 = vpop.permute.xlu0 %3334
  %vm3368 = vcmask 190624
  %3369 = vst.msk [vmem:[#allocation2] sm:$0x7] %vm3368, %v3273
  %3370 = vst.msk [vmem:[#allocation2 + $0x4] sm:$0x7] %vm3368, %v3275
  %3371 = vst.msk [vmem:[#allocation2 + $0x8] sm:$0x7] %vm3368, %v3277
  %3372 = vst.msk [vmem:[#allocation2 + $0xc] sm:$0x7] %vm3368, %v3279
  %3373 = vst.msk [vmem:[#allocation2 + $0x10] sm:$0x7] %vm3368, %v3281
  %3374 = vst.msk [vmem:[#allocation2 + $0x14] sm:$0x7] %vm3368, %v3283
  %3375 = vst.msk [vmem:[#allocation2 + $0x18] sm:$0x7] %vm3368, %v3285
  %3376 = vst.msk [vmem:[#allocation2 + $0x1c] sm:$0x7] %vm3368, %v3287
  %3377 = vst.msk [vmem:[#allocation2 + $0x20] sm:$0x7] %vm3368, %v3289
  %3378 = vst.msk [vmem:[#allocation2 + $0x24] sm:$0x7] %vm3368, %v3291
  %3379 = vst.msk [vmem:[#allocation2 + $0x28] sm:$0x7] %vm3368, %v3293
  %3380 = vst.msk [vmem:[#allocation2 + $0x2c] sm:$0x7] %vm3368, %v3295
  %3381 = vst.msk [vmem:[#allocation2 + $0x30] sm:$0x7] %vm3368, %v3297
  %3382 = vst.msk [vmem:[#allocation2 + $0x34] sm:$0x7] %vm3368, %v3299
  %3383 = vst.msk [vmem:[#allocation2 + $0x38] sm:$0x7] %vm3368, %v3301
  %3384 = vst.msk [vmem:[#allocation2 + $0x3c] sm:$0x7] %vm3368, %v3303
  %3385 = vst.msk [vmem:[#allocation2 + $0x40] sm:$0x7] %vm3368, %v3305
  %3386 = vst.msk [vmem:[#allocation2 + $0x44] sm:$0x7] %vm3368, %v3307
  %3387 = vst.msk [vmem:[#allocation2 + $0x48] sm:$0x7] %vm3368, %v3309
  %3388 = vst.msk [vmem:[#allocation2 + $0x4c] sm:$0x7] %vm3368, %v3311
  %3389 = vst.msk [vmem:[#allocation2 + $0x50] sm:$0x7] %vm3368, %v3313
  %3390 = vst.msk [vmem:[#allocation2 + $0x54] sm:$0x7] %vm3368, %v3315
  %3391 = vst.msk [vmem:[#allocation2 + $0x58] sm:$0x7] %vm3368, %v3317
  %3392 = vst.msk [vmem:[#allocation2 + $0x5c] sm:$0x7] %vm3368, %v3319
  %3393 = vst.msk [vmem:[#allocation2 + $0x60] sm:$0x7] %vm3368, %v3321
  %3394 = vst.msk [vmem:[#allocation2 + $0x64] sm:$0x7] %vm3368, %v3323
  %3395 = vst.msk [vmem:[#allocation2 + $0x68] sm:$0x7] %vm3368, %v3325
  %3396 = vst.msk [vmem:[#allocation2 + $0x6c] sm:$0x7] %vm3368, %v3327
  %3397 = vst.msk [vmem:[#allocation2 + $0x70] sm:$0x7] %vm3368, %v3329
  %3398 = vst.msk [vmem:[#allocation2 + $0x74] sm:$0x7] %vm3368, %v3331
  %3399 = vst.msk [vmem:[#allocation2 + $0x78] sm:$0x7] %vm3368, %v3333
  %3400 = vst.msk [vmem:[#allocation2 + $0x7c] sm:$0x7] %vm3368, %v3335
  %3401 = vrot.lane.b32.xlu0 %v2362, 24
  %v3402 = vpop.permute.xlu0 %3401
  %3403 = vrot.lane.b32.xlu0 %v2364, 24
  %v3404 = vpop.permute.xlu0 %3403
  %3405 = vrot.lane.b32.xlu0 %v2366, 24
  %v3406 = vpop.permute.xlu0 %3405
  %3407 = vrot.lane.b32.xlu0 %v2368, 24
  %v3408 = vpop.permute.xlu0 %3407
  %3409 = vrot.lane.b32.xlu0 %v2370, 24
  %v3410 = vpop.permute.xlu0 %3409
  %3411 = vrot.lane.b32.xlu0 %v2372, 24
  %v3412 = vpop.permute.xlu0 %3411
  %3413 = vrot.lane.b32.xlu0 %v2374, 24
  %v3414 = vpop.permute.xlu0 %3413
  %3415 = vrot.lane.b32.xlu0 %v2376, 24
  %v3416 = vpop.permute.xlu0 %3415
  %3417 = vrot.lane.b32.xlu0 %v2378, 24
  %v3418 = vpop.permute.xlu0 %3417
  %3419 = vrot.lane.b32.xlu0 %v2380, 24
  %v3420 = vpop.permute.xlu0 %3419
  %3421 = vrot.lane.b32.xlu0 %v2382, 24
  %v3422 = vpop.permute.xlu0 %3421
  %3423 = vrot.lane.b32.xlu0 %v2384, 24
  %v3424 = vpop.permute.xlu0 %3423
  %3425 = vrot.lane.b32.xlu0 %v2386, 24
  %v3426 = vpop.permute.xlu0 %3425
  %3427 = vrot.lane.b32.xlu0 %v2388, 24
  %v3428 = vpop.permute.xlu0 %3427
  %3429 = vrot.lane.b32.xlu0 %v2995, 24
  %v3430 = vpop.permute.xlu0 %3429
  %3431 = vrot.lane.b32.xlu0 %v2392, 24
  %v3432 = vpop.permute.xlu0 %3431
  %3433 = vrot.lane.b32.xlu0 %v2394, 24
  %v3434 = vpop.permute.xlu0 %3433
  %3435 = vrot.lane.b32.xlu0 %v2396, 24
  %v3436 = vpop.permute.xlu0 %3435
  %3437 = vrot.lane.b32.xlu0 %v2398, 24
  %v3438 = vpop.permute.xlu0 %3437
  %3439 = vrot.lane.b32.xlu0 %v2400, 24
  %v3440 = vpop.permute.xlu0 %3439
  %3441 = vrot.lane.b32.xlu0 %v2402, 24
  %v3442 = vpop.permute.xlu0 %3441
  %3443 = vrot.lane.b32.xlu0 %v2404, 24
  %v3444 = vpop.permute.xlu0 %3443
  %3445 = vrot.lane.b32.xlu0 %v2406, 24
  %v3446 = vpop.permute.xlu0 %3445
  %3447 = vrot.lane.b32.xlu0 %v2408, 24
  %v3448 = vpop.permute.xlu0 %3447
  %3449 = vrot.lane.b32.xlu0 %v2410, 24
  %v3450 = vpop.permute.xlu0 %3449
  %3451 = vrot.lane.b32.xlu0 %v2412, 24
  %v3452 = vpop.permute.xlu0 %3451
  %3453 = vrot.lane.b32.xlu0 %v2414, 24
  %v3454 = vpop.permute.xlu0 %3453
  %3455 = vrot.lane.b32.xlu0 %v2416, 24
  %v3456 = vpop.permute.xlu0 %3455
  %3457 = vrot.lane.b32.xlu0 %v2418, 24
  %v3458 = vpop.permute.xlu0 %3457
  %3459 = vrot.lane.b32.xlu0 %v2997, 24
  %v3460 = vpop.permute.xlu0 %3459
  %vm3491 = vcmask 223424
  %3492 = vst.msk [vmem:[#allocation2 + $0x1] sm:$0x7] %vm3491, %v3402
  %3493 = vst.msk [vmem:[#allocation2 + $0x5] sm:$0x7] %vm3491, %v3404
  %3494 = vst.msk [vmem:[#allocation2 + $0x9] sm:$0x7] %vm3491, %v3406
  %3495 = vst.msk [vmem:[#allocation2 + $0xd] sm:$0x7] %vm3491, %v3408
  %3496 = vst.msk [vmem:[#allocation2 + $0x11] sm:$0x7] %vm3491, %v3410
  %3497 = vst.msk [vmem:[#allocation2 + $0x15] sm:$0x7] %vm3491, %v3412
  %3498 = vst.msk [vmem:[#allocation2 + $0x19] sm:$0x7] %vm3491, %v3414
  %3499 = vst.msk [vmem:[#allocation2 + $0x1d] sm:$0x7] %vm3491, %v3416
  %3500 = vst.msk [vmem:[#allocation2 + $0x21] sm:$0x7] %vm3491, %v3418
  %3501 = vst.msk [vmem:[#allocation2 + $0x25] sm:$0x7] %vm3491, %v3420
  %3502 = vst.msk [vmem:[#allocation2 + $0x29] sm:$0x7] %vm3491, %v3422
  %3503 = vst.msk [vmem:[#allocation2 + $0x2d] sm:$0x7] %vm3491, %v3424
  %3504 = vst.msk [vmem:[#allocation2 + $0x31] sm:$0x7] %vm3491, %v3426
  %3505 = vst.msk [vmem:[#allocation2 + $0x35] sm:$0x7] %vm3491, %v3428
  %3506 = vst.msk [vmem:[#allocation2 + $0x39] sm:$0x7] %vm3491, %v3430
  %3507 = vst.msk [vmem:[#allocation2 + $0x41] sm:$0x7] %vm3491, %v3432
  %3508 = vst.msk [vmem:[#allocation2 + $0x45] sm:$0x7] %vm3491, %v3434
  %3509 = vst.msk [vmem:[#allocation2 + $0x49] sm:$0x7] %vm3491, %v3436
  %3510 = vst.msk [vmem:[#allocation2 + $0x4d] sm:$0x7] %vm3491, %v3438
  %3511 = vst.msk [vmem:[#allocation2 + $0x51] sm:$0x7] %vm3491, %v3440
  %3512 = vst.msk [vmem:[#allocation2 + $0x55] sm:$0x7] %vm3491, %v3442
  %3513 = vst.msk [vmem:[#allocation2 + $0x59] sm:$0x7] %vm3491, %v3444
  %3514 = vst.msk [vmem:[#allocation2 + $0x5d] sm:$0x7] %vm3491, %v3446
  %3515 = vst.msk [vmem:[#allocation2 + $0x61] sm:$0x7] %vm3491, %v3448
  %3516 = vst.msk [vmem:[#allocation2 + $0x65] sm:$0x7] %vm3491, %v3450
  %3517 = vst.msk [vmem:[#allocation2 + $0x69] sm:$0x7] %vm3491, %v3452
  %3518 = vst.msk [vmem:[#allocation2 + $0x6d] sm:$0x7] %vm3491, %v3454
  %3519 = vst.msk [vmem:[#allocation2 + $0x71] sm:$0x7] %vm3491, %v3456
  %3520 = vst.msk [vmem:[#allocation2 + $0x75] sm:$0x7] %vm3491, %v3458
  %3521 = vst.msk [vmem:[#allocation2 + $0x79] sm:$0x7] %vm3491, %v3460
  %3522 = vrot.lane.b32.xlu0 %v2633, 28
  %v3523 = vpop.permute.xlu0 %3522
  %3524 = vrot.lane.b32.xlu0 %v2634, 28
  %v3525 = vpop.permute.xlu0 %3524
  %3526 = vrot.lane.b32.xlu0 %v2635, 28
  %v3527 = vpop.permute.xlu0 %3526
  %3528 = vrot.lane.b32.xlu0 %v2636, 28
  %v3529 = vpop.permute.xlu0 %3528
  %3530 = vrot.lane.b32.xlu0 %v2637, 28
  %v3531 = vpop.permute.xlu0 %3530
  %3532 = vrot.lane.b32.xlu0 %v2638, 28
  %v3533 = vpop.permute.xlu0 %3532
  %3534 = vrot.lane.b32.xlu0 %v2639, 28
  %v3535 = vpop.permute.xlu0 %3534
  %3536 = vrot.lane.b32.xlu0 %v2640, 28
  %v3537 = vpop.permute.xlu0 %3536
  %3538 = vrot.lane.b32.xlu0 %v2641, 28
  %v3539 = vpop.permute.xlu0 %3538
  %3540 = vrot.lane.b32.xlu0 %v2642, 28
  %v3541 = vpop.permute.xlu0 %3540
  %3542 = vrot.lane.b32.xlu0 %v2643, 28
  %v3543 = vpop.permute.xlu0 %3542
  %3544 = vrot.lane.b32.xlu0 %v2644, 28
  %v3545 = vpop.permute.xlu0 %3544
  %3546 = vrot.lane.b32.xlu0 %v2645, 28
  %v3547 = vpop.permute.xlu0 %3546
  %3548 = vrot.lane.b32.xlu0 %v2646, 28
  %v3549 = vpop.permute.xlu0 %3548
  %3550 = vrot.lane.b32.xlu0 %v3137, 28
  %v3551 = vpop.permute.xlu0 %3550
  %3552 = vrot.lane.b32.xlu0 %v2648, 28
  %v3553 = vpop.permute.xlu0 %3552
  %3554 = vrot.lane.b32.xlu0 %v2649, 28
  %v3555 = vpop.permute.xlu0 %3554
  %3556 = vrot.lane.b32.xlu0 %v2650, 28
  %v3557 = vpop.permute.xlu0 %3556
  %3558 = vrot.lane.b32.xlu0 %v2651, 28
  %v3559 = vpop.permute.xlu0 %3558
  %3560 = vrot.lane.b32.xlu0 %v2652, 28
  %v3561 = vpop.permute.xlu0 %3560
  %3562 = vrot.lane.b32.xlu0 %v2653, 28
  %v3563 = vpop.permute.xlu0 %3562
  %3564 = vrot.lane.b32.xlu0 %v2654, 28
  %v3565 = vpop.permute.xlu0 %3564
  %3566 = vrot.lane.b32.xlu0 %v2655, 28
  %v3567 = vpop.permute.xlu0 %3566
  %3568 = vrot.lane.b32.xlu0 %v2656, 28
  %v3569 = vpop.permute.xlu0 %3568
  %3570 = vrot.lane.b32.xlu0 %v2657, 28
  %v3571 = vpop.permute.xlu0 %3570
  %3572 = vrot.lane.b32.xlu0 %v2658, 28
  %v3573 = vpop.permute.xlu0 %3572
  %3574 = vrot.lane.b32.xlu0 %v2659, 28
  %v3575 = vpop.permute.xlu0 %3574
  %3576 = vrot.lane.b32.xlu0 %v2660, 28
  %v3577 = vpop.permute.xlu0 %3576
  %3578 = vrot.lane.b32.xlu0 %v2661, 28
  %v3579 = vpop.permute.xlu0 %3578
  %3580 = vrot.lane.b32.xlu0 %v3138, 28
  %v3581 = vpop.permute.xlu0 %3580
  %vm3612 = vcmask 257248
  %3613 = vst.msk [vmem:[#allocation2] sm:$0xf] %vm3612, %v3523
  %3614 = vst.msk [vmem:[#allocation2 + $0x4] sm:$0xf] %vm3612, %v3525
  %3615 = vst.msk [vmem:[#allocation2 + $0x8] sm:$0xf] %vm3612, %v3527
  %3616 = vst.msk [vmem:[#allocation2 + $0xc] sm:$0xf] %vm3612, %v3529
  %3617 = vst.msk [vmem:[#allocation2 + $0x10] sm:$0xf] %vm3612, %v3531
  %3618 = vst.msk [vmem:[#allocation2 + $0x14] sm:$0xf] %vm3612, %v3533
  %3619 = vst.msk [vmem:[#allocation2 + $0x18] sm:$0xf] %vm3612, %v3535
  %3620 = vst.msk [vmem:[#allocation2 + $0x1c] sm:$0xf] %vm3612, %v3537
  %3621 = vst.msk [vmem:[#allocation2 + $0x20] sm:$0xf] %vm3612, %v3539
  %3622 = vst.msk [vmem:[#allocation2 + $0x24] sm:$0xf] %vm3612, %v3541
  %3623 = vst.msk [vmem:[#allocation2 + $0x28] sm:$0xf] %vm3612, %v3543
  %3624 = vst.msk [vmem:[#allocation2 + $0x2c] sm:$0xf] %vm3612, %v3545
  %3625 = vst.msk [vmem:[#allocation2 + $0x30] sm:$0xf] %vm3612, %v3547
  %3626 = vst.msk [vmem:[#allocation2 + $0x34] sm:$0xf] %vm3612, %v3549
  %3627 = vst.msk [vmem:[#allocation2 + $0x38] sm:$0xf] %vm3612, %v3551
  %3628 = vst.msk [vmem:[#allocation2 + $0x40] sm:$0xf] %vm3612, %v3553
  %3629 = vst.msk [vmem:[#allocation2 + $0x44] sm:$0xf] %vm3612, %v3555
  %3630 = vst.msk [vmem:[#allocation2 + $0x48] sm:$0xf] %vm3612, %v3557
  %3631 = vst.msk [vmem:[#allocation2 + $0x4c] sm:$0xf] %vm3612, %v3559
  %3632 = vst.msk [vmem:[#allocation2 + $0x50] sm:$0xf] %vm3612, %v3561
  %3633 = vst.msk [vmem:[#allocation2 + $0x54] sm:$0xf] %vm3612, %v3563
  %3634 = vst.msk [vmem:[#allocation2 + $0x58] sm:$0xf] %vm3612, %v3565
  %3635 = vst.msk [vmem:[#allocation2 + $0x5c] sm:$0xf] %vm3612, %v3567
  %3636 = vst.msk [vmem:[#allocation2 + $0x60] sm:$0xf] %vm3612, %v3569
  %3637 = vst.msk [vmem:[#allocation2 + $0x64] sm:$0xf] %vm3612, %v3571
  %3638 = vst.msk [vmem:[#allocation2 + $0x68] sm:$0xf] %vm3612, %v3573
  %3639 = vst.msk [vmem:[#allocation2 + $0x6c] sm:$0xf] %vm3612, %v3575
  %3640 = vst.msk [vmem:[#allocation2 + $0x70] sm:$0xf] %vm3612, %v3577
  %3641 = vst.msk [vmem:[#allocation2 + $0x74] sm:$0xf] %vm3612, %v3579
  %3642 = vst.msk [vmem:[#allocation2 + $0x78] sm:$0xf] %vm3612, %v3581
  %3643 = vrot.lane.b32.xlu0 %v2786, 32
  %v3644 = vpop.permute.xlu0 %3643
  %3645 = vrot.lane.b32.xlu0 %v2788, 32
  %v3646 = vpop.permute.xlu0 %3645
  %3647 = vrot.lane.b32.xlu0 %v2790, 32
  %v3648 = vpop.permute.xlu0 %3647
  %3649 = vrot.lane.b32.xlu0 %v2792, 32
  %v3650 = vpop.permute.xlu0 %3649
  %3651 = vrot.lane.b32.xlu0 %v2794, 32
  %v3652 = vpop.permute.xlu0 %3651
  %3653 = vrot.lane.b32.xlu0 %v2796, 32
  %v3654 = vpop.permute.xlu0 %3653
  %3655 = vrot.lane.b32.xlu0 %v2798, 32
  %v3656 = vpop.permute.xlu0 %3655
  %3657 = vrot.lane.b32.xlu0 %v2800, 32
  %v3658 = vpop.permute.xlu0 %3657
  %3659 = vrot.lane.b32.xlu0 %v2802, 32
  %v3660 = vpop.permute.xlu0 %3659
  %3661 = vrot.lane.b32.xlu0 %v2804, 32
  %v3662 = vpop.permute.xlu0 %3661
  %3663 = vrot.lane.b32.xlu0 %v2806, 32
  %v3664 = vpop.permute.xlu0 %3663
  %3665 = vrot.lane.b32.xlu0 %v2808, 32
  %v3666 = vpop.permute.xlu0 %3665
  %3667 = vrot.lane.b32.xlu0 %v2810, 32
  %v3668 = vpop.permute.xlu0 %3667
  %3669 = vrot.lane.b32.xlu0 %v2812, 32
  %v3670 = vpop.permute.xlu0 %3669
  %3671 = vrot.lane.b32.xlu0 %v3269, 32
  %v3672 = vpop.permute.xlu0 %3671
  %3673 = vrot.lane.b32.xlu0 %v2816, 32
  %v3674 = vpop.permute.xlu0 %3673
  %3675 = vrot.lane.b32.xlu0 %v2818, 32
  %v3676 = vpop.permute.xlu0 %3675
  %3677 = vrot.lane.b32.xlu0 %v2820, 32
  %v3678 = vpop.permute.xlu0 %3677
  %3679 = vrot.lane.b32.xlu0 %v2822, 32
  %v3680 = vpop.permute.xlu0 %3679
  %3681 = vrot.lane.b32.xlu0 %v2824, 32
  %v3682 = vpop.permute.xlu0 %3681
  %3683 = vrot.lane.b32.xlu0 %v2826, 32
  %v3684 = vpop.permute.xlu0 %3683
  %3685 = vrot.lane.b32.xlu0 %v2828, 32
  %v3686 = vpop.permute.xlu0 %3685
  %3687 = vrot.lane.b32.xlu0 %v2830, 32
  %v3688 = vpop.permute.xlu0 %3687
  %3689 = vrot.lane.b32.xlu0 %v2832, 32
  %v3690 = vpop.permute.xlu0 %3689
  %3691 = vrot.lane.b32.xlu0 %v2834, 32
  %v3692 = vpop.permute.xlu0 %3691
  %3693 = vrot.lane.b32.xlu0 %v2836, 32
  %v3694 = vpop.permute.xlu0 %3693
  %3695 = vrot.lane.b32.xlu0 %v2838, 32
  %v3696 = vpop.permute.xlu0 %3695
  %3697 = vrot.lane.b32.xlu0 %v2840, 32
  %v3698 = vpop.permute.xlu0 %3697
  %3699 = vrot.lane.b32.xlu0 %v2842, 32
  %v3700 = vpop.permute.xlu0 %3699
  %3701 = vrot.lane.b32.xlu0 %v3271, 32
  %v3702 = vpop.permute.xlu0 %3701
  %vm3733 = vcmask 289024
  %3734 = vst.msk [vmem:[#allocation2] sm:$0x7] %vm3733, %v3644
  %3735 = vst.msk [vmem:[#allocation2 + $0x4] sm:$0x7] %vm3733, %v3646
  %3736 = vst.msk [vmem:[#allocation2 + $0x8] sm:$0x7] %vm3733, %v3648
  %3737 = vst.msk [vmem:[#allocation2 + $0xc] sm:$0x7] %vm3733, %v3650
  %3738 = vst.msk [vmem:[#allocation2 + $0x10] sm:$0x7] %vm3733, %v3652
  %3739 = vst.msk [vmem:[#allocation2 + $0x14] sm:$0x7] %vm3733, %v3654
  %3740 = vst.msk [vmem:[#allocation2 + $0x18] sm:$0x7] %vm3733, %v3656
  %3741 = vst.msk [vmem:[#allocation2 + $0x1c] sm:$0x7] %vm3733, %v3658
  %3742 = vst.msk [vmem:[#allocation2 + $0x20] sm:$0x7] %vm3733, %v3660
  %3743 = vst.msk [vmem:[#allocation2 + $0x24] sm:$0x7] %vm3733, %v3662
  %3744 = vst.msk [vmem:[#allocation2 + $0x28] sm:$0x7] %vm3733, %v3664
  %3745 = vst.msk [vmem:[#allocation2 + $0x2c] sm:$0x7] %vm3733, %v3666
  %3746 = vst.msk [vmem:[#allocation2 + $0x30] sm:$0x7] %vm3733, %v3668
  %3747 = vst.msk [vmem:[#allocation2 + $0x34] sm:$0x7] %vm3733, %v3670
  %3748 = vst.msk [vmem:[#allocation2 + $0x38] sm:$0x7] %vm3733, %v3672
  %3749 = vst.msk [vmem:[#allocation2 + $0x40] sm:$0x7] %vm3733, %v3674
  %3750 = vst.msk [vmem:[#allocation2 + $0x44] sm:$0x7] %vm3733, %v3676
  %3751 = vst.msk [vmem:[#allocation2 + $0x48] sm:$0x7] %vm3733, %v3678
  %3752 = vst.msk [vmem:[#allocation2 + $0x4c] sm:$0x7] %vm3733, %v3680
  %3753 = vst.msk [vmem:[#allocation2 + $0x50] sm:$0x7] %vm3733, %v3682
  %3754 = vst.msk [vmem:[#allocation2 + $0x54] sm:$0x7] %vm3733, %v3684
  %3755 = vst.msk [vmem:[#allocation2 + $0x58] sm:$0x7] %vm3733, %v3686
  %3756 = vst.msk [vmem:[#allocation2 + $0x5c] sm:$0x7] %vm3733, %v3688
  %3757 = vst.msk [vmem:[#allocation2 + $0x60] sm:$0x7] %vm3733, %v3690
  %3758 = vst.msk [vmem:[#allocation2 + $0x64] sm:$0x7] %vm3733, %v3692
  %3759 = vst.msk [vmem:[#allocation2 + $0x68] sm:$0x7] %vm3733, %v3694
  %3760 = vst.msk [vmem:[#allocation2 + $0x6c] sm:$0x7] %vm3733, %v3696
  %3761 = vst.msk [vmem:[#allocation2 + $0x70] sm:$0x7] %vm3733, %v3698
  %3762 = vst.msk [vmem:[#allocation2 + $0x74] sm:$0x7] %vm3733, %v3700
  %3763 = vst.msk [vmem:[#allocation2 + $0x78] sm:$0x7] %vm3733, %v3702
  %v3764 = vld [vmem:[#allocation2] sm:$0xf]
  %v3765 = vld [vmem:[#allocation2 + $0x4] sm:$0xf]
  %v3766 = vld [vmem:[#allocation2 + $0x8] sm:$0xf]
  %v3767 = vld [vmem:[#allocation2 + $0xc] sm:$0xf]
  %v3768 = vld [vmem:[#allocation2 + $0x10] sm:$0xf]
  %v3769 = vld [vmem:[#allocation2 + $0x14] sm:$0xf]
  %v3770 = vld [vmem:[#allocation2 + $0x18] sm:$0xf]
  %v3771 = vld [vmem:[#allocation2 + $0x1c] sm:$0xf]
  %v3772 = vld [vmem:[#allocation2 + $0x20] sm:$0xf]
  %v3773 = vld [vmem:[#allocation2 + $0x24] sm:$0xf]
  %v3774 = vld [vmem:[#allocation2 + $0x28] sm:$0xf]
  %v3775 = vld [vmem:[#allocation2 + $0x2c] sm:$0xf]
  %v3776 = vld [vmem:[#allocation2 + $0x30] sm:$0xf]
  %v3777 = vld [vmem:[#allocation2 + $0x34] sm:$0xf]
  %v3778 = vld [vmem:[#allocation2 + $0x38] sm:$0xf]
  %v3779 = vld [vmem:[#allocation2 + $0x3c] sm:$0xf]
  %v3780 = vld [vmem:[#allocation2 + $0x40] sm:$0xf]
  %v3781 = vld [vmem:[#allocation2 + $0x44] sm:$0xf]
  %v3782 = vld [vmem:[#allocation2 + $0x48] sm:$0xf]
  %v3783 = vld [vmem:[#allocation2 + $0x4c] sm:$0xf]
  %v3784 = vld [vmem:[#allocation2 + $0x50] sm:$0xf]
  %v3785 = vld [vmem:[#allocation2 + $0x54] sm:$0xf]
  %v3786 = vld [vmem:[#allocation2 + $0x58] sm:$0xf]
  %v3787 = vld [vmem:[#allocation2 + $0x5c] sm:$0xf]
  %v3788 = vld [vmem:[#allocation2 + $0x60] sm:$0xf]
  %v3789 = vld [vmem:[#allocation2 + $0x64] sm:$0xf]
  %v3790 = vld [vmem:[#allocation2 + $0x68] sm:$0xf]
  %v3791 = vld [vmem:[#allocation2 + $0x6c] sm:$0xf]
  %v3792 = vld [vmem:[#allocation2 + $0x70] sm:$0xf]
  %v3793 = vld [vmem:[#allocation2 + $0x74] sm:$0xf]
  %v3794 = vld [vmem:[#allocation2 + $0x78] sm:$0xf]
  %v3795 = vld [vmem:[#allocation2 + $0x7c] sm:$0xf]
  %v3828 = vcombine.low %v3764, %v3765
  %v3829 = vcombine.low %v3766, %v3767
  %v3830 = vcombine.low %v3768, %v3769
  %v3831 = vcombine.low %v3770, %v3771
  %v3832 = vcombine.low %v3772, %v3773
  %v3833 = vcombine.low %v3774, %v3775
  %v3834 = vcombine.low %v3776, %v3777
  %v3835 = vcombine.low %v3778, %v3779
  %v3836 = vcombine.low %v3780, %v3781
  %v3837 = vcombine.low %v3782, %v3783
  %v3838 = vcombine.low %v3784, %v3785
  %v3839 = vcombine.low %v3786, %v3787
  %v3840 = vcombine.low %v3788, %v3789
  %v3841 = vcombine.low %v3790, %v3791
  %v3842 = vcombine.low %v3792, %v3793
  %v3843 = vcombine.low %v3794, %v3795
  %v3860 = vpack.c.bf16 %v3829, %v3828
  %v3861 = vpack.c.bf16 %v3831, %v3830
  %v3862 = vpack.c.bf16 %v3833, %v3832
  %v3863 = vpack.c.bf16 %v3835, %v3834
  %v3864 = vpack.c.bf16 %v3837, %v3836
  %v3865 = vpack.c.bf16 %v3839, %v3838
  %v3866 = vpack.c.bf16 %v3841, %v3840
  %v3867 = vpack.c.bf16 %v3843, %v3842
  %v3868 = vld [vmem:[%s3] sm:$0xf]
  %v3869 = vld [vmem:[%s3 + $0x4] sm:$0xf]
  %v3870 = vld [vmem:[%s3 + $0x8] sm:$0xf]
  %v3871 = vld [vmem:[%s3 + $0xc] sm:$0xf]
  %v3872 = vld [vmem:[%s3 + $0x10] sm:$0x3]
  %v3878 = vunpack.c.l.b16 %v3868
  %v3879 = vunpack.c.l.b16 %v3869
  %v3880 = vunpack.c.l.b16 %v3870
  %v3881 = vunpack.c.l.b16 %v3871
  %v3882 = vunpack.c.l.b16 %v3872
  %v3883 = vpack.c.b16 %v3879, %v3878
  %v3884 = vpack.c.b16 %v3881, %v3880
  %v3885 = vpack.c.b16 %v3882, %v3882
  %vm3888 = vcmask 293888
  %v3890 = vsel %vm3888, %v3860, 0
  %v3893 = vsel %vm3888, %v3861, 0
  %v3896 = vsel %vm3888, %v3862, 0
  %v3899 = vsel %vm3888, %v3863, 0
  %v3902 = vsel %vm3888, %v3864, 0
  %v3905 = vsel %vm3888, %v3865, 0
  %v3908 = vsel %vm3888, %v3866, 0
  %v3911 = vsel %vm3888, %v3867, 0
  %vm3913 = vcmask 1041408
  %v3915 = vsel %vm3913, %v3885, 0
  %3917 = vmatprep.subr.bf16.mxu0 0
  %3918 = vmatpush1.bf16.msra.mxu0 0
  %3919 = vmatprep.subr.bf16.mxu0 0
  %3920 = vmatpush1.bf16.msra.mxu0 0
  %3921 = vmatprep.subr.bf16.mxu0 0
  %3922 = vmatpush1.bf16.msra.mxu0 0
  %3923 = vmatprep.subr.bf16.mxu0 0
  %3924 = vmatpush1.bf16.msra.mxu0 0
  %3925 = vmatprep.subr.bf16.mxu0 0
  %3926 = vmatpush1.bf16.msra.mxu0 0
  %3927 = vmatprep.subr.bf16.mxu0 0
  %3928 = vmatpush1.bf16.msra.mxu0 %v3915
  %3929 = vmatprep.subr.bf16.mxu0 0
  %3930 = vmatpush1.bf16.msra.mxu0 %v3884
  %3931 = vmatprep.subr.bf16.mxu0 0
  %3932 = vmatpush1.bf16.msra.mxu0 %v3883
  %3933 = vmatprep.subr.bf16.mxu0 0
  %3934 = vmatpush2.bf16.msra.mxu0 0
  %3935 = vmatprep.subr.bf16.mxu0 0
  %3936 = vmatpush2.bf16.msra.mxu0 0
  %3937 = vmatprep.subr.bf16.mxu0 0
  %3938 = vmatpush2.bf16.msra.mxu0 0
  %3939 = vmatprep.subr.bf16.mxu0 0
  %3940 = vmatpush2.bf16.msra.mxu0 0
  %3941 = vmatprep.subr.bf16.mxu0 0
  %3942 = vmatpush2.bf16.msra.mxu0 0
  %3943 = vmatprep.subr.bf16.mxu0 0
  %3944 = vmatpush2.bf16.msra.mxu0 0
  %3945 = vmatprep.subr.bf16.mxu0 0
  %3946 = vmatpush2.bf16.msra.mxu0 0
  %3947 = vmatprep.subr.bf16.mxu0 0
  %3948 = vmatpush2.bf16.msra.mxu0 0
  %3949 = vmatprep.mubr.bf16.mxu0 0
  %3950 = vmatmul.mubr.bf16.gmra.mxu0 %v3890
  %v3951 = vpop.f32.mrf.mxu0
  %v3952 = vadd.f32 0.0, %v3951
  %v3953 = vpop.f32.mrf.mxu0
  %v3954 = vpop.f32.mrf.mxu0
  %v3955 = vadd.f32 0.0, %v3954
  %v3956 = vpop.f32.mrf.mxu0
  %3957 = vmatprep.mubr.bf16.mxu0 0
  %3958 = vmatmul.mubr.bf16.gmra.mxu0 %v3893
  %v3959 = vpop.f32.mrf.mxu0
  %v3960 = vadd.f32 0.0, %v3959
  %v3961 = vpop.f32.mrf.mxu0
  %v3962 = vpop.f32.mrf.mxu0
  %v3963 = vadd.f32 0.0, %v3962
  %v3964 = vpop.f32.mrf.mxu0
  %3965 = vmatprep.mubr.bf16.mxu0 0
  %3966 = vmatmul.mubr.bf16.gmra.mxu0 %v3896
  %v3967 = vpop.f32.mrf.mxu0
  %v3968 = vadd.f32 0.0, %v3967
  %v3969 = vpop.f32.mrf.mxu0
  %v3970 = vpop.f32.mrf.mxu0
  %v3971 = vadd.f32 0.0, %v3970
  %v3972 = vpop.f32.mrf.mxu0
  %3973 = vmatprep.mubr.bf16.mxu0 0
  %3974 = vmatmul.mubr.bf16.gmra.mxu0 %v3899
  %v3975 = vpop.f32.mrf.mxu0
  %v3976 = vadd.f32 0.0, %v3975
  %v3977 = vpop.f32.mrf.mxu0
  %v3978 = vpop.f32.mrf.mxu0
  %v3979 = vadd.f32 0.0, %v3978
  %v3980 = vpop.f32.mrf.mxu0
  %3981 = vmatprep.mubr.bf16.mxu0 0
  %3982 = vmatmul.mubr.bf16.gmra.mxu0 %v3902
  %v3983 = vpop.f32.mrf.mxu0
  %v3984 = vadd.f32 0.0, %v3983
  %v3985 = vpop.f32.mrf.mxu0
  %v3986 = vpop.f32.mrf.mxu0
  %v3987 = vadd.f32 0.0, %v3986
  %v3988 = vpop.f32.mrf.mxu0
  %3989 = vmatprep.mubr.bf16.mxu0 0
  %3990 = vmatmul.mubr.bf16.gmra.mxu0 %v3905
  %v3991 = vpop.f32.mrf.mxu0
  %v3992 = vadd.f32 0.0, %v3991
  %v3993 = vpop.f32.mrf.mxu0
  %v3994 = vpop.f32.mrf.mxu0
  %v3995 = vadd.f32 0.0, %v3994
  %v3996 = vpop.f32.mrf.mxu0
  %3997 = vmatprep.mubr.bf16.mxu0 0
  %3998 = vmatmul.mubr.bf16.gmra.mxu0 %v3908
  %v3999 = vpop.f32.mrf.mxu0
  %v4000 = vadd.f32 0.0, %v3999
  %v4001 = vpop.f32.mrf.mxu0
  %v4002 = vpop.f32.mrf.mxu0
  %v4003 = vadd.f32 0.0, %v4002
  %v4004 = vpop.f32.mrf.mxu0
  %4005 = vmatprep.mubr.bf16.mxu0 0
  %4006 = vmatmul.mubr.bf16.gmra.mxu0 %v3911
  %v4007 = vpop.f32.mrf.mxu0
  %v4008 = vadd.f32 0.0, %v4007
  %v4009 = vpop.f32.mrf.mxu0
  %v4010 = vpop.f32.mrf.mxu0
  %v4011 = vadd.f32 0.0, %v4010
  %v4012 = vpop.f32.mrf.mxu0
  %4013 = vdwg.mxu0
  %v4014 = vld [vmem:[%s4] sm:$0x1]
  %v4016 = vlaneseq
  %v4017 = vshrl.u32 %v4016, 7
  %v4018 = vsub.s32 0, %v4017
  %v4019 = vrot.slane %v4014, %v4018
  %v4021 = vmul.f32 %v3952, %v4019
  %v4022 = vmul.f32 %v3955, %v4019
  %v4023 = vmul.f32 %v3960, %v4019
  %v4024 = vmul.f32 %v3963, %v4019
  %v4025 = vmul.f32 %v3968, %v4019
  %v4026 = vmul.f32 %v3971, %v4019
  %v4027 = vmul.f32 %v3976, %v4019
  %v4028 = vmul.f32 %v3979, %v4019
  %v4029 = vmul.f32 %v3984, %v4019
  %v4030 = vmul.f32 %v3987, %v4019
  %v4031 = vmul.f32 %v3992, %v4019
  %v4032 = vmul.f32 %v3995, %v4019
  %v4033 = vmul.f32 %v4000, %v4019
  %v4034 = vmul.f32 %v4003, %v4019
  %v4035 = vmul.f32 %v4008, %v4019
  %v4036 = vmul.f32 %v4011, %v4019
  %v4037 = vld [vmem:[%s5] sm:$0x1]
  %v4039 = vlaneseq
  %v4040 = vshrl.u32 %v4039, 7
  %v4041 = vsub.s32 0, %v4040
  %v4042 = vrot.slane %v4037, %v4041
  %v4044 = vadd.f32 %v4021, %v4042
  %v4045 = vadd.f32 %v4022, %v4042
  %v4046 = vadd.f32 %v4023, %v4042
  %v4047 = vadd.f32 %v4024, %v4042
  %v4048 = vadd.f32 %v4025, %v4042
  %v4049 = vadd.f32 %v4026, %v4042
  %v4050 = vadd.f32 %v4027, %v4042
  %v4051 = vadd.f32 %v4028, %v4042
  %v4052 = vadd.f32 %v4029, %v4042
  %v4053 = vadd.f32 %v4030, %v4042
  %v4054 = vadd.f32 %v4031, %v4042
  %v4055 = vadd.f32 %v4032, %v4042
  %v4056 = vadd.f32 %v4033, %v4042
  %v4057 = vadd.f32 %v4034, %v4042
  %v4058 = vadd.f32 %v4035, %v4042
  %v4059 = vadd.f32 %v4036, %v4042
  %vm4060 = vcmp.ge.f32.partialorder %v4044, 0.0
  %vm4061 = vcmp.ge.f32.partialorder %v4045, 0.0
  %vm4062 = vcmp.ge.f32.partialorder %v4046, 0.0
  %vm4063 = vcmp.ge.f32.partialorder %v4047, 0.0
  %vm4064 = vcmp.ge.f32.partialorder %v4048, 0.0
  %vm4065 = vcmp.ge.f32.partialorder %v4049, 0.0
  %vm4066 = vcmp.ge.f32.partialorder %v4050, 0.0
  %vm4067 = vcmp.ge.f32.partialorder %v4051, 0.0
  %vm4068 = vcmp.ge.f32.partialorder %v4052, 0.0
  %vm4069 = vcmp.ge.f32.partialorder %v4053, 0.0
  %vm4070 = vcmp.ge.f32.partialorder %v4054, 0.0
  %vm4071 = vcmp.ge.f32.partialorder %v4055, 0.0
  %vm4072 = vcmp.ge.f32.partialorder %v4056, 0.0
  %vm4073 = vcmp.ge.f32.partialorder %v4057, 0.0
  %vm4074 = vcmp.ge.f32.partialorder %v4058, 0.0
  %vm4075 = vcmp.ge.f32.partialorder %v4059, 0.0
  %v4076 = vmul.f32 %v4044, 0.01
  %v4077 = vmul.f32 %v4045, 0.01
  %v4078 = vmul.f32 %v4046, 0.01
  %v4079 = vmul.f32 %v4047, 0.01
  %v4080 = vmul.f32 %v4048, 0.01
  %v4081 = vmul.f32 %v4049, 0.01
  %v4082 = vmul.f32 %v4050, 0.01
  %v4083 = vmul.f32 %v4051, 0.01
  %v4084 = vmul.f32 %v4052, 0.01
  %v4085 = vmul.f32 %v4053, 0.01
  %v4086 = vmul.f32 %v4054, 0.01
  %v4087 = vmul.f32 %v4055, 0.01
  %v4088 = vmul.f32 %v4056, 0.01
  %v4089 = vmul.f32 %v4057, 0.01
  %v4090 = vmul.f32 %v4058, 0.01
  %v4091 = vmul.f32 %v4059, 0.01
  %v4092 = vsel %vm4060, %v4044, %v4076
  %v4093 = vsel %vm4061, %v4045, %v4077
  %v4094 = vsel %vm4062, %v4046, %v4078
  %v4095 = vsel %vm4063, %v4047, %v4079
  %v4096 = vsel %vm4064, %v4048, %v4080
  %v4097 = vsel %vm4065, %v4049, %v4081
  %v4098 = vsel %vm4066, %v4050, %v4082
  %v4099 = vsel %vm4067, %v4051, %v4083
  %v4100 = vsel %vm4068, %v4052, %v4084
  %v4101 = vsel %vm4069, %v4053, %v4085
  %v4102 = vsel %vm4070, %v4054, %v4086
  %v4103 = vsel %vm4071, %v4055, %v4087
  %v4104 = vsel %vm4072, %v4056, %v4088
  %v4105 = vsel %vm4073, %v4057, %v4089
  %v4106 = vsel %vm4074, %v4058, %v4090
  %v4107 = vsel %vm4075, %v4059, %v4091
  %v4124 = vcombine.high %v4092, %v4092
  %v4125 = vcombine.high %v4093, %v4093
  %v4126 = vcombine.high %v4094, %v4094
  %v4127 = vcombine.high %v4095, %v4095
  %v4128 = vcombine.high %v4096, %v4096
  %v4129 = vcombine.high %v4097, %v4097
  %v4130 = vcombine.high %v4098, %v4098
  %v4131 = vcombine.high %v4099, %v4099
  %v4132 = vcombine.high %v4100, %v4100
  %v4133 = vcombine.high %v4101, %v4101
  %v4134 = vcombine.high %v4102, %v4102
  %v4135 = vcombine.high %v4103, %v4103
  %v4136 = vcombine.high %v4104, %v4104
  %v4137 = vcombine.high %v4105, %v4105
  %v4138 = vcombine.high %v4106, %v4106
  %v4139 = vcombine.high %v4107, %v4107
  %vm4154 = vcmask 584704
  %4155 = vst.msk [vmem:[#allocation3] sm:$0xf] %vm4154, 0.0
  %4156 = vst.msk [vmem:[#allocation3 + $0x40] sm:$0xf] %vm4154, 0.0
  %s4157 = scalar_lea.vmem [#allocation3], 60
  %4158 = vst.msk [vmem:[%s4157] sm:$0xf] %vm4154, 0.0
  %4159 = vst.msk [vmem:[%s4157 + $0x40] sm:$0xf] %vm4154, 0.0
  %vm4160 = vcmask 581632
  %4161 = vst.msk [vmem:[#allocation3] sm:$0x1] %vm4160, 0.0
  %4162 = vst.msk [vmem:[#allocation3 + $0x4] sm:$0x1] %vm4160, 0.0
  %4163 = vst.msk [vmem:[#allocation3 + $0x8] sm:$0x1] %vm4160, 0.0
  %4164 = vst.msk [vmem:[#allocation3 + $0xc] sm:$0x1] %vm4160, 0.0
  %4165 = vst.msk [vmem:[#allocation3 + $0x10] sm:$0x1] %vm4160, 0.0
  %4166 = vst.msk [vmem:[#allocation3 + $0x14] sm:$0x1] %vm4160, 0.0
  %4167 = vst.msk [vmem:[#allocation3 + $0x18] sm:$0x1] %vm4160, 0.0
  %4168 = vst.msk [vmem:[#allocation3 + $0x1c] sm:$0x1] %vm4160, 0.0
  %4169 = vst.msk [vmem:[#allocation3 + $0x20] sm:$0x1] %vm4160, 0.0
  %4170 = vst.msk [vmem:[#allocation3 + $0x24] sm:$0x1] %vm4160, 0.0
  %4171 = vst.msk [vmem:[#allocation3 + $0x28] sm:$0x1] %vm4160, 0.0
  %4172 = vst.msk [vmem:[#allocation3 + $0x2c] sm:$0x1] %vm4160, 0.0
  %4173 = vst.msk [vmem:[#allocation3 + $0x30] sm:$0x1] %vm4160, 0.0
  %4174 = vst.msk [vmem:[#allocation3 + $0x34] sm:$0x1] %vm4160, 0.0
  %4175 = vst.msk [vmem:[#allocation3 + $0x38] sm:$0x1] %vm4160, 0.0
  %4176 = vst.msk [vmem:[#allocation3 + $0x3c] sm:$0x1] %vm4160, 0.0
  %4177 = vst.msk [vmem:[#allocation3 + $0x40] sm:$0x1] %vm4160, 0.0
  %4178 = vst.msk [vmem:[#allocation3 + $0x44] sm:$0x1] %vm4160, 0.0
  %4179 = vst.msk [vmem:[#allocation3 + $0x48] sm:$0x1] %vm4160, 0.0
  %4180 = vst.msk [vmem:[#allocation3 + $0x4c] sm:$0x1] %vm4160, 0.0
  %4181 = vst.msk [vmem:[#allocation3 + $0x50] sm:$0x1] %vm4160, 0.0
  %4182 = vst.msk [vmem:[#allocation3 + $0x54] sm:$0x1] %vm4160, 0.0
  %4183 = vst.msk [vmem:[#allocation3 + $0x58] sm:$0x1] %vm4160, 0.0
  %4184 = vst.msk [vmem:[#allocation3 + $0x5c] sm:$0x1] %vm4160, 0.0
  %4185 = vst.msk [vmem:[#allocation3 + $0x60] sm:$0x1] %vm4160, 0.0
  %4186 = vst.msk [vmem:[#allocation3 + $0x64] sm:$0x1] %vm4160, 0.0
  %4187 = vst.msk [vmem:[#allocation3 + $0x68] sm:$0x1] %vm4160, 0.0
  %4188 = vst.msk [vmem:[#allocation3 + $0x6c] sm:$0x1] %vm4160, 0.0
  %4189 = vst.msk [vmem:[#allocation3 + $0x70] sm:$0x1] %vm4160, 0.0
  %4190 = vst.msk [vmem:[#allocation3 + $0x74] sm:$0x1] %vm4160, 0.0
  %4191 = vst.msk [vmem:[#allocation3 + $0x78] sm:$0x1] %vm4160, 0.0
  %4192 = vst.msk [vmem:[#allocation3 + $0x7c] sm:$0x1] %vm4160, 0.0
  %4193 = vst.msk [vmem:[#allocation3 + $0x3] sm:$0x1] %vm4160, 0.0
  %4194 = vst.msk [vmem:[#allocation3 + $0x7] sm:$0x1] %vm4160, 0.0
  %4195 = vst.msk [vmem:[#allocation3 + $0xb] sm:$0x1] %vm4160, 0.0
  %4196 = vst.msk [vmem:[#allocation3 + $0xf] sm:$0x1] %vm4160, 0.0
  %4197 = vst.msk [vmem:[#allocation3 + $0x13] sm:$0x1] %vm4160, 0.0
  %4198 = vst.msk [vmem:[#allocation3 + $0x17] sm:$0x1] %vm4160, 0.0
  %4199 = vst.msk [vmem:[#allocation3 + $0x1b] sm:$0x1] %vm4160, 0.0
  %4200 = vst.msk [vmem:[#allocation3 + $0x1f] sm:$0x1] %vm4160, 0.0
  %4201 = vst.msk [vmem:[#allocation3 + $0x23] sm:$0x1] %vm4160, 0.0
  %4202 = vst.msk [vmem:[#allocation3 + $0x27] sm:$0x1] %vm4160, 0.0
  %4203 = vst.msk [vmem:[#allocation3 + $0x2b] sm:$0x1] %vm4160, 0.0
  %4204 = vst.msk [vmem:[#allocation3 + $0x2f] sm:$0x1] %vm4160, 0.0
  %4205 = vst.msk [vmem:[#allocation3 + $0x33] sm:$0x1] %vm4160, 0.0
  %4206 = vst.msk [vmem:[#allocation3 + $0x37] sm:$0x1] %vm4160, 0.0
  %4207 = vst.msk [vmem:[#allocation3 + $0x3b] sm:$0x1] %vm4160, 0.0
  %4208 = vst.msk [vmem:[#allocation3 + $0x3f] sm:$0x1] %vm4160, 0.0
  %4209 = vst.msk [vmem:[#allocation3 + $0x43] sm:$0x1] %vm4160, 0.0
  %4210 = vst.msk [vmem:[#allocation3 + $0x47] sm:$0x1] %vm4160, 0.0
  %4211 = vst.msk [vmem:[#allocation3 + $0x4b] sm:$0x1] %vm4160, 0.0
  %4212 = vst.msk [vmem:[#allocation3 + $0x4f] sm:$0x1] %vm4160, 0.0
  %4213 = vst.msk [vmem:[#allocation3 + $0x53] sm:$0x1] %vm4160, 0.0
  %4214 = vst.msk [vmem:[#allocation3 + $0x57] sm:$0x1] %vm4160, 0.0
  %4215 = vst.msk [vmem:[#allocation3 + $0x5b] sm:$0x1] %vm4160, 0.0
  %4216 = vst.msk [vmem:[#allocation3 + $0x5f] sm:$0x1] %vm4160, 0.0
  %4217 = vst.msk [vmem:[#allocation3 + $0x63] sm:$0x1] %vm4160, 0.0
  %4218 = vst.msk [vmem:[#allocation3 + $0x67] sm:$0x1] %vm4160, 0.0
  %4219 = vst.msk [vmem:[#allocation3 + $0x6b] sm:$0x1] %vm4160, 0.0
  %4220 = vst.msk [vmem:[#allocation3 + $0x6f] sm:$0x1] %vm4160, 0.0
  %4221 = vst.msk [vmem:[#allocation3 + $0x73] sm:$0x1] %vm4160, 0.0
  %4222 = vst.msk [vmem:[#allocation3 + $0x77] sm:$0x1] %vm4160, 0.0
  %4223 = vst.msk [vmem:[#allocation3 + $0x7b] sm:$0x1] %vm4160, 0.0
  %4224 = vst.msk [vmem:[#allocation3 + $0x7f] sm:$0x1] %vm4160, 0.0
  %s4225 = scalar_lea.vmem [#allocation3], 4
  %vm4226 = vcmask 59392
  %4227 = vst.msk [vmem:[%s4225 + $0x1] sm:$0x7] %vm4226, %v4092
  %4228 = vst.msk [vmem:[%s4225 + $0x5] sm:$0x7] %vm4226, %v4124
  %4229 = vst.msk [vmem:[%s4225 + $0x9] sm:$0x7] %vm4226, %v4093
  %4230 = vst.msk [vmem:[%s4225 + $0xd] sm:$0x7] %vm4226, %v4125
  %4231 = vst.msk [vmem:[%s4225 + $0x11] sm:$0x7] %vm4226, %v4094
  %4232 = vst.msk [vmem:[%s4225 + $0x15] sm:$0x7] %vm4226, %v4126
  %4233 = vst.msk [vmem:[%s4225 + $0x19] sm:$0x7] %vm4226, %v4095
  %4234 = vst.msk [vmem:[%s4225 + $0x1d] sm:$0x7] %vm4226, %v4127
  %4235 = vst.msk [vmem:[%s4225 + $0x21] sm:$0x7] %vm4226, %v4096
  %4236 = vst.msk [vmem:[%s4225 + $0x25] sm:$0x7] %vm4226, %v4128
  %4237 = vst.msk [vmem:[%s4225 + $0x29] sm:$0x7] %vm4226, %v4097
  %4238 = vst.msk [vmem:[%s4225 + $0x2d] sm:$0x7] %vm4226, %v4129
  %4239 = vst.msk [vmem:[%s4225 + $0x31] sm:$0x7] %vm4226, %v4098
  %4240 = vst.msk [vmem:[%s4225 + $0x35] sm:$0x7] %vm4226, %v4130
  %4241 = vst.msk [vmem:[%s4225 + $0x39] sm:$0x7] %vm4226, %v4099
  %4242 = vst.msk [vmem:[%s4225 + $0x41] sm:$0x7] %vm4226, %v4100
  %4243 = vst.msk [vmem:[%s4225 + $0x45] sm:$0x7] %vm4226, %v4132
  %4244 = vst.msk [vmem:[%s4225 + $0x49] sm:$0x7] %vm4226, %v4101
  %4245 = vst.msk [vmem:[%s4225 + $0x4d] sm:$0x7] %vm4226, %v4133
  %4246 = vst.msk [vmem:[%s4225 + $0x51] sm:$0x7] %vm4226, %v4102
  %4247 = vst.msk [vmem:[%s4225 + $0x55] sm:$0x7] %vm4226, %v4134
  %4248 = vst.msk [vmem:[%s4225 + $0x59] sm:$0x7] %vm4226, %v4103
  %4249 = vst.msk [vmem:[%s4225 + $0x5d] sm:$0x7] %vm4226, %v4135
  %4250 = vst.msk [vmem:[%s4225 + $0x61] sm:$0x7] %vm4226, %v4104
  %4251 = vst.msk [vmem:[%s4225 + $0x65] sm:$0x7] %vm4226, %v4136
  %4252 = vst.msk [vmem:[%s4225 + $0x69] sm:$0x7] %vm4226, %v4105
  %4253 = vst.msk [vmem:[%s4225 + $0x6d] sm:$0x7] %vm4226, %v4137
  %4254 = vst.msk [vmem:[%s4225 + $0x71] sm:$0x7] %vm4226, %v4106
  %4255 = vst.msk [vmem:[%s4225 + $0x75] sm:$0x7] %vm4226, %v4138
  %4256 = vst.msk [vmem:[%s4225 + $0x79] sm:$0x7] %vm4226, %v4107
  %4257 = vrot.lane.b32.xlu0 %v4092, 8
  %v4258 = vpop.permute.xlu0 %4257
  %4259 = vrot.lane.b32.xlu0 %v4124, 8
  %v4260 = vpop.permute.xlu0 %4259
  %4261 = vrot.lane.b32.xlu0 %v4093, 8
  %v4262 = vpop.permute.xlu0 %4261
  %4263 = vrot.lane.b32.xlu0 %v4125, 8
  %v4264 = vpop.permute.xlu0 %4263
  %4265 = vrot.lane.b32.xlu0 %v4094, 8
  %v4266 = vpop.permute.xlu0 %4265
  %4267 = vrot.lane.b32.xlu0 %v4126, 8
  %v4268 = vpop.permute.xlu0 %4267
  %4269 = vrot.lane.b32.xlu0 %v4095, 8
  %v4270 = vpop.permute.xlu0 %4269
  %4271 = vrot.lane.b32.xlu0 %v4127, 8
  %v4272 = vpop.permute.xlu0 %4271
  %4273 = vrot.lane.b32.xlu0 %v4096, 8
  %v4274 = vpop.permute.xlu0 %4273
  %4275 = vrot.lane.b32.xlu0 %v4128, 8
  %v4276 = vpop.permute.xlu0 %4275
  %4277 = vrot.lane.b32.xlu0 %v4097, 8
  %v4278 = vpop.permute.xlu0 %4277
  %4279 = vrot.lane.b32.xlu0 %v4129, 8
  %v4280 = vpop.permute.xlu0 %4279
  %4281 = vrot.lane.b32.xlu0 %v4098, 8
  %v4282 = vpop.permute.xlu0 %4281
  %4283 = vrot.lane.b32.xlu0 %v4130, 8
  %v4284 = vpop.permute.xlu0 %4283
  %4285 = vrot.lane.b32.xlu0 %v4099, 8
  %v4286 = vpop.permute.xlu0 %4285
  %4287 = vrot.lane.b32.xlu0 %v4100, 8
  %v4288 = vpop.permute.xlu0 %4287
  %4289 = vrot.lane.b32.xlu0 %v4132, 8
  %v4290 = vpop.permute.xlu0 %4289
  %4291 = vrot.lane.b32.xlu0 %v4101, 8
  %v4292 = vpop.permute.xlu0 %4291
  %4293 = vrot.lane.b32.xlu0 %v4133, 8
  %v4294 = vpop.permute.xlu0 %4293
  %4295 = vrot.lane.b32.xlu0 %v4102, 8
  %v4296 = vpop.permute.xlu0 %4295
  %4297 = vrot.lane.b32.xlu0 %v4134, 8
  %v4298 = vpop.permute.xlu0 %4297
  %4299 = vrot.lane.b32.xlu0 %v4103, 8
  %v4300 = vpop.permute.xlu0 %4299
  %4301 = vrot.lane.b32.xlu0 %v4135, 8
  %v4302 = vpop.permute.xlu0 %4301
  %4303 = vrot.lane.b32.xlu0 %v4104, 8
  %v4304 = vpop.permute.xlu0 %4303
  %4305 = vrot.lane.b32.xlu0 %v4136, 8
  %v4306 = vpop.permute.xlu0 %4305
  %4307 = vrot.lane.b32.xlu0 %v4105, 8
  %v4308 = vpop.permute.xlu0 %4307
  %4309 = vrot.lane.b32.xlu0 %v4137, 8
  %v4310 = vpop.permute.xlu0 %4309
  %4311 = vrot.lane.b32.xlu0 %v4106, 8
  %v4312 = vpop.permute.xlu0 %4311
  %4313 = vrot.lane.b32.xlu0 %v4138, 8
  %v4314 = vpop.permute.xlu0 %4313
  %4315 = vrot.lane.b32.xlu0 %v4107, 8
  %v4316 = vpop.permute.xlu0 %4315
  %vm4347 = vcmask 126016
  %4348 = vst.msk [vmem:[%s4225] sm:$0xf] %vm4347, %v4258
  %4349 = vst.msk [vmem:[%s4225 + $0x4] sm:$0xf] %vm4347, %v4260
  %4350 = vst.msk [vmem:[%s4225 + $0x8] sm:$0xf] %vm4347, %v4262
  %4351 = vst.msk [vmem:[%s4225 + $0xc] sm:$0xf] %vm4347, %v4264
  %4352 = vst.msk [vmem:[%s4225 + $0x10] sm:$0xf] %vm4347, %v4266
  %4353 = vst.msk [vmem:[%s4225 + $0x14] sm:$0xf] %vm4347, %v4268
  %4354 = vst.msk [vmem:[%s4225 + $0x18] sm:$0xf] %vm4347, %v4270
  %4355 = vst.msk [vmem:[%s4225 + $0x1c] sm:$0xf] %vm4347, %v4272
  %4356 = vst.msk [vmem:[%s4225 + $0x20] sm:$0xf] %vm4347, %v4274
  %4357 = vst.msk [vmem:[%s4225 + $0x24] sm:$0xf] %vm4347, %v4276
  %4358 = vst.msk [vmem:[%s4225 + $0x28] sm:$0xf] %vm4347, %v4278
  %4359 = vst.msk [vmem:[%s4225 + $0x2c] sm:$0xf] %vm4347, %v4280
  %4360 = vst.msk [vmem:[%s4225 + $0x30] sm:$0xf] %vm4347, %v4282
  %4361 = vst.msk [vmem:[%s4225 + $0x34] sm:$0xf] %vm4347, %v4284
  %4362 = vst.msk [vmem:[%s4225 + $0x38] sm:$0xf] %vm4347, %v4286
  %4363 = vst.msk [vmem:[%s4225 + $0x40] sm:$0xf] %vm4347, %v4288
  %4364 = vst.msk [vmem:[%s4225 + $0x44] sm:$0xf] %vm4347, %v4290
  %4365 = vst.msk [vmem:[%s4225 + $0x48] sm:$0xf] %vm4347, %v4292
  %4366 = vst.msk [vmem:[%s4225 + $0x4c] sm:$0xf] %vm4347, %v4294
  %4367 = vst.msk [vmem:[%s4225 + $0x50] sm:$0xf] %vm4347, %v4296
  %4368 = vst.msk [vmem:[%s4225 + $0x54] sm:$0xf] %vm4347, %v4298
  %4369 = vst.msk [vmem:[%s4225 + $0x58] sm:$0xf] %vm4347, %v4300
  %4370 = vst.msk [vmem:[%s4225 + $0x5c] sm:$0xf] %vm4347, %v4302
  %4371 = vst.msk [vmem:[%s4225 + $0x60] sm:$0xf] %vm4347, %v4304
  %4372 = vst.msk [vmem:[%s4225 + $0x64] sm:$0xf] %vm4347, %v4306
  %4373 = vst.msk [vmem:[%s4225 + $0x68] sm:$0xf] %vm4347, %v4308
  %4374 = vst.msk [vmem:[%s4225 + $0x6c] sm:$0xf] %vm4347, %v4310
  %4375 = vst.msk [vmem:[%s4225 + $0x70] sm:$0xf] %vm4347, %v4312
  %4376 = vst.msk [vmem:[%s4225 + $0x74] sm:$0xf] %vm4347, %v4314
  %4377 = vst.msk [vmem:[%s4225 + $0x78] sm:$0xf] %vm4347, %v4316
  %4378 = vrot.lane.b32.xlu0 %v4092, 16
  %v4379 = vpop.permute.xlu0 %4378
  %4380 = vrot.lane.b32.xlu0 %v4124, 16
  %v4381 = vpop.permute.xlu0 %4380
  %4382 = vrot.lane.b32.xlu0 %v4093, 16
  %v4383 = vpop.permute.xlu0 %4382
  %4384 = vrot.lane.b32.xlu0 %v4125, 16
  %v4385 = vpop.permute.xlu0 %4384
  %4386 = vrot.lane.b32.xlu0 %v4094, 16
  %v4387 = vpop.permute.xlu0 %4386
  %4388 = vrot.lane.b32.xlu0 %v4126, 16
  %v4389 = vpop.permute.xlu0 %4388
  %4390 = vrot.lane.b32.xlu0 %v4095, 16
  %v4391 = vpop.permute.xlu0 %4390
  %4392 = vrot.lane.b32.xlu0 %v4127, 16
  %v4393 = vpop.permute.xlu0 %4392
  %4394 = vrot.lane.b32.xlu0 %v4096, 16
  %v4395 = vpop.permute.xlu0 %4394
  %4396 = vrot.lane.b32.xlu0 %v4128, 16
  %v4397 = vpop.permute.xlu0 %4396
  %4398 = vrot.lane.b32.xlu0 %v4097, 16
  %v4399 = vpop.permute.xlu0 %4398
  %4400 = vrot.lane.b32.xlu0 %v4129, 16
  %v4401 = vpop.permute.xlu0 %4400
  %4402 = vrot.lane.b32.xlu0 %v4098, 16
  %v4403 = vpop.permute.xlu0 %4402
  %4404 = vrot.lane.b32.xlu0 %v4130, 16
  %v4405 = vpop.permute.xlu0 %4404
  %4406 = vrot.lane.b32.xlu0 %v4099, 16
  %v4407 = vpop.permute.xlu0 %4406
  %4408 = vrot.lane.b32.xlu0 %v4100, 16
  %v4409 = vpop.permute.xlu0 %4408
  %4410 = vrot.lane.b32.xlu0 %v4132, 16
  %v4411 = vpop.permute.xlu0 %4410
  %4412 = vrot.lane.b32.xlu0 %v4101, 16
  %v4413 = vpop.permute.xlu0 %4412
  %4414 = vrot.lane.b32.xlu0 %v4133, 16
  %v4415 = vpop.permute.xlu0 %4414
  %4416 = vrot.lane.b32.xlu0 %v4102, 16
  %v4417 = vpop.permute.xlu0 %4416
  %4418 = vrot.lane.b32.xlu0 %v4134, 16
  %v4419 = vpop.permute.xlu0 %4418
  %4420 = vrot.lane.b32.xlu0 %v4103, 16
  %v4421 = vpop.permute.xlu0 %4420
  %4422 = vrot.lane.b32.xlu0 %v4135, 16
  %v4423 = vpop.permute.xlu0 %4422
  %4424 = vrot.lane.b32.xlu0 %v4104, 16
  %v4425 = vpop.permute.xlu0 %4424
  %4426 = vrot.lane.b32.xlu0 %v4136, 16
  %v4427 = vpop.permute.xlu0 %4426
  %4428 = vrot.lane.b32.xlu0 %v4105, 16
  %v4429 = vpop.permute.xlu0 %4428
  %4430 = vrot.lane.b32.xlu0 %v4137, 16
  %v4431 = vpop.permute.xlu0 %4430
  %4432 = vrot.lane.b32.xlu0 %v4106, 16
  %v4433 = vpop.permute.xlu0 %4432
  %4434 = vrot.lane.b32.xlu0 %v4138, 16
  %v4435 = vpop.permute.xlu0 %4434
  %4436 = vrot.lane.b32.xlu0 %v4107, 16
  %v4437 = vpop.permute.xlu0 %4436
  %vm4468 = vcmask 191617
  %4469 = vst.msk [vmem:[%s4225 - $0x1] sm:$0xe] %vm4468, %v4379
  %4470 = vst.msk [vmem:[%s4225 + $0x3] sm:$0xe] %vm4468, %v4381
  %4471 = vst.msk [vmem:[%s4225 + $0x7] sm:$0xe] %vm4468, %v4383
  %4472 = vst.msk [vmem:[%s4225 + $0xb] sm:$0xe] %vm4468, %v4385
  %4473 = vst.msk [vmem:[%s4225 + $0xf] sm:$0xe] %vm4468, %v4387
  %4474 = vst.msk [vmem:[%s4225 + $0x13] sm:$0xe] %vm4468, %v4389
  %4475 = vst.msk [vmem:[%s4225 + $0x17] sm:$0xe] %vm4468, %v4391
  %4476 = vst.msk [vmem:[%s4225 + $0x1b] sm:$0xe] %vm4468, %v4393
  %4477 = vst.msk [vmem:[%s4225 + $0x1f] sm:$0xe] %vm4468, %v4395
  %4478 = vst.msk [vmem:[%s4225 + $0x23] sm:$0xe] %vm4468, %v4397
  %4479 = vst.msk [vmem:[%s4225 + $0x27] sm:$0xe] %vm4468, %v4399
  %4480 = vst.msk [vmem:[%s4225 + $0x2b] sm:$0xe] %vm4468, %v4401
  %4481 = vst.msk [vmem:[%s4225 + $0x2f] sm:$0xe] %vm4468, %v4403
  %4482 = vst.msk [vmem:[%s4225 + $0x33] sm:$0xe] %vm4468, %v4405
  %4483 = vst.msk [vmem:[%s4225 + $0x37] sm:$0xe] %vm4468, %v4407
  %4484 = vst.msk [vmem:[%s4225 + $0x3f] sm:$0xe] %vm4468, %v4409
  %4485 = vst.msk [vmem:[%s4225 + $0x43] sm:$0xe] %vm4468, %v4411
  %4486 = vst.msk [vmem:[%s4225 + $0x47] sm:$0xe] %vm4468, %v4413
  %4487 = vst.msk [vmem:[%s4225 + $0x4b] sm:$0xe] %vm4468, %v4415
  %4488 = vst.msk [vmem:[%s4225 + $0x4f] sm:$0xe] %vm4468, %v4417
  %4489 = vst.msk [vmem:[%s4225 + $0x53] sm:$0xe] %vm4468, %v4419
  %4490 = vst.msk [vmem:[%s4225 + $0x57] sm:$0xe] %vm4468, %v4421
  %4491 = vst.msk [vmem:[%s4225 + $0x5b] sm:$0xe] %vm4468, %v4423
  %4492 = vst.msk [vmem:[%s4225 + $0x5f] sm:$0xe] %vm4468, %v4425
  %4493 = vst.msk [vmem:[%s4225 + $0x63] sm:$0xe] %vm4468, %v4427
  %4494 = vst.msk [vmem:[%s4225 + $0x67] sm:$0xe] %vm4468, %v4429
  %4495 = vst.msk [vmem:[%s4225 + $0x6b] sm:$0xe] %vm4468, %v4431
  %4496 = vst.msk [vmem:[%s4225 + $0x6f] sm:$0xe] %vm4468, %v4433
  %4497 = vst.msk [vmem:[%s4225 + $0x73] sm:$0xe] %vm4468, %v4435
  %4498 = vst.msk [vmem:[%s4225 + $0x77] sm:$0xe] %vm4468, %v4437
  %4499 = vrot.lane.b32.xlu0 %v4092, 24
  %v4500 = vpop.permute.xlu0 %4499
  %4501 = vrot.lane.b32.xlu0 %v4124, 24
  %v4502 = vpop.permute.xlu0 %4501
  %4503 = vrot.lane.b32.xlu0 %v4093, 24
  %v4504 = vpop.permute.xlu0 %4503
  %4505 = vrot.lane.b32.xlu0 %v4125, 24
  %v4506 = vpop.permute.xlu0 %4505
  %4507 = vrot.lane.b32.xlu0 %v4094, 24
  %v4508 = vpop.permute.xlu0 %4507
  %4509 = vrot.lane.b32.xlu0 %v4126, 24
  %v4510 = vpop.permute.xlu0 %4509
  %4511 = vrot.lane.b32.xlu0 %v4095, 24
  %v4512 = vpop.permute.xlu0 %4511
  %4513 = vrot.lane.b32.xlu0 %v4127, 24
  %v4514 = vpop.permute.xlu0 %4513
  %4515 = vrot.lane.b32.xlu0 %v4096, 24
  %v4516 = vpop.permute.xlu0 %4515
  %4517 = vrot.lane.b32.xlu0 %v4128, 24
  %v4518 = vpop.permute.xlu0 %4517
  %4519 = vrot.lane.b32.xlu0 %v4097, 24
  %v4520 = vpop.permute.xlu0 %4519
  %4521 = vrot.lane.b32.xlu0 %v4129, 24
  %v4522 = vpop.permute.xlu0 %4521
  %4523 = vrot.lane.b32.xlu0 %v4098, 24
  %v4524 = vpop.permute.xlu0 %4523
  %4525 = vrot.lane.b32.xlu0 %v4130, 24
  %v4526 = vpop.permute.xlu0 %4525
  %4527 = vrot.lane.b32.xlu0 %v4099, 24
  %v4528 = vpop.permute.xlu0 %4527
  %4529 = vrot.lane.b32.xlu0 %v4131, 24
  %v4530 = vpop.permute.xlu0 %4529
  %4531 = vrot.lane.b32.xlu0 %v4100, 24
  %v4532 = vpop.permute.xlu0 %4531
  %4533 = vrot.lane.b32.xlu0 %v4132, 24
  %v4534 = vpop.permute.xlu0 %4533
  %4535 = vrot.lane.b32.xlu0 %v4101, 24
  %v4536 = vpop.permute.xlu0 %4535
  %4537 = vrot.lane.b32.xlu0 %v4133, 24
  %v4538 = vpop.permute.xlu0 %4537
  %4539 = vrot.lane.b32.xlu0 %v4102, 24
  %v4540 = vpop.permute.xlu0 %4539
  %4541 = vrot.lane.b32.xlu0 %v4134, 24
  %v4542 = vpop.permute.xlu0 %4541
  %4543 = vrot.lane.b32.xlu0 %v4103, 24
  %v4544 = vpop.permute.xlu0 %4543
  %4545 = vrot.lane.b32.xlu0 %v4135, 24
  %v4546 = vpop.permute.xlu0 %4545
  %4547 = vrot.lane.b32.xlu0 %v4104, 24
  %v4548 = vpop.permute.xlu0 %4547
  %4549 = vrot.lane.b32.xlu0 %v4136, 24
  %v4550 = vpop.permute.xlu0 %4549
  %4551 = vrot.lane.b32.xlu0 %v4105, 24
  %v4552 = vpop.permute.xlu0 %4551
  %4553 = vrot.lane.b32.xlu0 %v4137, 24
  %v4554 = vpop.permute.xlu0 %4553
  %4555 = vrot.lane.b32.xlu0 %v4106, 24
  %v4556 = vpop.permute.xlu0 %4555
  %4557 = vrot.lane.b32.xlu0 %v4138, 24
  %v4558 = vpop.permute.xlu0 %4557
  %4559 = vrot.lane.b32.xlu0 %v4107, 24
  %v4560 = vpop.permute.xlu0 %4559
  %4561 = vrot.lane.b32.xlu0 %v4139, 24
  %v4562 = vpop.permute.xlu0 %4561
  %vm4595 = vcmask 256192
  %4596 = vst.msk [vmem:[#allocation3 + $0x1] sm:$0x7] %vm4595, %v4500
  %4597 = vst.msk [vmem:[#allocation3 + $0x5] sm:$0x7] %vm4595, %v4502
  %4598 = vst.msk [vmem:[#allocation3 + $0x9] sm:$0x7] %vm4595, %v4504
  %4599 = vst.msk [vmem:[#allocation3 + $0xd] sm:$0x7] %vm4595, %v4506
  %4600 = vst.msk [vmem:[#allocation3 + $0x11] sm:$0x7] %vm4595, %v4508
  %4601 = vst.msk [vmem:[#allocation3 + $0x15] sm:$0x7] %vm4595, %v4510
  %4602 = vst.msk [vmem:[#allocation3 + $0x19] sm:$0x7] %vm4595, %v4512
  %4603 = vst.msk [vmem:[#allocation3 + $0x1d] sm:$0x7] %vm4595, %v4514
  %4604 = vst.msk [vmem:[#allocation3 + $0x21] sm:$0x7] %vm4595, %v4516
  %4605 = vst.msk [vmem:[#allocation3 + $0x25] sm:$0x7] %vm4595, %v4518
  %4606 = vst.msk [vmem:[#allocation3 + $0x29] sm:$0x7] %vm4595, %v4520
  %4607 = vst.msk [vmem:[#allocation3 + $0x2d] sm:$0x7] %vm4595, %v4522
  %4608 = vst.msk [vmem:[#allocation3 + $0x31] sm:$0x7] %vm4595, %v4524
  %4609 = vst.msk [vmem:[#allocation3 + $0x35] sm:$0x7] %vm4595, %v4526
  %4610 = vst.msk [vmem:[#allocation3 + $0x39] sm:$0x7] %vm4595, %v4528
  %4611 = vst.msk [vmem:[#allocation3 + $0x3d] sm:$0x7] %vm4595, %v4530
  %4612 = vst.msk [vmem:[#allocation3 + $0x41] sm:$0x7] %vm4595, %v4532
  %4613 = vst.msk [vmem:[#allocation3 + $0x45] sm:$0x7] %vm4595, %v4534
  %4614 = vst.msk [vmem:[#allocation3 + $0x49] sm:$0x7] %vm4595, %v4536
  %4615 = vst.msk [vmem:[#allocation3 + $0x4d] sm:$0x7] %vm4595, %v4538
  %4616 = vst.msk [vmem:[#allocation3 + $0x51] sm:$0x7] %vm4595, %v4540
  %4617 = vst.msk [vmem:[#allocation3 + $0x55] sm:$0x7] %vm4595, %v4542
  %4618 = vst.msk [vmem:[#allocation3 + $0x59] sm:$0x7] %vm4595, %v4544
  %4619 = vst.msk [vmem:[#allocation3 + $0x5d] sm:$0x7] %vm4595, %v4546
  %4620 = vst.msk [vmem:[#allocation3 + $0x61] sm:$0x7] %vm4595, %v4548
  %4621 = vst.msk [vmem:[#allocation3 + $0x65] sm:$0x7] %vm4595, %v4550
  %4622 = vst.msk [vmem:[#allocation3 + $0x69] sm:$0x7] %vm4595, %v4552
  %4623 = vst.msk [vmem:[#allocation3 + $0x6d] sm:$0x7] %vm4595, %v4554
  %4624 = vst.msk [vmem:[#allocation3 + $0x71] sm:$0x7] %vm4595, %v4556
  %4625 = vst.msk [vmem:[#allocation3 + $0x75] sm:$0x7] %vm4595, %v4558
  %4626 = vst.msk [vmem:[#allocation3 + $0x79] sm:$0x7] %vm4595, %v4560
  %4627 = vst.msk [vmem:[#allocation3 + $0x7d] sm:$0x7] %vm4595, %v4562
  %4628 = vrot.lane.b32.xlu0 %v4092, 32
  %v4629 = vpop.permute.xlu0 %4628
  %4630 = vrot.lane.b32.xlu0 %v4124, 32
  %v4631 = vpop.permute.xlu0 %4630
  %4632 = vrot.lane.b32.xlu0 %v4093, 32
  %v4633 = vpop.permute.xlu0 %4632
  %4634 = vrot.lane.b32.xlu0 %v4125, 32
  %v4635 = vpop.permute.xlu0 %4634
  %4636 = vrot.lane.b32.xlu0 %v4094, 32
  %v4637 = vpop.permute.xlu0 %4636
  %4638 = vrot.lane.b32.xlu0 %v4126, 32
  %v4639 = vpop.permute.xlu0 %4638
  %4640 = vrot.lane.b32.xlu0 %v4095, 32
  %v4641 = vpop.permute.xlu0 %4640
  %4642 = vrot.lane.b32.xlu0 %v4127, 32
  %v4643 = vpop.permute.xlu0 %4642
  %4644 = vrot.lane.b32.xlu0 %v4096, 32
  %v4645 = vpop.permute.xlu0 %4644
  %4646 = vrot.lane.b32.xlu0 %v4128, 32
  %v4647 = vpop.permute.xlu0 %4646
  %4648 = vrot.lane.b32.xlu0 %v4097, 32
  %v4649 = vpop.permute.xlu0 %4648
  %4650 = vrot.lane.b32.xlu0 %v4129, 32
  %v4651 = vpop.permute.xlu0 %4650
  %4652 = vrot.lane.b32.xlu0 %v4098, 32
  %v4653 = vpop.permute.xlu0 %4652
  %4654 = vrot.lane.b32.xlu0 %v4130, 32
  %v4655 = vpop.permute.xlu0 %4654
  %4656 = vrot.lane.b32.xlu0 %v4099, 32
  %v4657 = vpop.permute.xlu0 %4656
  %4658 = vrot.lane.b32.xlu0 %v4131, 32
  %v4659 = vpop.permute.xlu0 %4658
  %4660 = vrot.lane.b32.xlu0 %v4100, 32
  %v4661 = vpop.permute.xlu0 %4660
  %4662 = vrot.lane.b32.xlu0 %v4132, 32
  %v4663 = vpop.permute.xlu0 %4662
  %4664 = vrot.lane.b32.xlu0 %v4101, 32
  %v4665 = vpop.permute.xlu0 %4664
  %4666 = vrot.lane.b32.xlu0 %v4133, 32
  %v4667 = vpop.permute.xlu0 %4666
  %4668 = vrot.lane.b32.xlu0 %v4102, 32
  %v4669 = vpop.permute.xlu0 %4668
  %4670 = vrot.lane.b32.xlu0 %v4134, 32
  %v4671 = vpop.permute.xlu0 %4670
  %4672 = vrot.lane.b32.xlu0 %v4103, 32
  %v4673 = vpop.permute.xlu0 %4672
  %4674 = vrot.lane.b32.xlu0 %v4135, 32
  %v4675 = vpop.permute.xlu0 %4674
  %4676 = vrot.lane.b32.xlu0 %v4104, 32
  %v4677 = vpop.permute.xlu0 %4676
  %4678 = vrot.lane.b32.xlu0 %v4136, 32
  %v4679 = vpop.permute.xlu0 %4678
  %4680 = vrot.lane.b32.xlu0 %v4105, 32
  %v4681 = vpop.permute.xlu0 %4680
  %4682 = vrot.lane.b32.xlu0 %v4137, 32
  %v4683 = vpop.permute.xlu0 %4682
  %4684 = vrot.lane.b32.xlu0 %v4106, 32
  %v4685 = vpop.permute.xlu0 %4684
  %4686 = vrot.lane.b32.xlu0 %v4138, 32
  %v4687 = vpop.permute.xlu0 %4686
  %4688 = vrot.lane.b32.xlu0 %v4107, 32
  %v4689 = vpop.permute.xlu0 %4688
  %4690 = vrot.lane.b32.xlu0 %v4139, 32
  %v4691 = vpop.permute.xlu0 %4690
  %vm4724 = vcmask 322816
  %4725 = vst.msk [vmem:[#allocation3] sm:$0xf] %vm4724, %v4629
  %4726 = vst.msk [vmem:[#allocation3 + $0x4] sm:$0xf] %vm4724, %v4631
  %4727 = vst.msk [vmem:[#allocation3 + $0x8] sm:$0xf] %vm4724, %v4633
  %4728 = vst.msk [vmem:[#allocation3 + $0xc] sm:$0xf] %vm4724, %v4635
  %4729 = vst.msk [vmem:[#allocation3 + $0x10] sm:$0xf] %vm4724, %v4637
  %4730 = vst.msk [vmem:[#allocation3 + $0x14] sm:$0xf] %vm4724, %v4639
  %4731 = vst.msk [vmem:[#allocation3 + $0x18] sm:$0xf] %vm4724, %v4641
  %4732 = vst.msk [vmem:[#allocation3 + $0x1c] sm:$0xf] %vm4724, %v4643
  %4733 = vst.msk [vmem:[#allocation3 + $0x20] sm:$0xf] %vm4724, %v4645
  %4734 = vst.msk [vmem:[#allocation3 + $0x24] sm:$0xf] %vm4724, %v4647
  %4735 = vst.msk [vmem:[#allocation3 + $0x28] sm:$0xf] %vm4724, %v4649
  %4736 = vst.msk [vmem:[#allocation3 + $0x2c] sm:$0xf] %vm4724, %v4651
  %4737 = vst.msk [vmem:[#allocation3 + $0x30] sm:$0xf] %vm4724, %v4653
  %4738 = vst.msk [vmem:[#allocation3 + $0x34] sm:$0xf] %vm4724, %v4655
  %4739 = vst.msk [vmem:[#allocation3 + $0x38] sm:$0xf] %vm4724, %v4657
  %4740 = vst.msk [vmem:[#allocation3 + $0x3c] sm:$0xf] %vm4724, %v4659
  %4741 = vst.msk [vmem:[#allocation3 + $0x40] sm:$0xf] %vm4724, %v4661
  %4742 = vst.msk [vmem:[#allocation3 + $0x44] sm:$0xf] %vm4724, %v4663
  %4743 = vst.msk [vmem:[#allocation3 + $0x48] sm:$0xf] %vm4724, %v4665
  %4744 = vst.msk [vmem:[#allocation3 + $0x4c] sm:$0xf] %vm4724, %v4667
  %4745 = vst.msk [vmem:[#allocation3 + $0x50] sm:$0xf] %vm4724, %v4669
  %4746 = vst.msk [vmem:[#allocation3 + $0x54] sm:$0xf] %vm4724, %v4671
  %4747 = vst.msk [vmem:[#allocation3 + $0x58] sm:$0xf] %vm4724, %v4673
  %4748 = vst.msk [vmem:[#allocation3 + $0x5c] sm:$0xf] %vm4724, %v4675
  %4749 = vst.msk [vmem:[#allocation3 + $0x60] sm:$0xf] %vm4724, %v4677
  %4750 = vst.msk [vmem:[#allocation3 + $0x64] sm:$0xf] %vm4724, %v4679
  %4751 = vst.msk [vmem:[#allocation3 + $0x68] sm:$0xf] %vm4724, %v4681
  %4752 = vst.msk [vmem:[#allocation3 + $0x6c] sm:$0xf] %vm4724, %v4683
  %4753 = vst.msk [vmem:[#allocation3 + $0x70] sm:$0xf] %vm4724, %v4685
  %4754 = vst.msk [vmem:[#allocation3 + $0x74] sm:$0xf] %vm4724, %v4687
  %4755 = vst.msk [vmem:[#allocation3 + $0x78] sm:$0xf] %vm4724, %v4689
  %4756 = vst.msk [vmem:[#allocation3 + $0x7c] sm:$0xf] %vm4724, %v4691
  %4757 = vrot.lane.b32.xlu0 %v4092, 40
  %v4758 = vpop.permute.xlu0 %4757
  %4759 = vrot.lane.b32.xlu0 %v4124, 40
  %v4760 = vpop.permute.xlu0 %4759
  %4761 = vrot.lane.b32.xlu0 %v4093, 40
  %v4762 = vpop.permute.xlu0 %4761
  %4763 = vrot.lane.b32.xlu0 %v4125, 40
  %v4764 = vpop.permute.xlu0 %4763
  %4765 = vrot.lane.b32.xlu0 %v4094, 40
  %v4766 = vpop.permute.xlu0 %4765
  %4767 = vrot.lane.b32.xlu0 %v4126, 40
  %v4768 = vpop.permute.xlu0 %4767
  %4769 = vrot.lane.b32.xlu0 %v4095, 40
  %v4770 = vpop.permute.xlu0 %4769
  %4771 = vrot.lane.b32.xlu0 %v4127, 40
  %v4772 = vpop.permute.xlu0 %4771
  %4773 = vrot.lane.b32.xlu0 %v4096, 40
  %v4774 = vpop.permute.xlu0 %4773
  %4775 = vrot.lane.b32.xlu0 %v4128, 40
  %v4776 = vpop.permute.xlu0 %4775
  %4777 = vrot.lane.b32.xlu0 %v4097, 40
  %v4778 = vpop.permute.xlu0 %4777
  %4779 = vrot.lane.b32.xlu0 %v4129, 40
  %v4780 = vpop.permute.xlu0 %4779
  %4781 = vrot.lane.b32.xlu0 %v4098, 40
  %v4782 = vpop.permute.xlu0 %4781
  %4783 = vrot.lane.b32.xlu0 %v4130, 40
  %v4784 = vpop.permute.xlu0 %4783
  %4785 = vrot.lane.b32.xlu0 %v4099, 40
  %v4786 = vpop.permute.xlu0 %4785
  %4787 = vrot.lane.b32.xlu0 %v4131, 40
  %v4788 = vpop.permute.xlu0 %4787
  %4789 = vrot.lane.b32.xlu0 %v4100, 40
  %v4790 = vpop.permute.xlu0 %4789
  %4791 = vrot.lane.b32.xlu0 %v4132, 40
  %v4792 = vpop.permute.xlu0 %4791
  %4793 = vrot.lane.b32.xlu0 %v4101, 40
  %v4794 = vpop.permute.xlu0 %4793
  %4795 = vrot.lane.b32.xlu0 %v4133, 40
  %v4796 = vpop.permute.xlu0 %4795
  %4797 = vrot.lane.b32.xlu0 %v4102, 40
  %v4798 = vpop.permute.xlu0 %4797
  %4799 = vrot.lane.b32.xlu0 %v4134, 40
  %v4800 = vpop.permute.xlu0 %4799
  %4801 = vrot.lane.b32.xlu0 %v4103, 40
  %v4802 = vpop.permute.xlu0 %4801
  %4803 = vrot.lane.b32.xlu0 %v4135, 40
  %v4804 = vpop.permute.xlu0 %4803
  %4805 = vrot.lane.b32.xlu0 %v4104, 40
  %v4806 = vpop.permute.xlu0 %4805
  %4807 = vrot.lane.b32.xlu0 %v4136, 40
  %v4808 = vpop.permute.xlu0 %4807
  %4809 = vrot.lane.b32.xlu0 %v4105, 40
  %v4810 = vpop.permute.xlu0 %4809
  %4811 = vrot.lane.b32.xlu0 %v4137, 40
  %v4812 = vpop.permute.xlu0 %4811
  %4813 = vrot.lane.b32.xlu0 %v4106, 40
  %v4814 = vpop.permute.xlu0 %4813
  %4815 = vrot.lane.b32.xlu0 %v4138, 40
  %v4816 = vpop.permute.xlu0 %4815
  %4817 = vrot.lane.b32.xlu0 %v4107, 40
  %v4818 = vpop.permute.xlu0 %4817
  %4819 = vrot.lane.b32.xlu0 %v4139, 40
  %v4820 = vpop.permute.xlu0 %4819
  %vm4853 = vcmask 388417
  %4854 = vst.msk [vmem:[#allocation3 - $0x1] sm:$0xe] %vm4853, %v4758
  %4855 = vst.msk [vmem:[#allocation3 + $0x3] sm:$0xe] %vm4853, %v4760
  %4856 = vst.msk [vmem:[#allocation3 + $0x7] sm:$0xe] %vm4853, %v4762
  %4857 = vst.msk [vmem:[#allocation3 + $0xb] sm:$0xe] %vm4853, %v4764
  %4858 = vst.msk [vmem:[#allocation3 + $0xf] sm:$0xe] %vm4853, %v4766
  %4859 = vst.msk [vmem:[#allocation3 + $0x13] sm:$0xe] %vm4853, %v4768
  %4860 = vst.msk [vmem:[#allocation3 + $0x17] sm:$0xe] %vm4853, %v4770
  %4861 = vst.msk [vmem:[#allocation3 + $0x1b] sm:$0xe] %vm4853, %v4772
  %4862 = vst.msk [vmem:[#allocation3 + $0x1f] sm:$0xe] %vm4853, %v4774
  %4863 = vst.msk [vmem:[#allocation3 + $0x23] sm:$0xe] %vm4853, %v4776
  %4864 = vst.msk [vmem:[#allocation3 + $0x27] sm:$0xe] %vm4853, %v4778
  %4865 = vst.msk [vmem:[#allocation3 + $0x2b] sm:$0xe] %vm4853, %v4780
  %4866 = vst.msk [vmem:[#allocation3 + $0x2f] sm:$0xe] %vm4853, %v4782
  %4867 = vst.msk [vmem:[#allocation3 + $0x33] sm:$0xe] %vm4853, %v4784
  %4868 = vst.msk [vmem:[#allocation3 + $0x37] sm:$0xe] %vm4853, %v4786
  %4869 = vst.msk [vmem:[#allocation3 + $0x3b] sm:$0xe] %vm4853, %v4788
  %4870 = vst.msk [vmem:[#allocation3 + $0x3f] sm:$0xe] %vm4853, %v4790
  %4871 = vst.msk [vmem:[#allocation3 + $0x43] sm:$0xe] %vm4853, %v4792
  %4872 = vst.msk [vmem:[#allocation3 + $0x47] sm:$0xe] %vm4853, %v4794
  %4873 = vst.msk [vmem:[#allocation3 + $0x4b] sm:$0xe] %vm4853, %v4796
  %4874 = vst.msk [vmem:[#allocation3 + $0x4f] sm:$0xe] %vm4853, %v4798
  %4875 = vst.msk [vmem:[#allocation3 + $0x53] sm:$0xe] %vm4853, %v4800
  %4876 = vst.msk [vmem:[#allocation3 + $0x57] sm:$0xe] %vm4853, %v4802
  %4877 = vst.msk [vmem:[#allocation3 + $0x5b] sm:$0xe] %vm4853, %v4804
  %4878 = vst.msk [vmem:[#allocation3 + $0x5f] sm:$0xe] %vm4853, %v4806
  %4879 = vst.msk [vmem:[#allocation3 + $0x63] sm:$0xe] %vm4853, %v4808
  %4880 = vst.msk [vmem:[#allocation3 + $0x67] sm:$0xe] %vm4853, %v4810
  %4881 = vst.msk [vmem:[#allocation3 + $0x6b] sm:$0xe] %vm4853, %v4812
  %4882 = vst.msk [vmem:[#allocation3 + $0x6f] sm:$0xe] %vm4853, %v4814
  %4883 = vst.msk [vmem:[#allocation3 + $0x73] sm:$0xe] %vm4853, %v4816
  %4884 = vst.msk [vmem:[#allocation3 + $0x77] sm:$0xe] %vm4853, %v4818
  %4885 = vst.msk [vmem:[#allocation3 + $0x7b] sm:$0xe] %vm4853, %v4820
  %4886 = vrot.lane.b32.xlu0 %v4124, 48
  %v4887 = vpop.permute.xlu0 %4886
  %4888 = vrot.lane.b32.xlu0 %v4093, 48
  %v4889 = vpop.permute.xlu0 %4888
  %4890 = vrot.lane.b32.xlu0 %v4125, 48
  %v4891 = vpop.permute.xlu0 %4890
  %4892 = vrot.lane.b32.xlu0 %v4094, 48
  %v4893 = vpop.permute.xlu0 %4892
  %4894 = vrot.lane.b32.xlu0 %v4126, 48
  %v4895 = vpop.permute.xlu0 %4894
  %4896 = vrot.lane.b32.xlu0 %v4095, 48
  %v4897 = vpop.permute.xlu0 %4896
  %4898 = vrot.lane.b32.xlu0 %v4127, 48
  %v4899 = vpop.permute.xlu0 %4898
  %4900 = vrot.lane.b32.xlu0 %v4096, 48
  %v4901 = vpop.permute.xlu0 %4900
  %4902 = vrot.lane.b32.xlu0 %v4128, 48
  %v4903 = vpop.permute.xlu0 %4902
  %4904 = vrot.lane.b32.xlu0 %v4097, 48
  %v4905 = vpop.permute.xlu0 %4904
  %4906 = vrot.lane.b32.xlu0 %v4129, 48
  %v4907 = vpop.permute.xlu0 %4906
  %4908 = vrot.lane.b32.xlu0 %v4098, 48
  %v4909 = vpop.permute.xlu0 %4908
  %4910 = vrot.lane.b32.xlu0 %v4130, 48
  %v4911 = vpop.permute.xlu0 %4910
  %4912 = vrot.lane.b32.xlu0 %v4099, 48
  %v4913 = vpop.permute.xlu0 %4912
  %4914 = vrot.lane.b32.xlu0 %v4131, 48
  %v4915 = vpop.permute.xlu0 %4914
  %4916 = vrot.lane.b32.xlu0 %v4132, 48
  %v4917 = vpop.permute.xlu0 %4916
  %4918 = vrot.lane.b32.xlu0 %v4101, 48
  %v4919 = vpop.permute.xlu0 %4918
  %4920 = vrot.lane.b32.xlu0 %v4133, 48
  %v4921 = vpop.permute.xlu0 %4920
  %4922 = vrot.lane.b32.xlu0 %v4102, 48
  %v4923 = vpop.permute.xlu0 %4922
  %4924 = vrot.lane.b32.xlu0 %v4134, 48
  %v4925 = vpop.permute.xlu0 %4924
  %4926 = vrot.lane.b32.xlu0 %v4103, 48
  %v4927 = vpop.permute.xlu0 %4926
  %4928 = vrot.lane.b32.xlu0 %v4135, 48
  %v4929 = vpop.permute.xlu0 %4928
  %4930 = vrot.lane.b32.xlu0 %v4104, 48
  %v4931 = vpop.permute.xlu0 %4930
  %4932 = vrot.lane.b32.xlu0 %v4136, 48
  %v4933 = vpop.permute.xlu0 %4932
  %4934 = vrot.lane.b32.xlu0 %v4105, 48
  %v4935 = vpop.permute.xlu0 %4934
  %4936 = vrot.lane.b32.xlu0 %v4137, 48
  %v4937 = vpop.permute.xlu0 %4936
  %4938 = vrot.lane.b32.xlu0 %v4106, 48
  %v4939 = vpop.permute.xlu0 %4938
  %4940 = vrot.lane.b32.xlu0 %v4138, 48
  %v4941 = vpop.permute.xlu0 %4940
  %4942 = vrot.lane.b32.xlu0 %v4107, 48
  %v4943 = vpop.permute.xlu0 %4942
  %4944 = vrot.lane.b32.xlu0 %v4139, 48
  %v4945 = vpop.permute.xlu0 %4944
  %vm4976 = vcmask 452992
  %4977 = vst.msk [vmem:[#allocation3 + $0x1] sm:$0x7] %vm4976, %v4887
  %4978 = vst.msk [vmem:[#allocation3 + $0x5] sm:$0x7] %vm4976, %v4889
  %4979 = vst.msk [vmem:[#allocation3 + $0x9] sm:$0x7] %vm4976, %v4891
  %4980 = vst.msk [vmem:[#allocation3 + $0xd] sm:$0x7] %vm4976, %v4893
  %4981 = vst.msk [vmem:[#allocation3 + $0x11] sm:$0x7] %vm4976, %v4895
  %4982 = vst.msk [vmem:[#allocation3 + $0x15] sm:$0x7] %vm4976, %v4897
  %4983 = vst.msk [vmem:[#allocation3 + $0x19] sm:$0x7] %vm4976, %v4899
  %4984 = vst.msk [vmem:[#allocation3 + $0x1d] sm:$0x7] %vm4976, %v4901
  %4985 = vst.msk [vmem:[#allocation3 + $0x21] sm:$0x7] %vm4976, %v4903
  %4986 = vst.msk [vmem:[#allocation3 + $0x25] sm:$0x7] %vm4976, %v4905
  %4987 = vst.msk [vmem:[#allocation3 + $0x29] sm:$0x7] %vm4976, %v4907
  %4988 = vst.msk [vmem:[#allocation3 + $0x2d] sm:$0x7] %vm4976, %v4909
  %4989 = vst.msk [vmem:[#allocation3 + $0x31] sm:$0x7] %vm4976, %v4911
  %4990 = vst.msk [vmem:[#allocation3 + $0x35] sm:$0x7] %vm4976, %v4913
  %4991 = vst.msk [vmem:[#allocation3 + $0x39] sm:$0x7] %vm4976, %v4915
  %4992 = vst.msk [vmem:[#allocation3 + $0x41] sm:$0x7] %vm4976, %v4917
  %4993 = vst.msk [vmem:[#allocation3 + $0x45] sm:$0x7] %vm4976, %v4919
  %4994 = vst.msk [vmem:[#allocation3 + $0x49] sm:$0x7] %vm4976, %v4921
  %4995 = vst.msk [vmem:[#allocation3 + $0x4d] sm:$0x7] %vm4976, %v4923
  %4996 = vst.msk [vmem:[#allocation3 + $0x51] sm:$0x7] %vm4976, %v4925
  %4997 = vst.msk [vmem:[#allocation3 + $0x55] sm:$0x7] %vm4976, %v4927
  %4998 = vst.msk [vmem:[#allocation3 + $0x59] sm:$0x7] %vm4976, %v4929
  %4999 = vst.msk [vmem:[#allocation3 + $0x5d] sm:$0x7] %vm4976, %v4931
  %5000 = vst.msk [vmem:[#allocation3 + $0x61] sm:$0x7] %vm4976, %v4933
  %5001 = vst.msk [vmem:[#allocation3 + $0x65] sm:$0x7] %vm4976, %v4935
  %5002 = vst.msk [vmem:[#allocation3 + $0x69] sm:$0x7] %vm4976, %v4937
  %5003 = vst.msk [vmem:[#allocation3 + $0x6d] sm:$0x7] %vm4976, %v4939
  %5004 = vst.msk [vmem:[#allocation3 + $0x71] sm:$0x7] %vm4976, %v4941
  %5005 = vst.msk [vmem:[#allocation3 + $0x75] sm:$0x7] %vm4976, %v4943
  %5006 = vst.msk [vmem:[#allocation3 + $0x79] sm:$0x7] %vm4976, %v4945
  %5007 = vrot.lane.b32.xlu0 %v4124, 56
  %v5008 = vpop.permute.xlu0 %5007
  %5009 = vrot.lane.b32.xlu0 %v4093, 56
  %v5010 = vpop.permute.xlu0 %5009
  %5011 = vrot.lane.b32.xlu0 %v4125, 56
  %v5012 = vpop.permute.xlu0 %5011
  %5013 = vrot.lane.b32.xlu0 %v4094, 56
  %v5014 = vpop.permute.xlu0 %5013
  %5015 = vrot.lane.b32.xlu0 %v4126, 56
  %v5016 = vpop.permute.xlu0 %5015
  %5017 = vrot.lane.b32.xlu0 %v4095, 56
  %v5018 = vpop.permute.xlu0 %5017
  %5019 = vrot.lane.b32.xlu0 %v4127, 56
  %v5020 = vpop.permute.xlu0 %5019
  %5021 = vrot.lane.b32.xlu0 %v4096, 56
  %v5022 = vpop.permute.xlu0 %5021
  %5023 = vrot.lane.b32.xlu0 %v4128, 56
  %v5024 = vpop.permute.xlu0 %5023
  %5025 = vrot.lane.b32.xlu0 %v4097, 56
  %v5026 = vpop.permute.xlu0 %5025
  %5027 = vrot.lane.b32.xlu0 %v4129, 56
  %v5028 = vpop.permute.xlu0 %5027
  %5029 = vrot.lane.b32.xlu0 %v4098, 56
  %v5030 = vpop.permute.xlu0 %5029
  %5031 = vrot.lane.b32.xlu0 %v4130, 56
  %v5032 = vpop.permute.xlu0 %5031
  %5033 = vrot.lane.b32.xlu0 %v4099, 56
  %v5034 = vpop.permute.xlu0 %5033
  %5035 = vrot.lane.b32.xlu0 %v4131, 56
  %v5036 = vpop.permute.xlu0 %5035
  %5037 = vrot.lane.b32.xlu0 %v4132, 56
  %v5038 = vpop.permute.xlu0 %5037
  %5039 = vrot.lane.b32.xlu0 %v4101, 56
  %v5040 = vpop.permute.xlu0 %5039
  %5041 = vrot.lane.b32.xlu0 %v4133, 56
  %v5042 = vpop.permute.xlu0 %5041
  %5043 = vrot.lane.b32.xlu0 %v4102, 56
  %v5044 = vpop.permute.xlu0 %5043
  %5045 = vrot.lane.b32.xlu0 %v4134, 56
  %v5046 = vpop.permute.xlu0 %5045
  %5047 = vrot.lane.b32.xlu0 %v4103, 56
  %v5048 = vpop.permute.xlu0 %5047
  %5049 = vrot.lane.b32.xlu0 %v4135, 56
  %v5050 = vpop.permute.xlu0 %5049
  %5051 = vrot.lane.b32.xlu0 %v4104, 56
  %v5052 = vpop.permute.xlu0 %5051
  %5053 = vrot.lane.b32.xlu0 %v4136, 56
  %v5054 = vpop.permute.xlu0 %5053
  %5055 = vrot.lane.b32.xlu0 %v4105, 56
  %v5056 = vpop.permute.xlu0 %5055
  %5057 = vrot.lane.b32.xlu0 %v4137, 56
  %v5058 = vpop.permute.xlu0 %5057
  %5059 = vrot.lane.b32.xlu0 %v4106, 56
  %v5060 = vpop.permute.xlu0 %5059
  %5061 = vrot.lane.b32.xlu0 %v4138, 56
  %v5062 = vpop.permute.xlu0 %5061
  %5063 = vrot.lane.b32.xlu0 %v4107, 56
  %v5064 = vpop.permute.xlu0 %5063
  %5065 = vrot.lane.b32.xlu0 %v4139, 56
  %v5066 = vpop.permute.xlu0 %5065
  %vm5097 = vcmask 519616
  %5098 = vst.msk [vmem:[#allocation3] sm:$0xf] %vm5097, %v5008
  %5099 = vst.msk [vmem:[#allocation3 + $0x4] sm:$0xf] %vm5097, %v5010
  %5100 = vst.msk [vmem:[#allocation3 + $0x8] sm:$0xf] %vm5097, %v5012
  %5101 = vst.msk [vmem:[#allocation3 + $0xc] sm:$0xf] %vm5097, %v5014
  %5102 = vst.msk [vmem:[#allocation3 + $0x10] sm:$0xf] %vm5097, %v5016
  %5103 = vst.msk [vmem:[#allocation3 + $0x14] sm:$0xf] %vm5097, %v5018
  %5104 = vst.msk [vmem:[#allocation3 + $0x18] sm:$0xf] %vm5097, %v5020
  %5105 = vst.msk [vmem:[#allocation3 + $0x1c] sm:$0xf] %vm5097, %v5022
  %5106 = vst.msk [vmem:[#allocation3 + $0x20] sm:$0xf] %vm5097, %v5024
  %5107 = vst.msk [vmem:[#allocation3 + $0x24] sm:$0xf] %vm5097, %v5026
  %5108 = vst.msk [vmem:[#allocation3 + $0x28] sm:$0xf] %vm5097, %v5028
  %5109 = vst.msk [vmem:[#allocation3 + $0x2c] sm:$0xf] %vm5097, %v5030
  %5110 = vst.msk [vmem:[#allocation3 + $0x30] sm:$0xf] %vm5097, %v5032
  %5111 = vst.msk [vmem:[#allocation3 + $0x34] sm:$0xf] %vm5097, %v5034
  %5112 = vst.msk [vmem:[#allocation3 + $0x38] sm:$0xf] %vm5097, %v5036
  %5113 = vst.msk [vmem:[#allocation3 + $0x40] sm:$0xf] %vm5097, %v5038
  %5114 = vst.msk [vmem:[#allocation3 + $0x44] sm:$0xf] %vm5097, %v5040
  %5115 = vst.msk [vmem:[#allocation3 + $0x48] sm:$0xf] %vm5097, %v5042
  %5116 = vst.msk [vmem:[#allocation3 + $0x4c] sm:$0xf] %vm5097, %v5044
  %5117 = vst.msk [vmem:[#allocation3 + $0x50] sm:$0xf] %vm5097, %v5046
  %5118 = vst.msk [vmem:[#allocation3 + $0x54] sm:$0xf] %vm5097, %v5048
  %5119 = vst.msk [vmem:[#allocation3 + $0x58] sm:$0xf] %vm5097, %v5050
  %5120 = vst.msk [vmem:[#allocation3 + $0x5c] sm:$0xf] %vm5097, %v5052
  %5121 = vst.msk [vmem:[#allocation3 + $0x60] sm:$0xf] %vm5097, %v5054
  %5122 = vst.msk [vmem:[#allocation3 + $0x64] sm:$0xf] %vm5097, %v5056
  %5123 = vst.msk [vmem:[#allocation3 + $0x68] sm:$0xf] %vm5097, %v5058
  %5124 = vst.msk [vmem:[#allocation3 + $0x6c] sm:$0xf] %vm5097, %v5060
  %5125 = vst.msk [vmem:[#allocation3 + $0x70] sm:$0xf] %vm5097, %v5062
  %5126 = vst.msk [vmem:[#allocation3 + $0x74] sm:$0xf] %vm5097, %v5064
  %5127 = vst.msk [vmem:[#allocation3 + $0x78] sm:$0xf] %vm5097, %v5066
  %5128 = vrot.lane.b32.xlu0 %v4124, 64
  %v5129 = vpop.permute.xlu0 %5128
  %5130 = vrot.lane.b32.xlu0 %v4093, 64
  %v5131 = vpop.permute.xlu0 %5130
  %5132 = vrot.lane.b32.xlu0 %v4125, 64
  %v5133 = vpop.permute.xlu0 %5132
  %5134 = vrot.lane.b32.xlu0 %v4094, 64
  %v5135 = vpop.permute.xlu0 %5134
  %5136 = vrot.lane.b32.xlu0 %v4126, 64
  %v5137 = vpop.permute.xlu0 %5136
  %5138 = vrot.lane.b32.xlu0 %v4095, 64
  %v5139 = vpop.permute.xlu0 %5138
  %5140 = vrot.lane.b32.xlu0 %v4127, 64
  %v5141 = vpop.permute.xlu0 %5140
  %5142 = vrot.lane.b32.xlu0 %v4096, 64
  %v5143 = vpop.permute.xlu0 %5142
  %5144 = vrot.lane.b32.xlu0 %v4128, 64
  %v5145 = vpop.permute.xlu0 %5144
  %5146 = vrot.lane.b32.xlu0 %v4097, 64
  %v5147 = vpop.permute.xlu0 %5146
  %5148 = vrot.lane.b32.xlu0 %v4129, 64
  %v5149 = vpop.permute.xlu0 %5148
  %5150 = vrot.lane.b32.xlu0 %v4098, 64
  %v5151 = vpop.permute.xlu0 %5150
  %5152 = vrot.lane.b32.xlu0 %v4130, 64
  %v5153 = vpop.permute.xlu0 %5152
  %5154 = vrot.lane.b32.xlu0 %v4099, 64
  %v5155 = vpop.permute.xlu0 %5154
  %5156 = vrot.lane.b32.xlu0 %v4131, 64
  %v5157 = vpop.permute.xlu0 %5156
  %5158 = vrot.lane.b32.xlu0 %v4132, 64
  %v5159 = vpop.permute.xlu0 %5158
  %5160 = vrot.lane.b32.xlu0 %v4101, 64
  %v5161 = vpop.permute.xlu0 %5160
  %5162 = vrot.lane.b32.xlu0 %v4133, 64
  %v5163 = vpop.permute.xlu0 %5162
  %5164 = vrot.lane.b32.xlu0 %v4102, 64
  %v5165 = vpop.permute.xlu0 %5164
  %5166 = vrot.lane.b32.xlu0 %v4134, 64
  %v5167 = vpop.permute.xlu0 %5166
  %5168 = vrot.lane.b32.xlu0 %v4103, 64
  %v5169 = vpop.permute.xlu0 %5168
  %5170 = vrot.lane.b32.xlu0 %v4135, 64
  %v5171 = vpop.permute.xlu0 %5170
  %5172 = vrot.lane.b32.xlu0 %v4104, 64
  %v5173 = vpop.permute.xlu0 %5172
  %5174 = vrot.lane.b32.xlu0 %v4136, 64
  %v5175 = vpop.permute.xlu0 %5174
  %5176 = vrot.lane.b32.xlu0 %v4105, 64
  %v5177 = vpop.permute.xlu0 %5176
  %5178 = vrot.lane.b32.xlu0 %v4137, 64
  %v5179 = vpop.permute.xlu0 %5178
  %5180 = vrot.lane.b32.xlu0 %v4106, 64
  %v5181 = vpop.permute.xlu0 %5180
  %5182 = vrot.lane.b32.xlu0 %v4138, 64
  %v5183 = vpop.permute.xlu0 %5182
  %5184 = vrot.lane.b32.xlu0 %v4107, 64
  %v5185 = vpop.permute.xlu0 %5184
  %5186 = vrot.lane.b32.xlu0 %v4139, 64
  %v5187 = vpop.permute.xlu0 %5186
  %vm5218 = vcmask 585217
  %5219 = vst.msk [vmem:[#allocation3 - $0x1] sm:$0xe] %vm5218, %v5129
  %5220 = vst.msk [vmem:[#allocation3 + $0x3] sm:$0xe] %vm5218, %v5131
  %5221 = vst.msk [vmem:[#allocation3 + $0x7] sm:$0xe] %vm5218, %v5133
  %5222 = vst.msk [vmem:[#allocation3 + $0xb] sm:$0xe] %vm5218, %v5135
  %5223 = vst.msk [vmem:[#allocation3 + $0xf] sm:$0xe] %vm5218, %v5137
  %5224 = vst.msk [vmem:[#allocation3 + $0x13] sm:$0xe] %vm5218, %v5139
  %5225 = vst.msk [vmem:[#allocation3 + $0x17] sm:$0xe] %vm5218, %v5141
  %5226 = vst.msk [vmem:[#allocation3 + $0x1b] sm:$0xe] %vm5218, %v5143
  %5227 = vst.msk [vmem:[#allocation3 + $0x1f] sm:$0xe] %vm5218, %v5145
  %5228 = vst.msk [vmem:[#allocation3 + $0x23] sm:$0xe] %vm5218, %v5147
  %5229 = vst.msk [vmem:[#allocation3 + $0x27] sm:$0xe] %vm5218, %v5149
  %5230 = vst.msk [vmem:[#allocation3 + $0x2b] sm:$0xe] %vm5218, %v5151
  %5231 = vst.msk [vmem:[#allocation3 + $0x2f] sm:$0xe] %vm5218, %v5153
  %5232 = vst.msk [vmem:[#allocation3 + $0x33] sm:$0xe] %vm5218, %v5155
  %5233 = vst.msk [vmem:[#allocation3 + $0x37] sm:$0xe] %vm5218, %v5157
  %5234 = vst.msk [vmem:[#allocation3 + $0x3f] sm:$0xe] %vm5218, %v5159
  %5235 = vst.msk [vmem:[#allocation3 + $0x43] sm:$0xe] %vm5218, %v5161
  %5236 = vst.msk [vmem:[#allocation3 + $0x47] sm:$0xe] %vm5218, %v5163
  %5237 = vst.msk [vmem:[#allocation3 + $0x4b] sm:$0xe] %vm5218, %v5165
  %5238 = vst.msk [vmem:[#allocation3 + $0x4f] sm:$0xe] %vm5218, %v5167
  %5239 = vst.msk [vmem:[#allocation3 + $0x53] sm:$0xe] %vm5218, %v5169
  %5240 = vst.msk [vmem:[#allocation3 + $0x57] sm:$0xe] %vm5218, %v5171
  %5241 = vst.msk [vmem:[#allocation3 + $0x5b] sm:$0xe] %vm5218, %v5173
  %5242 = vst.msk [vmem:[#allocation3 + $0x5f] sm:$0xe] %vm5218, %v5175
  %5243 = vst.msk [vmem:[#allocation3 + $0x63] sm:$0xe] %vm5218, %v5177
  %5244 = vst.msk [vmem:[#allocation3 + $0x67] sm:$0xe] %vm5218, %v5179
  %5245 = vst.msk [vmem:[#allocation3 + $0x6b] sm:$0xe] %vm5218, %v5181
  %5246 = vst.msk [vmem:[#allocation3 + $0x6f] sm:$0xe] %vm5218, %v5183
  %5247 = vst.msk [vmem:[#allocation3 + $0x73] sm:$0xe] %vm5218, %v5185
  %5248 = vst.msk [vmem:[#allocation3 + $0x77] sm:$0xe] %vm5218, %v5187
  %v5249 = vld [vmem:[#allocation3] sm:$0xf]
  %v5250 = vld [vmem:[#allocation3 + $0x4] sm:$0xf]
  %v5251 = vld [vmem:[#allocation3 + $0x8] sm:$0xf]
  %v5252 = vld [vmem:[#allocation3 + $0xc] sm:$0xf]
  %v5253 = vld [vmem:[#allocation3 + $0x10] sm:$0xf]
  %v5254 = vld [vmem:[#allocation3 + $0x14] sm:$0xf]
  %v5255 = vld [vmem:[#allocation3 + $0x18] sm:$0xf]
  %v5256 = vld [vmem:[#allocation3 + $0x1c] sm:$0xf]
  %v5257 = vld [vmem:[#allocation3 + $0x20] sm:$0xf]
  %v5258 = vld [vmem:[#allocation3 + $0x24] sm:$0xf]
  %v5259 = vld [vmem:[#allocation3 + $0x28] sm:$0xf]
  %v5260 = vld [vmem:[#allocation3 + $0x2c] sm:$0xf]
  %v5261 = vld [vmem:[#allocation3 + $0x30] sm:$0xf]
  %v5262 = vld [vmem:[#allocation3 + $0x34] sm:$0xf]
  %v5263 = vld [vmem:[#allocation3 + $0x38] sm:$0xf]
  %v5264 = vld [vmem:[#allocation3 + $0x3c] sm:$0xf]
  %v5265 = vld [vmem:[#allocation3 + $0x40] sm:$0xf]
  %v5266 = vld [vmem:[#allocation3 + $0x44] sm:$0xf]
  %v5267 = vld [vmem:[#allocation3 + $0x48] sm:$0xf]
  %v5268 = vld [vmem:[#allocation3 + $0x4c] sm:$0xf]
  %v5269 = vld [vmem:[#allocation3 + $0x50] sm:$0xf]
  %v5270 = vld [vmem:[#allocation3 + $0x54] sm:$0xf]
  %v5271 = vld [vmem:[#allocation3 + $0x58] sm:$0xf]
  %v5272 = vld [vmem:[#allocation3 + $0x5c] sm:$0xf]
  %v5273 = vld [vmem:[#allocation3 + $0x60] sm:$0xf]
  %v5274 = vld [vmem:[#allocation3 + $0x64] sm:$0xf]
  %v5275 = vld [vmem:[#allocation3 + $0x68] sm:$0xf]
  %v5276 = vld [vmem:[#allocation3 + $0x6c] sm:$0xf]
  %v5277 = vld [vmem:[#allocation3 + $0x70] sm:$0xf]
  %v5278 = vld [vmem:[#allocation3 + $0x74] sm:$0xf]
  %v5279 = vld [vmem:[#allocation3 + $0x78] sm:$0xf]
  %v5280 = vld [vmem:[#allocation3 + $0x7c] sm:$0xf]
  %v5313 = vcombine.low %v5249, %v5250
  %v5314 = vcombine.low %v5251, %v5252
  %v5315 = vcombine.low %v5253, %v5254
  %v5316 = vcombine.low %v5255, %v5256
  %v5317 = vcombine.low %v5257, %v5258
  %v5318 = vcombine.low %v5259, %v5260
  %v5319 = vcombine.low %v5261, %v5262
  %v5320 = vcombine.low %v5263, %v5264
  %v5321 = vcombine.low %v5265, %v5266
  %v5322 = vcombine.low %v5267, %v5268
  %v5323 = vcombine.low %v5269, %v5270
  %v5324 = vcombine.low %v5271, %v5272
  %v5325 = vcombine.low %v5273, %v5274
  %v5326 = vcombine.low %v5275, %v5276
  %v5327 = vcombine.low %v5277, %v5278
  %v5328 = vcombine.low %v5279, %v5280
  %v5345 = vpack.c.bf16 %v5314, %v5313
  %v5346 = vpack.c.bf16 %v5316, %v5315
  %v5347 = vpack.c.bf16 %v5318, %v5317
  %v5348 = vpack.c.bf16 %v5320, %v5319
  %v5349 = vpack.c.bf16 %v5322, %v5321
  %v5350 = vpack.c.bf16 %v5324, %v5323
  %v5351 = vpack.c.bf16 %v5326, %v5325
  %v5352 = vpack.c.bf16 %v5328, %v5327
  %v5353 = vld [vmem:[%s6] sm:$0xf]
  %v5354 = vld [vmem:[%s6 + $0x4] sm:$0xf]
  %v5355 = vld [vmem:[%s6 + $0x8] sm:$0xf]
  %v5356 = vld [vmem:[%s6 + $0xc] sm:$0xf]
  %v5357 = vld [vmem:[%s6 + $0x10] sm:$0xf]
  %v5358 = vld [vmem:[%s6 + $0x14] sm:$0xf]
  %v5359 = vld [vmem:[%s6 + $0x18] sm:$0xf]
  %v5360 = vld [vmem:[%s6 + $0x1c] sm:$0xf]
  %v5361 = vld [vmem:[%s6 + $0x20] sm:$0xf]
  %v5362 = vpack.c.bf16 %v1708, %v1708
  %v5363 = vpack.c.bf16 %v1709, %v1709
  %v5364 = vpack.c.bf16 %v1710, %v1710
  %v5365 = vpack.c.bf16 %v1711, %v1711
  %v5366 = vpack.c.bf16 %v1712, %v1712
  %v5367 = vpack.c.bf16 %v1713, %v1713
  %v5368 = vpack.c.bf16 %v1714, %v1714
  %v5369 = vpack.c.bf16 %v1715, %v1715
  %v5370 = vpack.c.bf16 %v1716, %v1716
  %v5371 = vpack.c.bf16 %v1717, %v1717
  %v5372 = vpack.c.bf16 %v1718, %v1718
  %v5373 = vpack.c.bf16 %v1719, %v1719
  %v5374 = vpack.c.bf16 %v1720, %v1720
  %v5375 = vpack.c.bf16 %v1721, %v1721
  %v5376 = vpack.c.bf16 %v1722, %v1722
  %v5377 = vpack.c.bf16 %v1723, %v1723
  %v5378 = vpack.c.bf16 %v1724, %v1724
  %v5379 = vpack.c.bf16 %v1725, %v1725
  %v5380 = vpack.c.bf16 %v1726, %v1726
  %v5381 = vpack.c.bf16 %v1727, %v1727
  %v5382 = vpack.c.bf16 %v1728, %v1728
  %v5383 = vpack.c.bf16 %v1729, %v1729
  %v5384 = vpack.c.bf16 %v1730, %v1730
  %v5385 = vpack.c.bf16 %v1731, %v1731
  %v5386 = vpack.c.bf16 %v1732, %v1732
  %v5387 = vpack.c.bf16 %v1733, %v1733
  %v5388 = vpack.c.bf16 %v1734, %v1734
  %v5389 = vpack.c.bf16 %v1735, %v1735
  %v5390 = vpack.c.bf16 %v1736, %v1736
  %v5391 = vpack.c.bf16 %v1737, %v1737
  %v5392 = vpack.c.bf16 %v1738, %v1738
  %v5393 = vpack.c.bf16 %v1739, %v1739
  %v5394 = vpack.c.bf16 %v1740, %v1740
  %v5395 = vpack.c.bf16 %v1741, %v1741
  %v5396 = vpack.c.bf16 %v1742, %v1742
  %v5397 = vpack.c.bf16 %v1743, %v1743
  %v5398 = vpack.c.bf16 %v1744, %v1744
  %v5399 = vpack.c.bf16 %v1745, %v1745
  %v5400 = vpack.c.bf16 %v1746, %v1746
  %v5401 = vpack.c.bf16 %v1747, %v1747
  %v5402 = vpack.c.bf16 %v1748, %v1748
  %v5403 = vpack.c.bf16 %v1749, %v1749
  %v5404 = vpack.c.bf16 %v1750, %v1750
  %v5405 = vpack.c.bf16 %v1751, %v1751
  %v5406 = vpack.c.bf16 %v1752, %v1752
  %v5407 = vpack.c.bf16 %v1753, %v1753
  %v5408 = vpack.c.bf16 %v1754, %v1754
  %v5409 = vpack.c.bf16 %v1755, %v1755
  %v5410 = vpack.c.bf16 %v1756, %v1756
  %v5411 = vpack.c.bf16 %v1757, %v1757
  %v5412 = vpack.c.bf16 %v1758, %v1758
  %v5413 = vpack.c.bf16 %v1759, %v1759
  %v5414 = vpack.c.bf16 %v1760, %v1760
  %v5415 = vpack.c.bf16 %v1761, %v1761
  %v5416 = vpack.c.bf16 %v1762, %v1762
  %v5417 = vpack.c.bf16 %v1763, %v1763
  %v5418 = vpack.c.bf16 %v1764, %v1764
  %v5419 = vpack.c.bf16 %v1765, %v1765
  %v5420 = vpack.c.bf16 %v1766, %v1766
  %v5421 = vpack.c.bf16 %v1767, %v1767
  %v5422 = vpack.c.bf16 %v1768, %v1768
  %v5423 = vpack.c.bf16 %v1769, %v1769
  %v5424 = vpack.c.bf16 %v1770, %v1770
  %v5425 = vpack.c.bf16 %v1771, %v1771
  %v5426 = vpack.c.bf16 %v1772, %v1772
  %v5427 = vpack.c.bf16 %v1773, %v1773
  %v5428 = vpack.c.bf16 %v1774, %v1774
  %v5429 = vpack.c.bf16 %v1775, %v1775
  %v5430 = vpack.c.bf16 %v1776, %v1776
  %v5431 = vpack.c.bf16 %v1777, %v1777
  %v5432 = vpack.c.bf16 %v1778, %v1778
  %v5433 = vpack.c.bf16 %v1779, %v1779
  %v5434 = vpack.c.bf16 %v1780, %v1780
  %v5435 = vpack.c.bf16 %v1781, %v1781
  %v5436 = vpack.c.bf16 %v1782, %v1782
  %v5437 = vpack.c.bf16 %v1783, %v1783
  %v5438 = vpack.c.bf16 %v1784, %v1784
  %v5439 = vpack.c.bf16 %v1785, %v1785
  %v5440 = vpack.c.bf16 %v1786, %v1786
  %v5441 = vpack.c.bf16 %v1787, %v1787
  %v5442 = vpack.c.bf16 %v1788, %v1788
  %v5443 = vpack.c.bf16 %v1789, %v1789
  %v5444 = vpack.c.bf16 %v1790, %v1790
  %v5445 = vpack.c.bf16 %v1791, %v1791
  %v5446 = vpack.c.bf16 %v1792, %v1792
  %v5447 = vpack.c.bf16 %v1793, %v1793
  %v5448 = vpack.c.bf16 %v1794, %v1794
  %v5449 = vpack.c.bf16 %v1795, %v1795
  %v5450 = vpack.c.bf16 %v1796, %v1796
  %v5451 = vpack.c.bf16 %v1797, %v1797
  %v5452 = vpack.c.bf16 %v1798, %v1798
  %v5453 = vpack.c.bf16 %v1799, %v1799
  %v5454 = vpack.c.bf16 %v1800, %v1800
  %v5455 = vpack.c.bf16 %v1801, %v1801
  %v5456 = vpack.c.bf16 %v1802, %v1802
  %v5457 = vpack.c.bf16 %v1803, %v1803
  %v5458 = vpack.c.bf16 %v1804, %v1804
  %v5459 = vpack.c.bf16 %v1805, %v1805
  %v5460 = vpack.c.bf16 %v1806, %v1806
  %v5461 = vpack.c.bf16 %v1807, %v1807
  %v5462 = vpack.c.bf16 %v1808, %v1808
  %v5463 = vpack.c.bf16 %v1809, %v1809
  %v5464 = vpack.c.bf16 %v1810, %v1810
  %v5465 = vpack.c.bf16 %v1811, %v1811
  %v5466 = vpack.c.bf16 %v1812, %v1812
  %v5467 = vpack.c.bf16 %v1813, %v1813
  %v5468 = vpack.c.bf16 %v1814, %v1814
  %v5469 = vpack.c.bf16 %v1815, %v1815
  %v5470 = vpack.c.bf16 %v1816, %v1816
  %v5471 = vpack.c.bf16 %v1817, %v1817
  %v5472 = vpack.c.bf16 %v1818, %v1818
  %v5473 = vpack.c.bf16 %v1819, %v1819
  %v5474 = vpack.c.bf16 %v1820, %v1820
  %v5475 = vpack.c.bf16 %v1821, %v1821
  %v5476 = vpack.c.bf16 %v1822, %v1822
  %v5477 = vpack.c.bf16 %v1823, %v1823
  %v5478 = vpack.c.bf16 %v1824, %v1824
  %v5479 = vpack.c.bf16 %v1825, %v1825
  %v5480 = vpack.c.bf16 %v1826, %v1826
  %v5481 = vpack.c.bf16 %v1827, %v1827
  %v5482 = vpack.c.bf16 %v1828, %v1828
  %v5483 = vpack.c.bf16 %v1829, %v1829
  %v5484 = vpack.c.bf16 %v1830, %v1830
  %v5485 = vpack.c.bf16 %v1831, %v1831
  %v5486 = vpack.c.bf16 %v1832, %v1832
  %v5487 = vpack.c.bf16 %v1833, %v1833
  %v5488 = vpack.c.bf16 %v1834, %v1834
  %v5489 = vpack.c.bf16 %v1835, %v1835
  %v5490 = vld [vmem:[%s7] sm:$0x3]
  %v5619 = vunpack.c.l.b16 %v5362
  %v5620 = vunpack.c.l.b16 %v5363
  %v5621 = vunpack.c.l.b16 %v5364
  %v5622 = vunpack.c.l.b16 %v5365
  %v5623 = vunpack.c.l.b16 %v5366
  %v5624 = vunpack.c.l.b16 %v5367
  %v5625 = vunpack.c.l.b16 %v5368
  %v5626 = vunpack.c.l.b16 %v5369
  %v5627 = vunpack.c.l.b16 %v5370
  %v5628 = vunpack.c.l.b16 %v5371
  %v5629 = vunpack.c.l.b16 %v5372
  %v5630 = vunpack.c.l.b16 %v5373
  %v5631 = vunpack.c.l.b16 %v5374
  %v5632 = vunpack.c.l.b16 %v5375
  %v5633 = vunpack.c.l.b16 %v5376
  %v5634 = vunpack.c.l.b16 %v5377
  %v5635 = vunpack.c.l.b16 %v5378
  %v5636 = vunpack.c.l.b16 %v5379
  %v5637 = vunpack.c.l.b16 %v5380
  %v5638 = vunpack.c.l.b16 %v5381
  %v5639 = vunpack.c.l.b16 %v5382
  %v5640 = vunpack.c.l.b16 %v5383
  %v5641 = vunpack.c.l.b16 %v5384
  %v5642 = vunpack.c.l.b16 %v5385
  %v5643 = vunpack.c.l.b16 %v5386
  %v5644 = vunpack.c.l.b16 %v5387
  %v5645 = vunpack.c.l.b16 %v5388
  %v5646 = vunpack.c.l.b16 %v5389
  %v5647 = vunpack.c.l.b16 %v5390
  %v5648 = vunpack.c.l.b16 %v5391
  %v5649 = vunpack.c.l.b16 %v5392
  %v5650 = vunpack.c.l.b16 %v5393
  %v5651 = vunpack.c.l.b16 %v5394
  %v5652 = vunpack.c.l.b16 %v5395
  %v5653 = vunpack.c.l.b16 %v5396
  %v5654 = vunpack.c.l.b16 %v5397
  %v5655 = vunpack.c.l.b16 %v5398
  %v5656 = vunpack.c.l.b16 %v5399
  %v5657 = vunpack.c.l.b16 %v5400
  %v5658 = vunpack.c.l.b16 %v5401
  %v5659 = vunpack.c.l.b16 %v5402
  %v5660 = vunpack.c.l.b16 %v5403
  %v5661 = vunpack.c.l.b16 %v5404
  %v5662 = vunpack.c.l.b16 %v5405
  %v5663 = vunpack.c.l.b16 %v5406
  %v5664 = vunpack.c.l.b16 %v5407
  %v5665 = vunpack.c.l.b16 %v5408
  %v5666 = vunpack.c.l.b16 %v5409
  %v5667 = vunpack.c.l.b16 %v5410
  %v5668 = vunpack.c.l.b16 %v5411
  %v5669 = vunpack.c.l.b16 %v5412
  %v5670 = vunpack.c.l.b16 %v5413
  %v5671 = vunpack.c.l.b16 %v5414
  %v5672 = vunpack.c.l.b16 %v5415
  %v5673 = vunpack.c.l.b16 %v5416
  %v5674 = vunpack.c.l.b16 %v5417
  %v5675 = vunpack.c.l.b16 %v5418
  %v5676 = vunpack.c.l.b16 %v5419
  %v5677 = vunpack.c.l.b16 %v5420
  %v5678 = vunpack.c.l.b16 %v5421
  %v5679 = vunpack.c.l.b16 %v5422
  %v5680 = vunpack.c.l.b16 %v5423
  %v5681 = vunpack.c.l.b16 %v5424
  %v5682 = vunpack.c.l.b16 %v5425
  %v5683 = vunpack.c.l.b16 %v5426
  %v5684 = vunpack.c.l.b16 %v5427
  %v5685 = vunpack.c.l.b16 %v5428
  %v5686 = vunpack.c.l.b16 %v5429
  %v5687 = vunpack.c.l.b16 %v5430
  %v5688 = vunpack.c.l.b16 %v5431
  %v5689 = vunpack.c.l.b16 %v5432
  %v5690 = vunpack.c.l.b16 %v5433
  %v5691 = vunpack.c.l.b16 %v5434
  %v5692 = vunpack.c.l.b16 %v5435
  %v5693 = vunpack.c.l.b16 %v5436
  %v5694 = vunpack.c.l.b16 %v5437
  %v5695 = vunpack.c.l.b16 %v5438
  %v5696 = vunpack.c.l.b16 %v5439
  %v5697 = vunpack.c.l.b16 %v5440
  %v5698 = vunpack.c.l.b16 %v5441
  %v5699 = vunpack.c.l.b16 %v5442
  %v5700 = vunpack.c.l.b16 %v5443
  %v5701 = vunpack.c.l.b16 %v5444
  %v5702 = vunpack.c.l.b16 %v5445
  %v5703 = vunpack.c.l.b16 %v5446
  %v5704 = vunpack.c.l.b16 %v5447
  %v5705 = vunpack.c.l.b16 %v5448
  %v5706 = vunpack.c.l.b16 %v5449
  %v5707 = vunpack.c.l.b16 %v5450
  %v5708 = vunpack.c.l.b16 %v5451
  %v5709 = vunpack.c.l.b16 %v5452
  %v5710 = vunpack.c.l.b16 %v5453
  %v5711 = vunpack.c.l.b16 %v5454
  %v5712 = vunpack.c.l.b16 %v5455
  %v5713 = vunpack.c.l.b16 %v5456
  %v5714 = vunpack.c.l.b16 %v5457
  %v5715 = vunpack.c.l.b16 %v5458
  %v5716 = vunpack.c.l.b16 %v5459
  %v5717 = vunpack.c.l.b16 %v5460
  %v5718 = vunpack.c.l.b16 %v5461
  %v5719 = vunpack.c.l.b16 %v5462
  %v5720 = vunpack.c.l.b16 %v5463
  %v5721 = vunpack.c.l.b16 %v5464
  %v5722 = vunpack.c.l.b16 %v5465
  %v5723 = vunpack.c.l.b16 %v5466
  %v5724 = vunpack.c.l.b16 %v5467
  %v5725 = vunpack.c.l.b16 %v5468
  %v5726 = vunpack.c.l.b16 %v5469
  %v5727 = vunpack.c.l.b16 %v5470
  %v5728 = vunpack.c.l.b16 %v5471
  %v5729 = vunpack.c.l.b16 %v5472
  %v5730 = vunpack.c.l.b16 %v5473
  %v5731 = vunpack.c.l.b16 %v5474
  %v5732 = vunpack.c.l.b16 %v5475
  %v5733 = vunpack.c.l.b16 %v5476
  %v5734 = vunpack.c.l.b16 %v5477
  %v5735 = vunpack.c.l.b16 %v5478
  %v5736 = vunpack.c.l.b16 %v5479
  %v5737 = vunpack.c.l.b16 %v5480
  %v5738 = vunpack.c.l.b16 %v5481
  %v5739 = vunpack.c.l.b16 %v5482
  %v5740 = vunpack.c.l.b16 %v5483
  %v5741 = vunpack.c.l.b16 %v5484
  %v5742 = vunpack.c.l.b16 %v5485
  %v5743 = vunpack.c.l.b16 %v5486
  %v5744 = vunpack.c.l.b16 %v5487
  %v5745 = vunpack.c.l.b16 %v5488
  %v5746 = vunpack.c.l.b16 %v5489
  %v5747 = vrot.slane %v5620, 7
  %v5748 = vsel %vm2357, %v5747, %v5619
  %v5749 = vrot.slane %v5621, 6
  %v5750 = vsel %vm2359, %v5749, %v5748
  %v5751 = vrot.slane %v5622, 5
  %v5752 = vsel %vm2631, %v5751, %v5750
  %v5753 = vrot.slane %v5623, 4
  %vm5754 = vcmask 1044484
  %v5755 = vsel %vm5754, %v5753, %v5752
  %v5756 = vrot.slane %v5624, 3
  %vm5757 = vcmask 1045509
  %v5758 = vsel %vm5757, %v5756, %v5755
  %v5759 = vrot.slane %v5625, 2
  %vm5760 = vcmask 1046534
  %v5761 = vsel %vm5760, %v5759, %v5758
  %v5762 = vrot.slane %v5626, 1
  %vm5763 = vcmask 1047559
  %v5764 = vsel %vm5763, %v5762, %v5761
  %v5765 = vrot.slane %v5628, 7
  %v5766 = vsel %vm2357, %v5765, %v5627
  %v5767 = vrot.slane %v5629, 6
  %v5768 = vsel %vm2359, %v5767, %v5766
  %v5769 = vrot.slane %v5630, 5
  %v5770 = vsel %vm2631, %v5769, %v5768
  %v5771 = vrot.slane %v5631, 4
  %v5772 = vsel %vm5754, %v5771, %v5770
  %v5773 = vrot.slane %v5632, 3
  %v5774 = vsel %vm5757, %v5773, %v5772
  %v5775 = vrot.slane %v5633, 2
  %v5776 = vsel %vm5760, %v5775, %v5774
  %v5777 = vrot.slane %v5634, 1
  %v5778 = vsel %vm5763, %v5777, %v5776
  %v5779 = vrot.slane %v5636, 7
  %v5780 = vsel %vm2357, %v5779, %v5635
  %v5781 = vrot.slane %v5637, 6
  %v5782 = vsel %vm2359, %v5781, %v5780
  %v5783 = vrot.slane %v5638, 5
  %v5784 = vsel %vm2631, %v5783, %v5782
  %v5785 = vrot.slane %v5639, 4
  %v5786 = vsel %vm5754, %v5785, %v5784
  %v5787 = vrot.slane %v5640, 3
  %v5788 = vsel %vm5757, %v5787, %v5786
  %v5789 = vrot.slane %v5641, 2
  %v5790 = vsel %vm5760, %v5789, %v5788
  %v5791 = vrot.slane %v5642, 1
  %v5792 = vsel %vm5763, %v5791, %v5790
  %v5793 = vrot.slane %v5644, 7
  %v5794 = vsel %vm2357, %v5793, %v5643
  %v5795 = vrot.slane %v5645, 6
  %v5796 = vsel %vm2359, %v5795, %v5794
  %v5797 = vrot.slane %v5646, 5
  %v5798 = vsel %vm2631, %v5797, %v5796
  %v5799 = vrot.slane %v5647, 4
  %v5800 = vsel %vm5754, %v5799, %v5798
  %v5801 = vrot.slane %v5648, 3
  %v5802 = vsel %vm5757, %v5801, %v5800
  %v5803 = vrot.slane %v5649, 2
  %v5804 = vsel %vm5760, %v5803, %v5802
  %v5805 = vrot.slane %v5650, 1
  %v5806 = vsel %vm5763, %v5805, %v5804
  %v5807 = vrot.slane %v5652, 7
  %v5808 = vsel %vm2357, %v5807, %v5651
  %v5809 = vrot.slane %v5653, 6
  %v5810 = vsel %vm2359, %v5809, %v5808
  %v5811 = vrot.slane %v5654, 5
  %v5812 = vsel %vm2631, %v5811, %v5810
  %v5813 = vrot.slane %v5655, 4
  %v5814 = vsel %vm5754, %v5813, %v5812
  %v5815 = vrot.slane %v5656, 3
  %v5816 = vsel %vm5757, %v5815, %v5814
  %v5817 = vrot.slane %v5657, 2
  %v5818 = vsel %vm5760, %v5817, %v5816
  %v5819 = vrot.slane %v5658, 1
  %v5820 = vsel %vm5763, %v5819, %v5818
  %v5821 = vrot.slane %v5660, 7
  %v5822 = vsel %vm2357, %v5821, %v5659
  %v5823 = vrot.slane %v5661, 6
  %v5824 = vsel %vm2359, %v5823, %v5822
  %v5825 = vrot.slane %v5662, 5
  %v5826 = vsel %vm2631, %v5825, %v5824
  %v5827 = vrot.slane %v5663, 4
  %v5828 = vsel %vm5754, %v5827, %v5826
  %v5829 = vrot.slane %v5664, 3
  %v5830 = vsel %vm5757, %v5829, %v5828
  %v5831 = vrot.slane %v5665, 2
  %v5832 = vsel %vm5760, %v5831, %v5830
  %v5833 = vrot.slane %v5666, 1
  %v5834 = vsel %vm5763, %v5833, %v5832
  %v5835 = vrot.slane %v5668, 7
  %v5836 = vsel %vm2357, %v5835, %v5667
  %v5837 = vrot.slane %v5669, 6
  %v5838 = vsel %vm2359, %v5837, %v5836
  %v5839 = vrot.slane %v5670, 5
  %v5840 = vsel %vm2631, %v5839, %v5838
  %v5841 = vrot.slane %v5671, 4
  %v5842 = vsel %vm5754, %v5841, %v5840
  %v5843 = vrot.slane %v5672, 3
  %v5844 = vsel %vm5757, %v5843, %v5842
  %v5845 = vrot.slane %v5673, 2
  %v5846 = vsel %vm5760, %v5845, %v5844
  %v5847 = vrot.slane %v5674, 1
  %v5848 = vsel %vm5763, %v5847, %v5846
  %v5849 = vrot.slane %v5676, 7
  %v5850 = vsel %vm2357, %v5849, %v5675
  %v5851 = vrot.slane %v5677, 6
  %v5852 = vsel %vm2359, %v5851, %v5850
  %v5853 = vrot.slane %v5678, 5
  %v5854 = vsel %vm2631, %v5853, %v5852
  %v5855 = vrot.slane %v5679, 4
  %v5856 = vsel %vm5754, %v5855, %v5854
  %v5857 = vrot.slane %v5680, 3
  %v5858 = vsel %vm5757, %v5857, %v5856
  %v5859 = vrot.slane %v5681, 2
  %v5860 = vsel %vm5760, %v5859, %v5858
  %v5861 = vrot.slane %v5682, 1
  %v5862 = vsel %vm5763, %v5861, %v5860
  %v5863 = vrot.slane %v5684, 7
  %v5864 = vsel %vm2357, %v5863, %v5683
  %v5865 = vrot.slane %v5685, 6
  %v5866 = vsel %vm2359, %v5865, %v5864
  %v5867 = vrot.slane %v5686, 5
  %v5868 = vsel %vm2631, %v5867, %v5866
  %v5869 = vrot.slane %v5687, 4
  %v5870 = vsel %vm5754, %v5869, %v5868
  %v5871 = vrot.slane %v5688, 3
  %v5872 = vsel %vm5757, %v5871, %v5870
  %v5873 = vrot.slane %v5689, 2
  %v5874 = vsel %vm5760, %v5873, %v5872
  %v5875 = vrot.slane %v5690, 1
  %v5876 = vsel %vm5763, %v5875, %v5874
  %v5877 = vrot.slane %v5692, 7
  %v5878 = vsel %vm2357, %v5877, %v5691
  %v5879 = vrot.slane %v5693, 6
  %v5880 = vsel %vm2359, %v5879, %v5878
  %v5881 = vrot.slane %v5694, 5
  %v5882 = vsel %vm2631, %v5881, %v5880
  %v5883 = vrot.slane %v5695, 4
  %v5884 = vsel %vm5754, %v5883, %v5882
  %v5885 = vrot.slane %v5696, 3
  %v5886 = vsel %vm5757, %v5885, %v5884
  %v5887 = vrot.slane %v5697, 2
  %v5888 = vsel %vm5760, %v5887, %v5886
  %v5889 = vrot.slane %v5698, 1
  %v5890 = vsel %vm5763, %v5889, %v5888
  %v5891 = vrot.slane %v5700, 7
  %v5892 = vsel %vm2357, %v5891, %v5699
  %v5893 = vrot.slane %v5701, 6
  %v5894 = vsel %vm2359, %v5893, %v5892
  %v5895 = vrot.slane %v5702, 5
  %v5896 = vsel %vm2631, %v5895, %v5894
  %v5897 = vrot.slane %v5703, 4
  %v5898 = vsel %vm5754, %v5897, %v5896
  %v5899 = vrot.slane %v5704, 3
  %v5900 = vsel %vm5757, %v5899, %v5898
  %v5901 = vrot.slane %v5705, 2
  %v5902 = vsel %vm5760, %v5901, %v5900
  %v5903 = vrot.slane %v5706, 1
  %v5904 = vsel %vm5763, %v5903, %v5902
  %v5905 = vrot.slane %v5708, 7
  %v5906 = vsel %vm2357, %v5905, %v5707
  %v5907 = vrot.slane %v5709, 6
  %v5908 = vsel %vm2359, %v5907, %v5906
  %v5909 = vrot.slane %v5710, 5
  %v5910 = vsel %vm2631, %v5909, %v5908
  %v5911 = vrot.slane %v5711, 4
  %v5912 = vsel %vm5754, %v5911, %v5910
  %v5913 = vrot.slane %v5712, 3
  %v5914 = vsel %vm5757, %v5913, %v5912
  %v5915 = vrot.slane %v5713, 2
  %v5916 = vsel %vm5760, %v5915, %v5914
  %v5917 = vrot.slane %v5714, 1
  %v5918 = vsel %vm5763, %v5917, %v5916
  %v5919 = vrot.slane %v5716, 7
  %v5920 = vsel %vm2357, %v5919, %v5715
  %v5921 = vrot.slane %v5717, 6
  %v5922 = vsel %vm2359, %v5921, %v5920
  %v5923 = vrot.slane %v5718, 5
  %v5924 = vsel %vm2631, %v5923, %v5922
  %v5925 = vrot.slane %v5719, 4
  %v5926 = vsel %vm5754, %v5925, %v5924
  %v5927 = vrot.slane %v5720, 3
  %v5928 = vsel %vm5757, %v5927, %v5926
  %v5929 = vrot.slane %v5721, 2
  %v5930 = vsel %vm5760, %v5929, %v5928
  %v5931 = vrot.slane %v5722, 1
  %v5932 = vsel %vm5763, %v5931, %v5930
  %v5933 = vrot.slane %v5724, 7
  %v5934 = vsel %vm2357, %v5933, %v5723
  %v5935 = vrot.slane %v5725, 6
  %v5936 = vsel %vm2359, %v5935, %v5934
  %v5937 = vrot.slane %v5726, 5
  %v5938 = vsel %vm2631, %v5937, %v5936
  %v5939 = vrot.slane %v5727, 4
  %v5940 = vsel %vm5754, %v5939, %v5938
  %v5941 = vrot.slane %v5728, 3
  %v5942 = vsel %vm5757, %v5941, %v5940
  %v5943 = vrot.slane %v5729, 2
  %v5944 = vsel %vm5760, %v5943, %v5942
  %v5945 = vrot.slane %v5730, 1
  %v5946 = vsel %vm5763, %v5945, %v5944
  %v5947 = vrot.slane %v5732, 7
  %v5948 = vsel %vm2357, %v5947, %v5731
  %v5949 = vrot.slane %v5733, 6
  %v5950 = vsel %vm2359, %v5949, %v5948
  %v5951 = vrot.slane %v5734, 5
  %v5952 = vsel %vm2631, %v5951, %v5950
  %v5953 = vrot.slane %v5735, 4
  %v5954 = vsel %vm5754, %v5953, %v5952
  %v5955 = vrot.slane %v5736, 3
  %v5956 = vsel %vm5757, %v5955, %v5954
  %v5957 = vrot.slane %v5737, 2
  %v5958 = vsel %vm5760, %v5957, %v5956
  %v5959 = vrot.slane %v5738, 1
  %v5960 = vsel %vm5763, %v5959, %v5958
  %v5961 = vrot.slane %v5740, 7
  %v5962 = vsel %vm2357, %v5961, %v5739
  %v5963 = vrot.slane %v5741, 6
  %v5964 = vsel %vm2359, %v5963, %v5962
  %v5965 = vrot.slane %v5742, 5
  %v5966 = vsel %vm2631, %v5965, %v5964
  %v5967 = vrot.slane %v5743, 4
  %v5968 = vsel %vm5754, %v5967, %v5966
  %v5969 = vrot.slane %v5744, 3
  %v5970 = vsel %vm5757, %v5969, %v5968
  %v5971 = vrot.slane %v5745, 2
  %v5972 = vsel %vm5760, %v5971, %v5970
  %v5973 = vrot.slane %v5746, 1
  %v5974 = vsel %vm5763, %v5973, %v5972
  %v5975 = vpack.c.b16 %v5778, %v5764
  %v5976 = vpack.c.b16 %v5806, %v5792
  %v5977 = vpack.c.b16 %v5834, %v5820
  %v5978 = vpack.c.b16 %v5862, %v5848
  %v5979 = vpack.c.b16 %v5890, %v5876
  %v5980 = vpack.c.b16 %v5918, %v5904
  %v5981 = vpack.c.b16 %v5946, %v5932
  %v5982 = vpack.c.b16 %v5974, %v5960
  %vm5983 = vcmask 31744
  %v5985 = vsel %vm5983, %v5975, 0
  %v5988 = vsel %vm5983, %v5976, 0
  %v5991 = vsel %vm5983, %v5977, 0
  %v5994 = vsel %vm5983, %v5978, 0
  %v5997 = vsel %vm5983, %v5979, 0
  %v6000 = vsel %vm5983, %v5980, 0
  %v6003 = vsel %vm5983, %v5981, 0
  %v6006 = vsel %vm5983, %v5982, 0
  %v6009 = vsel %vm3913, %v5490, 0
  %6011 = vmatprep.subr.bf16.mxu0 0
  %6012 = vmatpush1.bf16.msra.mxu0 0
  %6013 = vmatprep.subr.bf16.mxu0 0
  %6014 = vmatpush1.bf16.msra.mxu0 0
  %6015 = vmatprep.subr.bf16.mxu0 0
  %6016 = vmatpush1.bf16.msra.mxu0 0
  %6017 = vmatprep.subr.bf16.mxu0 0
  %6018 = vmatpush1.bf16.msra.mxu0 0
  %6019 = vmatprep.subr.bf16.mxu0 0
  %6020 = vmatpush1.bf16.msra.mxu0 0
  %6021 = vmatprep.subr.bf16.mxu0 0
  %6022 = vmatpush1.bf16.msra.mxu0 0
  %6023 = vmatprep.subr.bf16.mxu0 0
  %6024 = vmatpush1.bf16.msra.mxu0 0
  %6025 = vmatprep.subr.bf16.mxu0 0
  %6026 = vmatpush1.bf16.msra.mxu0 %v6009
  %6027 = vmatprep.subr.bf16.mxu0 0
  %6028 = vmatpush2.bf16.msra.mxu0 0
  %6029 = vmatprep.subr.bf16.mxu0 0
  %6030 = vmatpush2.bf16.msra.mxu0 0
  %6031 = vmatprep.subr.bf16.mxu0 0
  %6032 = vmatpush2.bf16.msra.mxu0 0
  %6033 = vmatprep.subr.bf16.mxu0 0
  %6034 = vmatpush2.bf16.msra.mxu0 0
  %6035 = vmatprep.subr.bf16.mxu0 0
  %6036 = vmatpush2.bf16.msra.mxu0 0
  %6037 = vmatprep.subr.bf16.mxu0 0
  %6038 = vmatpush2.bf16.msra.mxu0 0
  %6039 = vmatprep.subr.bf16.mxu0 0
  %6040 = vmatpush2.bf16.msra.mxu0 0
  %6041 = vmatprep.subr.bf16.mxu0 0
  %6042 = vmatpush2.bf16.msra.mxu0 0
  %6043 = vmatprep.mubr.bf16.mxu0 0
  %6044 = vmatmul.mubr.bf16.gmra.mxu0 %v5985
  %v6045 = vpop.f32.mrf.mxu0
  %v6046 = vadd.f32 0.0, %v6045
  %v6047 = vpop.f32.mrf.mxu0
  %v6048 = vpop.f32.mrf.mxu0
  %v6049 = vadd.f32 0.0, %v6048
  %v6050 = vpop.f32.mrf.mxu0
  %6051 = vmatprep.mubr.bf16.mxu0 0
  %6052 = vmatmul.mubr.bf16.gmra.mxu0 %v5988
  %v6053 = vpop.f32.mrf.mxu0
  %v6054 = vadd.f32 0.0, %v6053
  %v6055 = vpop.f32.mrf.mxu0
  %v6056 = vpop.f32.mrf.mxu0
  %v6057 = vadd.f32 0.0, %v6056
  %v6058 = vpop.f32.mrf.mxu0
  %6059 = vmatprep.mubr.bf16.mxu0 0
  %6060 = vmatmul.mubr.bf16.gmra.mxu0 %v5991
  %v6061 = vpop.f32.mrf.mxu0
  %v6062 = vadd.f32 0.0, %v6061
  %v6063 = vpop.f32.mrf.mxu0
  %v6064 = vpop.f32.mrf.mxu0
  %v6065 = vadd.f32 0.0, %v6064
  %v6066 = vpop.f32.mrf.mxu0
  %6067 = vmatprep.mubr.bf16.mxu0 0
  %6068 = vmatmul.mubr.bf16.gmra.mxu0 %v5994
  %v6069 = vpop.f32.mrf.mxu0
  %v6070 = vadd.f32 0.0, %v6069
  %v6071 = vpop.f32.mrf.mxu0
  %v6072 = vpop.f32.mrf.mxu0
  %v6073 = vadd.f32 0.0, %v6072
  %v6074 = vpop.f32.mrf.mxu0
  %6075 = vmatprep.mubr.bf16.mxu0 0
  %6076 = vmatmul.mubr.bf16.gmra.mxu0 %v5997
  %v6077 = vpop.f32.mrf.mxu0
  %v6078 = vadd.f32 0.0, %v6077
  %v6079 = vpop.f32.mrf.mxu0
  %v6080 = vpop.f32.mrf.mxu0
  %v6081 = vadd.f32 0.0, %v6080
  %v6082 = vpop.f32.mrf.mxu0
  %6083 = vmatprep.mubr.bf16.mxu0 0
  %6084 = vmatmul.mubr.bf16.gmra.mxu0 %v6000
  %v6085 = vpop.f32.mrf.mxu0
  %v6086 = vadd.f32 0.0, %v6085
  %v6087 = vpop.f32.mrf.mxu0
  %v6088 = vpop.f32.mrf.mxu0
  %v6089 = vadd.f32 0.0, %v6088
  %v6090 = vpop.f32.mrf.mxu0
  %6091 = vmatprep.mubr.bf16.mxu0 0
  %6092 = vmatmul.mubr.bf16.gmra.mxu0 %v6003
  %v6093 = vpop.f32.mrf.mxu0
  %v6094 = vadd.f32 0.0, %v6093
  %v6095 = vpop.f32.mrf.mxu0
  %v6096 = vpop.f32.mrf.mxu0
  %v6097 = vadd.f32 0.0, %v6096
  %v6098 = vpop.f32.mrf.mxu0
  %6099 = vmatprep.mubr.bf16.mxu0 0
  %6100 = vmatmul.mubr.bf16.gmra.mxu0 %v6006
  %v6101 = vpop.f32.mrf.mxu0
  %v6102 = vadd.f32 0.0, %v6101
  %v6103 = vpop.f32.mrf.mxu0
  %v6104 = vpop.f32.mrf.mxu0
  %v6105 = vadd.f32 0.0, %v6104
  %v6106 = vpop.f32.mrf.mxu0
  %6107 = vdwg.mxu0
  %v6117 = vunpack.c.l.b16 %v5353
  %v6118 = vunpack.c.l.b16 %v5354
  %v6119 = vunpack.c.l.b16 %v5355
  %v6120 = vunpack.c.l.b16 %v5356
  %v6121 = vunpack.c.l.b16 %v5357
  %v6122 = vunpack.c.l.b16 %v5358
  %v6123 = vunpack.c.l.b16 %v5359
  %v6124 = vunpack.c.l.b16 %v5360
  %v6125 = vunpack.c.l.b16 %v5361
  %v6126 = vpack.c.b16 %v6118, %v6117
  %v6127 = vpack.c.b16 %v6120, %v6119
  %v6128 = vpack.c.b16 %v6122, %v6121
  %v6129 = vpack.c.b16 %v6124, %v6123
  %v6130 = vpack.c.b16 %v6125, %v6125
  %vm6135 = vcmask 588800
  %v6137 = vsel %vm6135, %v5345, 0
  %v6140 = vsel %vm6135, %v5346, 0
  %v6143 = vsel %vm6135, %v5347, 0
  %v6146 = vsel %vm6135, %v5348, 0
  %v6149 = vsel %vm6135, %v5349, 0
  %v6152 = vsel %vm6135, %v5350, 0
  %v6155 = vsel %vm6135, %v5351, 0
  %v6158 = vsel %vm6135, %v5352, 0
  %vm6160 = vcmask 1043456
  %v6162 = vsel %vm6160, %v6130, 0
  %6164 = vmatprep.subr.bf16.mxu0 0
  %6165 = vmatpush1.bf16.msra.mxu0 0
  %6166 = vmatprep.subr.bf16.mxu0 0
  %6167 = vmatpush1.bf16.msra.mxu0 0
  %6168 = vmatprep.subr.bf16.mxu0 0
  %6169 = vmatpush1.bf16.msra.mxu0 0
  %6170 = vmatprep.subr.bf16.mxu0 0
  %6171 = vmatpush1.bf16.msra.mxu0 %v6162
  %6172 = vmatprep.subr.bf16.mxu0 0
  %6173 = vmatpush1.bf16.msra.mxu0 %v6129
  %6174 = vmatprep.subr.bf16.mxu0 0
  %6175 = vmatpush1.bf16.msra.mxu0 %v6128
  %6176 = vmatprep.subr.bf16.mxu0 0
  %6177 = vmatpush1.bf16.msra.mxu0 %v6127
  %6178 = vmatprep.subr.bf16.mxu0 0
  %6179 = vmatpush1.bf16.msra.mxu0 %v6126
  %6180 = vmatprep.subr.bf16.mxu0 0
  %6181 = vmatpush2.bf16.msra.mxu0 0
  %6182 = vmatprep.subr.bf16.mxu0 0
  %6183 = vmatpush2.bf16.msra.mxu0 0
  %6184 = vmatprep.subr.bf16.mxu0 0
  %6185 = vmatpush2.bf16.msra.mxu0 0
  %6186 = vmatprep.subr.bf16.mxu0 0
  %6187 = vmatpush2.bf16.msra.mxu0 0
  %6188 = vmatprep.subr.bf16.mxu0 0
  %6189 = vmatpush2.bf16.msra.mxu0 0
  %6190 = vmatprep.subr.bf16.mxu0 0
  %6191 = vmatpush2.bf16.msra.mxu0 0
  %6192 = vmatprep.subr.bf16.mxu0 0
  %6193 = vmatpush2.bf16.msra.mxu0 0
  %6194 = vmatprep.subr.bf16.mxu0 0
  %6195 = vmatpush2.bf16.msra.mxu0 0
  %6196 = vmatprep.mubr.bf16.mxu0 0
  %6197 = vmatmul.mubr.bf16.gmra.mxu0 %v6137
  %v6198 = vpop.f32.mrf.mxu0
  %v6199 = vadd.f32 %v6046, %v6198
  %v6200 = vpop.f32.mrf.mxu0
  %v6201 = vpop.f32.mrf.mxu0
  %v6202 = vadd.f32 %v6049, %v6201
  %v6203 = vpop.f32.mrf.mxu0
  %6204 = vmatprep.mubr.bf16.mxu0 0
  %6205 = vmatmul.mubr.bf16.gmra.mxu0 %v6140
  %v6206 = vpop.f32.mrf.mxu0
  %v6207 = vadd.f32 %v6054, %v6206
  %v6208 = vpop.f32.mrf.mxu0
  %v6209 = vpop.f32.mrf.mxu0
  %v6210 = vadd.f32 %v6057, %v6209
  %v6211 = vpop.f32.mrf.mxu0
  %6212 = vmatprep.mubr.bf16.mxu0 0
  %6213 = vmatmul.mubr.bf16.gmra.mxu0 %v6143
  %v6214 = vpop.f32.mrf.mxu0
  %v6215 = vadd.f32 %v6062, %v6214
  %v6216 = vpop.f32.mrf.mxu0
  %v6217 = vpop.f32.mrf.mxu0
  %v6218 = vadd.f32 %v6065, %v6217
  %v6219 = vpop.f32.mrf.mxu0
  %6220 = vmatprep.mubr.bf16.mxu0 0
  %6221 = vmatmul.mubr.bf16.gmra.mxu0 %v6146
  %v6222 = vpop.f32.mrf.mxu0
  %v6223 = vadd.f32 %v6070, %v6222
  %v6224 = vpop.f32.mrf.mxu0
  %v6225 = vpop.f32.mrf.mxu0
  %v6226 = vadd.f32 %v6073, %v6225
  %v6227 = vpop.f32.mrf.mxu0
  %6228 = vmatprep.mubr.bf16.mxu0 0
  %6229 = vmatmul.mubr.bf16.gmra.mxu0 %v6149
  %v6230 = vpop.f32.mrf.mxu0
  %v6231 = vadd.f32 %v6078, %v6230
  %v6232 = vpop.f32.mrf.mxu0
  %v6233 = vpop.f32.mrf.mxu0
  %v6234 = vadd.f32 %v6081, %v6233
  %v6235 = vpop.f32.mrf.mxu0
  %6236 = vmatprep.mubr.bf16.mxu0 0
  %6237 = vmatmul.mubr.bf16.gmra.mxu0 %v6152
  %v6238 = vpop.f32.mrf.mxu0
  %v6239 = vadd.f32 %v6086, %v6238
  %v6240 = vpop.f32.mrf.mxu0
  %v6241 = vpop.f32.mrf.mxu0
  %v6242 = vadd.f32 %v6089, %v6241
  %v6243 = vpop.f32.mrf.mxu0
  %6244 = vmatprep.mubr.bf16.mxu0 0
  %6245 = vmatmul.mubr.bf16.gmra.mxu0 %v6155
  %v6246 = vpop.f32.mrf.mxu0
  %v6247 = vadd.f32 %v6094, %v6246
  %v6248 = vpop.f32.mrf.mxu0
  %v6249 = vpop.f32.mrf.mxu0
  %v6250 = vadd.f32 %v6097, %v6249
  %v6251 = vpop.f32.mrf.mxu0
  %6252 = vmatprep.mubr.bf16.mxu0 0
  %6253 = vmatmul.mubr.bf16.gmra.mxu0 %v6158
  %v6254 = vpop.f32.mrf.mxu0
  %v6255 = vadd.f32 %v6102, %v6254
  %v6256 = vpop.f32.mrf.mxu0
  %v6257 = vpop.f32.mrf.mxu0
  %v6258 = vadd.f32 %v6105, %v6257
  %v6259 = vpop.f32.mrf.mxu0
  %6260 = vdwg.mxu0
  %vm6261 = vcmask 64512
  %6262 = vst.msk [vmem:[%s8] sm:$0xff] %vm6261, %v6199
  %6263 = vst.msk [vmem:[%s8 + $0x8] sm:$0xff] %vm6261, %v6202
  %6264 = vst.msk [vmem:[%s8 + $0x10] sm:$0xff] %vm6261, %v6207
  %6265 = vst.msk [vmem:[%s8 + $0x18] sm:$0xff] %vm6261, %v6210
  %6266 = vst.msk [vmem:[%s8 + $0x20] sm:$0xff] %vm6261, %v6215
  %6267 = vst.msk [vmem:[%s8 + $0x28] sm:$0xff] %vm6261, %v6218
  %6268 = vst.msk [vmem:[%s8 + $0x30] sm:$0xff] %vm6261, %v6223
  %6269 = vst.msk [vmem:[%s8 + $0x38] sm:$0xff] %vm6261, %v6226
  %6270 = vst.msk [vmem:[%s8 + $0x40] sm:$0xff] %vm6261, %v6231
  %6271 = vst.msk [vmem:[%s8 + $0x48] sm:$0xff] %vm6261, %v6234
  %6272 = vst.msk [vmem:[%s8 + $0x50] sm:$0xff] %vm6261, %v6239
  %6273 = vst.msk [vmem:[%s8 + $0x58] sm:$0xff] %vm6261, %v6242
  %6274 = vst.msk [vmem:[%s8 + $0x60] sm:$0xff] %vm6261, %v6247
  %6275 = vst.msk [vmem:[%s8 + $0x68] sm:$0xff] %vm6261, %v6250
  %6276 = vst.msk [vmem:[%s8 + $0x70] sm:$0xff] %vm6261, %v6255
  %6277 = vst.msk [vmem:[%s8 + $0x78] sm:$0xff] %vm6261, %v6258
  // Predicated region
  $region34: #{tpu_custom_call.1} parent=0 // pred_check
    _
  $region35: #{tpu_custom_call.1} parent=0 // pred_check_branch
    %6279 = sbr.rel (0) target = $region37
  $region36: #{tpu_custom_call.1} parent=0 // pred_region
    _
  $region37: #{tpu_custom_call.1} parent=0 // pred_fallthru
    _
  // Predicated region
  $region38: #{tpu_custom_call.1} parent=0 // pred_check
    _
  $region39: #{tpu_custom_call.1} parent=0 // pred_check_branch
    %6281 = sbr.rel (0) target = $region41
  $region40: #{tpu_custom_call.1} parent=0 // pred_region
    _
  $region41: #{tpu_custom_call.1} parent=0 // pred_fallthru
    _

</llo_original>
